<compile_context>
chip_gen: v7x
topology: tpu7x:2x2x1
jax: 0.10.0
libtpu: 0.0.40
codegen_flags: <defaults>
</compile_context>

<pallas_src>
import functools

import jax
import jax.numpy as jnp
from jax import lax
from jax.experimental import pallas as pl
from jax.experimental.pallas import tpu as pltpu


# ----------------------------- math helpers (usable in-kernel and in reference) ---------------

def _erf(x):
    # Abramowitz & Stegun 7.1.26 polynomial (|err| <= 1.5e-7); only abs/exp/mul/add/where.
    a1, a2, a3, a4, a5 = 0.254829592, -0.284496736, 1.421413741, -1.453152027, 1.061405429
    p = 0.3275911
    sgn = jnp.where(x >= 0.0, 1.0, -1.0)
    ax = jnp.abs(x)
    t = 1.0 / (1.0 + p * ax)
    poly = ((((a5 * t + a4) * t + a3) * t + a2) * t + a1) * t
    return sgn * (1.0 - poly * jnp.exp(-ax * ax))


def _gelu_exact(x):
    # nn.GELU() default is the exact (erf) GELU.
    return 0.5 * x * (1.0 + _erf(x * 0.7071067811865476))


def _layernorm(x, g, b, eps=1e-5):
    mu = jnp.mean(x, axis=-1, keepdims=True)
    var = jnp.mean((x - mu) ** 2, axis=-1, keepdims=True)
    return (x - mu) * jax.lax.rsqrt(var + eps) * g + b


def build_attn_bias(rpb, H, W, K):
    """(heads, N, N) additive bias: relative-position bias inside the clamped KxK window, -1e30 outside."""
    num_heads = rpb.shape[0]
    ih, iw = jnp.arange(H), jnp.arange(W)
    yv, xv = jnp.arange(H), jnp.arange(W)
    sh = jnp.clip(ih - K // 2, 0, H - K)               # clamped window start per query row
    sw = jnp.clip(iw - K // 2, 0, W - K)               # clamped window start per query col
    row_ok = (yv[None, :] >= sh[:, None]) & (yv[None, :] < sh[:, None] + K)   # (H, H)
    col_ok = (xv[None, :] >= sw[:, None]) & (xv[None, :] < sw[:, None] + K)   # (W, W)
    mask = row_ok[:, None, :, None] & col_ok[None, :, None, :]                # (H, W, H, W)
    dy = jnp.clip(yv[None, :] - ih[:, None] + K - 1, 0, 2 * K - 2)            # (H, H)
    dx = jnp.clip(xv[None, :] - iw[:, None] + K - 1, 0, 2 * K - 2)            # (W, W)
    bias = rpb[:, dy[:, None, :, None], dx[None, :, None, :]]                 # (heads, H, W, H, W)
    bias = jnp.where(mask[None], bias, -1e30)
    N = H * W
    return bias.reshape(num_heads, N, N).astype(jnp.float32)


# ----------------------------------------- Pallas kernel ---------------------------------------

def _block_kernel(xp_ref, ln1g_ref, ln1b_ref,
                  wqkv_ref, bqkv_ref, hmask_ref, bias_ref,
                  wproj_ref, bproj_ref, ln2g_ref, ln2b_ref,
                  w1_ref, b1_ref, w2_ref, b2_ref,
                  o_ref,
                  *, frames, tokens, num_heads, head_dim, pack):
    C = num_heads * head_dim
    R = frames * tokens
    Rp = R // pack

    # ---- lane-dense input block (Rp, pack*C) -> logical token-major slab (R, C) ----
    xp = xp_ref[...]
    if pack > 1:
        x = jnp.concatenate([xp[:, g * C:(g + 1) * C] for g in range(pack)], axis=0)
    else:
        x = xp

    # ---- norm1 (f32 VPU/EUP) + fused q|k|v projection: one 128-lane-aligned MXU push.
    #      1/sqrt(head_dim) is already folded into the q columns of wqkv/bqkv. ----
    xn = _layernorm(x, ln1g_ref[...], ln1b_ref[...])
    qkv = jnp.dot(xn.astype(jnp.bfloat16), wqkv_ref[...],
                  preferred_element_type=jnp.float32) + bqkv_ref[...]
    q = qkv[:, 0:C]
    k = qkv[:, C:2 * C]
    v = qkv[:, 2 * C:3 * C]
    k_bf = k.astype(jnp.bfloat16)

    # ---- neighborhood attention: heads outer (bias loaded once per head), frames inner.
    #      Per-head channel masks keep every matmul full-C-lane and let the per-head outputs
    #      accumulate straight into a lane-contiguous (tokens, C) value: no 8-lane slices,
    #      no masked scatter, no scratch round trip. ----
    frame_out = [jnp.zeros((tokens, C), jnp.float32) for _ in range(frames)]
    for h in range(num_heads):
        mask_h = hmask_ref[h]                          # (1, C) f32: 1.0 on this head's channels
        bias_h = bias_ref[h].astype(jnp.float32)       # (tokens, tokens)
        qm = (q * mask_h).astype(jnp.bfloat16)         # zero outside this head's channels
        vm = (v * mask_h).astype(jnp.bfloat16)
        for f in range(frames):
            sl = slice(f * tokens, (f + 1) * tokens)
            logits = lax.dot_general(qm[sl], k_bf[sl], (((1,), (1,)), ((), ())),
                                     preferred_element_type=jnp.float32) + bias_h
            # Max-subtraction restored (numerical safety with trained weights); cheap XLU reduce.
            m = jnp.max(logits, axis=-1, keepdims=True)
            pexp = jnp.exp(logits - m)
            inv = pl.reciprocal(jnp.sum(pexp, axis=-1, keepdims=True), approx=True)
            attn = (pexp * inv).astype(jnp.bfloat16)
            # attn @ (v * mask_h) is zero outside this head's channels -> summing over heads
            # reproduces the concatenated multi-head output exactly, lane-contiguous.
            frame_out[f] = frame_out[f] + jnp.dot(attn, vm[sl],
                                                  preferred_element_type=jnp.float32)
    attn_out = jnp.concatenate(frame_out, axis=0) if frames > 1 else frame_out[0]

    proj = jnp.dot(attn_out.astype(jnp.bfloat16), wproj_ref[...],
                   preferred_element_type=jnp.float32) + bproj_ref[...]
    x1 = x + proj                                      # residual 1 (drop_path = Identity)

    # ---- norm2 + MLP (exact erf-GELU); elementwise math stays f32 (v5e has no bf16 VPU/EUP) ----
    xn2 = _layernorm(x1, ln2g_ref[...], ln2b_ref[...])
    hid = jnp.dot(xn2.astype(jnp.bfloat16), w1_ref[...],
                  preferred_element_type=jnp.float32) + b1_ref[...]
    hid = _gelu_exact(hid)
    y = jnp.dot(hid.astype(jnp.bfloat16), w2_ref[...],
                preferred_element_type=jnp.float32) + b2_ref[...]
    out = x1 + y                                       # residual 2

    # ---- repack to the lane-dense layout: full-width 128-lane output store ----
    if pack > 1:
        o_ref[...] = jnp.concatenate([out[g * Rp:(g + 1) * Rp, :] for g in range(pack)], axis=1)
    else:
        o_ref[...] = out


def space_transformer_nat_forward(x5, p, num_heads, kernel_size, frames_per_step=None):
    """x5: (B, C, D, H, W) float32 -> (B, C, D, H, W) float32."""
    B, C, D, H, W = x5.shape
    BS, N = B * D, H * W
    head_dim = C // num_heads
    scale = float(head_dim) ** -0.5
    hidden = p['w_fc1'].shape[1]

    # Frames per grid step: as many as keep the dense-path M dim big (<=1024 rows), but keep the
    # grid extent >= 2 so v7x can shard steps across its two TensorCores and the x-in / out DMAs
    # overlap with compute on single-TC chips.
    if frames_per_step is None:
        frames_per_step = 1
        for cand in range(1, BS + 1):
            if BS % cand == 0 and cand * N <= 1024 and BS // cand >= 2:
                frames_per_step = cand
    TB = frames_per_step
    assert BS % TB == 0
    G = BS // TB
    R = TB * N

    # Lane packing: `pack` tokens per 128-lane row so HBM<->VMEM DMAs and the output store are
    # full-width (lane-dense out_spec is the single biggest measured lever).
    pack = 128 // C if (128 % C == 0 and C < 128) else 1
    while pack > 1 and R % pack != 0:
        pack //= 2
    Rp = R // pack

    # rearrange 'b c s h w -> ((b s) (h w)) c', then pack `pack` tokens per 128-lane row such
    # that the in-kernel unpack is a plain sublane concat of lane-groups.
    xr = jnp.transpose(x5, (0, 2, 3, 4, 1)).reshape(BS * N, C).astype(jnp.float32)
    xp = xr.reshape(G, pack, Rp, C).transpose(0, 2, 1, 3).reshape(G * Rp, pack * C)

    # Neighborhood-attention bias (heads, N, N), resident in bf16 (mask -1e30 is bf16-representable
    # and exp underflows to exactly 0 after max-subtraction).
    bias = build_attn_bias(p['rpb'], H, W, kernel_size).astype(jnp.bfloat16)

    # Fused q|k|v weight: softmax scale folded into the q columns (host-side constant transform),
    # zero-padded to a multiple of 128 output lanes for one lane-aligned MXU push.
    qkv_cols = ((3 * C + 127) // 128) * 128
    wq = p['w_qkv'][:, :C] * scale
    bq = p['b_qkv'][:, :C] * scale
    wqkv = jnp.concatenate(
        [wq, p['w_qkv'][:, C:2 * C], p['w_qkv'][:, 2 * C:],
         jnp.zeros((C, qkv_cols - 3 * C), p['w_qkv'].dtype)], axis=1).astype(jnp.bfloat16)
    bqkv = jnp.concatenate(
        [bq, p['b_qkv'][:, C:2 * C], p['b_qkv'][:, 2 * C:],
         jnp.zeros((1, qkv_cols - 3 * C), p['b_qkv'].dtype)], axis=1).astype(jnp.float32)

    # Per-head channel masks (heads, 1, C): 1.0 on the head's head_dim channels, 0 elsewhere.
    chan_head = jnp.arange(C) // head_dim
    head_mask = (chan_head[None, None, :] ==
                 jnp.arange(num_heads)[:, None, None]).astype(jnp.float32)

    wproj = p['w_proj'].astype(jnp.bfloat16)
    w1 = p['w_fc1'].astype(jnp.bfloat16)
    w2 = p['w_fc2'].astype(jnp.bfloat16)

    kernel = functools.partial(_block_kernel, frames=TB, tokens=N,
                               num_heads=num_heads, head_dim=head_dim, pack=pack)

    def full(shape):
        n = len(shape)
        return pl.BlockSpec(shape, lambda b, _n=n: (0,) * _n)

    consts = (p['ln1_g'], p['ln1_b'], wqkv, bqkv, head_mask, bias,
              wproj, p['b_proj'], p['ln2_g'], p['ln2_b'],
              w1, p['b_fc1'], w2, p['b_fc2'])

    # Explicit VMEM budget from the actual operand footprint (x/out blocks double-buffered,
    # constants conservatively counted twice) plus slack for intermediates.
    blk_bytes = Rp * pack * C * 4
    const_bytes = sum(int(a.size) * a.dtype.itemsize for a in consts)
    vmem_limit = int(min(64 << 20, max(16 << 20, 4 * blk_bytes + 2 * const_bytes + (4 << 20))))

    out_packed = pl.pallas_call(
        kernel,
        out_shape=jax.ShapeDtypeStruct((G * Rp, pack * C), jnp.float32),
        grid_spec=pltpu.PrefetchScalarGridSpec(
            num_scalar_prefetch=0,
            grid=(G,),
            in_specs=[
                pl.BlockSpec((Rp, pack * C), lambda b: (b, 0)),    # x, lane-dense packed block
                full((1, C)), full((1, C)),                        # norm1 gamma/beta
                full((C, qkv_cols)), full((1, qkv_cols)),          # fused qkv weight/bias
                full((num_heads, 1, C)),                           # per-head channel masks
                full((num_heads, N, N)),                           # neighborhood bias/mask (bf16)
                full((C, C)), full((1, C)),                        # proj weight/bias
                full((1, C)), full((1, C)),                        # norm2 gamma/beta
                full((C, hidden)), full((1, hidden)),              # mlp fc1
                full((hidden, C)), full((1, C)),                   # mlp fc2
            ],
            out_specs=pl.BlockSpec((Rp, pack * C), lambda b: (b, 0)),
        ),
        compiler_params=pltpu.CompilerParams(
            dimension_semantics=("parallel",),
            vmem_limit_bytes=vmem_limit),
    )(xp, *consts)

    # unpack lane-dense layout, then rearrange '((b s) (h w)) c -> b c s h w'
    out = out_packed.reshape(G, Rp, pack, C).transpose(0, 2, 1, 3).reshape(BS * N, C)
    return out.reshape(B, D, H, W, C).transpose(0, 4, 1, 2, 3)


# ----------------------------------- pure-JAX reference ----------------------------------------

def ref_forward(x5, p, num_heads, kernel_size):
    B, C, D, H, W = x5.shape
    N = H * W
    hd = C // num_heads
    scale = float(hd) ** -0.5
    x = jnp.transpose(x5, (0, 2, 3, 4, 1)).reshape(B * D, N, C).astype(jnp.float32)
    bias = build_attn_bias(p['rpb'], H, W, kernel_size)

    xn = _layernorm(x, p['ln1_g'], p['ln1_b'])
    qkv = xn @ p['w_qkv'] + p['b_qkv']
    q, k, v = jnp.split(qkv, 3, axis=-1)

    def to_heads(t):
        return t.reshape(-1, N, num_heads, hd).transpose(0, 2, 1, 3)

    qh, kh, vh = to_heads(q) * scale, to_heads(k), to_heads(v)
    logits = jnp.einsum('bhnd,bhmd->bhnm', qh, kh) + bias[None]
    attn = jax.nn.softmax(logits, axis=-1)
    o = jnp.einsum('bhnm,bhmd->bhnd', attn, vh).transpose(0, 2, 1, 3).reshape(-1, N, C)
    o = o @ p['w_proj'] + p['b_proj']
    x1 = x + o
    xn2 = _layernorm(x1, p['ln2_g'], p['ln2_b'])
    h = jax.nn.gelu(xn2 @ p['w_fc1'] + p['b_fc1'], approximate=False)   # exact erf GELU
    y = h @ p['w_fc2'] + p['b_fc2']
    out = x1 + y
    return out.reshape(B, D, H, W, C).transpose(0, 4, 1, 2, 3)


# --------------------------------------------- main --------------------------------------------

if __name__ == "__main__":
    # Small shapes consistent with the module: dim=32, num_heads=4, hidden=64, kernel_size=7,
    # spatial 8x8 (>= kernel_size), B=2, D=2.
    B, C, D, H, W = 2, 32, 2, 8, 8
    num_heads, hidden, K = 4, 64, 7

    key = jax.random.PRNGKey(0)
    ks = jax.random.split(key, 10)

    def nrm(k, shape, s=0.02):
        return (s * jax.random.normal(k, shape)).astype(jnp.float32)

    params = {
        'ln1_g': jnp.ones((1, C), jnp.float32), 'ln1_b': jnp.zeros((1, C), jnp.float32),
        'w_qkv': nrm(ks[0], (C, 3 * C)), 'b_qkv': nrm(ks[1], (1, 3 * C)),
        'rpb': nrm(ks[2], (num_heads, 2 * K - 1, 2 * K - 1)),
        'w_proj': nrm(ks[3], (C, C)), 'b_proj': nrm(ks[4], (1, C)),
        'ln2_g': jnp.ones((1, C), jnp.float32), 'ln2_b': jnp.zeros((1, C), jnp.float32),
        'w_fc1': nrm(ks[5], (C, hidden)), 'b_fc1': nrm(ks[6], (1, hidden)),
        'w_fc2': nrm(ks[7], (hidden, C)), 'b_fc2': nrm(ks[8], (1, C)),
    }
    x = jax.random.normal(ks[9], (B, C, D, H, W), jnp.float32)

    out = space_transformer_nat_forward(x, params, num_heads, K)
    out = jax.block_until_ready(out)

    ref = ref_forward(x, params, num_heads, K)
    assert out.shape == (B, C, D, H, W)
    err = float(jnp.max(jnp.abs(out - ref)))
    # bf16 MXU inputs / bf16 bias (f32 accumulation) + approx softmax reciprocal vs pure-f32 ref.
    assert jnp.allclose(out, ref, atol=5e-3, rtol=5e-3), f"max abs err = {err}"

    print("KERNEL_OK")
</pallas_src>

<mosaic_0001>
module attributes {stable_mosaic.version = 11 : i64} {
  func.func @_block_kernel(%arg0: i32, %arg1: memref<32x128xf32, #tpu.memory_space<vmem>>, %arg2: memref<1x32xf32, #tpu.memory_space<vmem>>, %arg3: memref<1x32xf32, #tpu.memory_space<vmem>>, %arg4: memref<32x128xbf16, #tpu.memory_space<vmem>>, %arg5: memref<1x128xf32, #tpu.memory_space<vmem>>, %arg6: memref<4x1x32xf32, #tpu.memory_space<vmem>>, %arg7: memref<4x64x64xbf16, #tpu.memory_space<vmem>>, %arg8: memref<32x32xbf16, #tpu.memory_space<vmem>>, %arg9: memref<1x32xf32, #tpu.memory_space<vmem>>, %arg10: memref<1x32xf32, #tpu.memory_space<vmem>>, %arg11: memref<1x32xf32, #tpu.memory_space<vmem>>, %arg12: memref<32x64xbf16, #tpu.memory_space<vmem>>, %arg13: memref<1x64xf32, #tpu.memory_space<vmem>>, %arg14: memref<64x32xbf16, #tpu.memory_space<vmem>>, %arg15: memref<1x32xf32, #tpu.memory_space<vmem>>, %arg16: memref<32x128xf32, #tpu.memory_space<vmem>>) attributes {dimension_semantics = [#tpu.dimension_semantics<parallel>], iteration_bounds = array<i64: 2>, scalar_prefetch = 0 : i64, scratch_operands = 0 : i64, tpu.core_type = #tpu.core_type<tc>, window_params = [{transform_indices = @transform_0, window_bounds = array<i64: 32, 128>}, {pipeline_mode = #tpu.pipeline_mode<synchronous>, transform_indices = @transform_1, window_bounds = array<i64: 1, 32>}, {pipeline_mode = #tpu.pipeline_mode<synchronous>, transform_indices = @transform_2, window_bounds = array<i64: 1, 32>}, {pipeline_mode = #tpu.pipeline_mode<synchronous>, transform_indices = @transform_3, window_bounds = array<i64: 32, 128>}, {pipeline_mode = #tpu.pipeline_mode<synchronous>, transform_indices = @transform_4, window_bounds = array<i64: 1, 128>}, {pipeline_mode = #tpu.pipeline_mode<synchronous>, transform_indices = @transform_5, window_bounds = array<i64: 4, 1, 32>}, {pipeline_mode = #tpu.pipeline_mode<synchronous>, transform_indices = @transform_6, window_bounds = array<i64: 4, 64, 64>}, {pipeline_mode = #tpu.pipeline_mode<synchronous>, transform_indices = @transform_7, window_bounds = array<i64: 32, 32>}, {pipeline_mode = #tpu.pipeline_mode<synchronous>, transform_indices = @transform_8, window_bounds = array<i64: 1, 32>}, {pipeline_mode = #tpu.pipeline_mode<synchronous>, transform_indices = @transform_9, window_bounds = array<i64: 1, 32>}, {pipeline_mode = #tpu.pipeline_mode<synchronous>, transform_indices = @transform_10, window_bounds = array<i64: 1, 32>}, {pipeline_mode = #tpu.pipeline_mode<synchronous>, transform_indices = @transform_11, window_bounds = array<i64: 32, 64>}, {pipeline_mode = #tpu.pipeline_mode<synchronous>, transform_indices = @transform_12, window_bounds = array<i64: 1, 64>}, {pipeline_mode = #tpu.pipeline_mode<synchronous>, transform_indices = @transform_13, window_bounds = array<i64: 64, 32>}, {pipeline_mode = #tpu.pipeline_mode<synchronous>, transform_indices = @transform_14, window_bounds = array<i64: 1, 32>}, {transform_indices = @transform_15, window_bounds = array<i64: 32, 128>}]} {
    %c0 = arith.constant 0 : index
    %c0_0 = arith.constant 0 : index
    %0 = vector.load %arg1[%c0, %c0_0] : memref<32x128xf32, #tpu.memory_space<vmem>>, vector<32x128xf32>
    %1 = vector.extract_strided_slice %0 {offsets = [0, 0], sizes = [32, 32], strides = [1, 1]} : vector<32x128xf32> to vector<32x32xf32>
    %2 = vector.extract_strided_slice %0 {offsets = [0, 32], sizes = [32, 32], strides = [1, 1]} : vector<32x128xf32> to vector<32x32xf32>
    %3 = vector.extract_strided_slice %0 {offsets = [0, 64], sizes = [32, 32], strides = [1, 1]} : vector<32x128xf32> to vector<32x32xf32>
    %4 = vector.extract_strided_slice %0 {offsets = [0, 96], sizes = [32, 32], strides = [1, 1]} : vector<32x128xf32> to vector<32x32xf32>
    %5 = tpu.concatenate %1, %2, %3, %4 in 0 : vector<32x32xf32>, vector<32x32xf32>, vector<32x32xf32>, vector<32x32xf32> -> vector<128x32xf32>
    %c0_1 = arith.constant 0 : index
    %c0_2 = arith.constant 0 : index
    %6 = vector.load %arg2[%c0_1, %c0_2] : memref<1x32xf32, #tpu.memory_space<vmem>>, vector<1x32xf32>
    %c0_3 = arith.constant 0 : index
    %c0_4 = arith.constant 0 : index
    %7 = vector.load %arg3[%c0_3, %c0_4] : memref<1x32xf32, #tpu.memory_space<vmem>>, vector<1x32xf32>
    %cst = arith.constant dense<0.000000e+00> : vector<128xf32>
    %8 = vector.multi_reduction <add>, %5, %cst [1] : vector<128x32xf32> to vector<128xf32>
    %9 = vector.shape_cast %8 : vector<128xf32> to vector<128x1xf32>
    %cst_5 = arith.constant 3.200000e+01 : f32
    %10 = vector.broadcast %cst_5 : f32 to vector<128x1xf32>
    %11 = arith.divf %9, %10 : vector<128x1xf32>
    %12 = vector.broadcast %11 : vector<128x1xf32> to vector<128x32xf32>
    %13 = arith.subf %5, %12 : vector<128x32xf32>
    %14 = arith.mulf %13, %13 : vector<128x32xf32>
    %cst_6 = arith.constant dense<0.000000e+00> : vector<128xf32>
    %15 = vector.multi_reduction <add>, %14, %cst_6 [1] : vector<128x32xf32> to vector<128xf32>
    %16 = vector.shape_cast %15 : vector<128xf32> to vector<128x1xf32>
    %cst_7 = arith.constant 3.200000e+01 : f32
    %17 = vector.broadcast %cst_7 : f32 to vector<128x1xf32>
    %18 = arith.divf %16, %17 : vector<128x1xf32>
    %19 = vector.broadcast %11 : vector<128x1xf32> to vector<128x32xf32>
    %20 = arith.subf %5, %19 : vector<128x32xf32>
    %cst_8 = arith.constant 9.99999974E-6 : f32
    %21 = vector.broadcast %cst_8 : f32 to vector<128x1xf32>
    %22 = arith.addf %18, %21 : vector<128x1xf32>
    %23 = math.rsqrt %22 : vector<128x1xf32>
    %24 = vector.broadcast %23 : vector<128x1xf32> to vector<128x32xf32>
    %25 = arith.mulf %20, %24 : vector<128x32xf32>
    %26 = vector.broadcast %6 : vector<1x32xf32> to vector<128x32xf32>
    %27 = arith.mulf %25, %26 : vector<128x32xf32>
    %28 = vector.broadcast %7 : vector<1x32xf32> to vector<128x32xf32>
    %29 = arith.addf %27, %28 : vector<128x32xf32>
    %30 = arith.truncf %29 : vector<128x32xf32> to vector<128x32xbf16>
    %c0_9 = arith.constant 0 : index
    %c0_10 = arith.constant 0 : index
    %31 = vector.load %arg4[%c0_9, %c0_10] : memref<32x128xbf16, #tpu.memory_space<vmem>>, vector<32x128xbf16>
    %cst_11 = arith.constant dense<0.000000e+00> : vector<128x128xf32>
    %32 = tpu.matmul %30, %31, %cst_11 {dimension_numbers = #tpu.dot_dimension_numbers<[1], [0], [0], [1], [0, 0, 1, 1], [], []>} : vector<128x32xbf16>, vector<32x128xbf16>, vector<128x128xf32> -> vector<128x128xf32>
    %c0_12 = arith.constant 0 : index
    %c0_13 = arith.constant 0 : index
    %33 = vector.load %arg5[%c0_12, %c0_13] : memref<1x128xf32, #tpu.memory_space<vmem>>, vector<1x128xf32>
    %34 = vector.broadcast %33 : vector<1x128xf32> to vector<128x128xf32>
    %35 = arith.addf %32, %34 : vector<128x128xf32>
    %36 = vector.extract_strided_slice %35 {offsets = [0, 0], sizes = [128, 32], strides = [1, 1]} : vector<128x128xf32> to vector<128x32xf32>
    %37 = vector.extract_strided_slice %35 {offsets = [0, 32], sizes = [128, 32], strides = [1, 1]} : vector<128x128xf32> to vector<128x32xf32>
    %38 = vector.extract_strided_slice %35 {offsets = [0, 64], sizes = [128, 32], strides = [1, 1]} : vector<128x128xf32> to vector<128x32xf32>
    %39 = arith.truncf %37 : vector<128x32xf32> to vector<128x32xbf16>
    %cst_14 = arith.constant 0.000000e+00 : f32
    %40 = vector.broadcast %cst_14 : f32 to vector<64x32xf32>
    %cst_15 = arith.constant 0.000000e+00 : f32
    %41 = vector.broadcast %cst_15 : f32 to vector<64x32xf32>
    %c0_16 = arith.constant 0 : index
    %c0_17 = arith.constant 0 : index
    %c0_18 = arith.constant 0 : index
    %42 = vector.load %arg6[%c0_16, %c0_17, %c0_18] : memref<4x1x32xf32, #tpu.memory_space<vmem>>, vector<1x1x32xf32>
    %43 = vector.shape_cast %42 : vector<1x1x32xf32> to vector<1x32xf32>
    %c0_19 = arith.constant 0 : index
    %c0_20 = arith.constant 0 : index
    %c0_21 = arith.constant 0 : index
    %44 = vector.load %arg7[%c0_19, %c0_20, %c0_21] : memref<4x64x64xbf16, #tpu.memory_space<vmem>>, vector<1x64x64xbf16>
    %45 = vector.shape_cast %44 : vector<1x64x64xbf16> to vector<64x64xbf16>
    %46 = arith.extf %45 : vector<64x64xbf16> to vector<64x64xf32>
    %47 = vector.broadcast %43 : vector<1x32xf32> to vector<128x32xf32>
    %48 = arith.mulf %36, %47 : vector<128x32xf32>
    %49 = arith.truncf %48 : vector<128x32xf32> to vector<128x32xbf16>
    %50 = vector.broadcast %43 : vector<1x32xf32> to vector<128x32xf32>
    %51 = arith.mulf %38, %50 : vector<128x32xf32>
    %52 = arith.truncf %51 : vector<128x32xf32> to vector<128x32xbf16>
    %53 = vector.extract_strided_slice %49 {offsets = [0, 0], sizes = [64, 32], strides = [1, 1]} : vector<128x32xbf16> to vector<64x32xbf16>
    %54 = vector.extract_strided_slice %39 {offsets = [0, 0], sizes = [64, 32], strides = [1, 1]} : vector<128x32xbf16> to vector<64x32xbf16>
    %cst_22 = arith.constant dense<0.000000e+00> : vector<64x64xf32>
    %55 = tpu.matmul %53, %54, %cst_22 {dimension_numbers = #tpu.dot_dimension_numbers<[1], [1], [0], [0], [0, 0, 1, 0], [], []>} : vector<64x32xbf16>, vector<64x32xbf16>, vector<64x64xf32> -> vector<64x64xf32>
    %56 = arith.addf %55, %46 : vector<64x64xf32>
    %cst_23 = arith.constant dense<0xFF800000> : vector<64xf32>
    %57 = vector.multi_reduction <maximumf>, %56, %cst_23 [1] : vector<64x64xf32> to vector<64xf32>
    %58 = vector.shape_cast %57 : vector<64xf32> to vector<64x1xf32>
    %59 = vector.broadcast %58 : vector<64x1xf32> to vector<64x64xf32>
    %60 = arith.subf %56, %59 : vector<64x64xf32>
    %61 = math.exp %60 : vector<64x64xf32>
    %cst_24 = arith.constant dense<0.000000e+00> : vector<64xf32>
    %62 = vector.multi_reduction <add>, %61, %cst_24 [1] : vector<64x64xf32> to vector<64xf32>
    %63 = vector.shape_cast %62 : vector<64xf32> to vector<64x1xf32>
    %64 = tpu.reciprocal %63 {approx = true} : vector<64x1xf32> -> vector<64x1xf32>
    %65 = vector.broadcast %64 : vector<64x1xf32> to vector<64x64xf32>
    %66 = arith.mulf %61, %65 : vector<64x64xf32>
    %67 = arith.truncf %66 : vector<64x64xf32> to vector<64x64xbf16>
    %68 = vector.extract_strided_slice %52 {offsets = [0, 0], sizes = [64, 32], strides = [1, 1]} : vector<128x32xbf16> to vector<64x32xbf16>
    %cst_25 = arith.constant dense<0.000000e+00> : vector<64x32xf32>
    %69 = tpu.matmul %67, %68, %cst_25 {dimension_numbers = #tpu.dot_dimension_numbers<[1], [0], [0], [1], [0, 0, 1, 1], [], []>} : vector<64x64xbf16>, vector<64x32xbf16>, vector<64x32xf32> -> vector<64x32xf32>
    %70 = arith.addf %40, %69 : vector<64x32xf32>
    %71 = vector.extract_strided_slice %49 {offsets = [64, 0], sizes = [64, 32], strides = [1, 1]} : vector<128x32xbf16> to vector<64x32xbf16>
    %72 = vector.extract_strided_slice %39 {offsets = [64, 0], sizes = [64, 32], strides = [1, 1]} : vector<128x32xbf16> to vector<64x32xbf16>
    %cst_26 = arith.constant dense<0.000000e+00> : vector<64x64xf32>
    %73 = tpu.matmul %71, %72, %cst_26 {dimension_numbers = #tpu.dot_dimension_numbers<[1], [1], [0], [0], [0, 0, 1, 0], [], []>} : vector<64x32xbf16>, vector<64x32xbf16>, vector<64x64xf32> -> vector<64x64xf32>
    %74 = arith.addf %73, %46 : vector<64x64xf32>
    %cst_27 = arith.constant dense<0xFF800000> : vector<64xf32>
    %75 = vector.multi_reduction <maximumf>, %74, %cst_27 [1] : vector<64x64xf32> to vector<64xf32>
    %76 = vector.shape_cast %75 : vector<64xf32> to vector<64x1xf32>
    %77 = vector.broadcast %76 : vector<64x1xf32> to vector<64x64xf32>
    %78 = arith.subf %74, %77 : vector<64x64xf32>
    %79 = math.exp %78 : vector<64x64xf32>
    %cst_28 = arith.constant dense<0.000000e+00> : vector<64xf32>
    %80 = vector.multi_reduction <add>, %79, %cst_28 [1] : vector<64x64xf32> to vector<64xf32>
    %81 = vector.shape_cast %80 : vector<64xf32> to vector<64x1xf32>
    %82 = tpu.reciprocal %81 {approx = true} : vector<64x1xf32> -> vector<64x1xf32>
    %83 = vector.broadcast %82 : vector<64x1xf32> to vector<64x64xf32>
    %84 = arith.mulf %79, %83 : vector<64x64xf32>
    %85 = arith.truncf %84 : vector<64x64xf32> to vector<64x64xbf16>
    %86 = vector.extract_strided_slice %52 {offsets = [64, 0], sizes = [64, 32], strides = [1, 1]} : vector<128x32xbf16> to vector<64x32xbf16>
    %cst_29 = arith.constant dense<0.000000e+00> : vector<64x32xf32>
    %87 = tpu.matmul %85, %86, %cst_29 {dimension_numbers = #tpu.dot_dimension_numbers<[1], [0], [0], [1], [0, 0, 1, 1], [], []>} : vector<64x64xbf16>, vector<64x32xbf16>, vector<64x32xf32> -> vector<64x32xf32>
    %88 = arith.addf %41, %87 : vector<64x32xf32>
    %c1 = arith.constant 1 : index
    %c0_30 = arith.constant 0 : index
    %c0_31 = arith.constant 0 : index
    %89 = vector.load %arg6[%c1, %c0_30, %c0_31] : memref<4x1x32xf32, #tpu.memory_space<vmem>>, vector<1x1x32xf32>
    %90 = vector.shape_cast %89 : vector<1x1x32xf32> to vector<1x32xf32>
    %c1_32 = arith.constant 1 : index
    %c0_33 = arith.constant 0 : index
    %c0_34 = arith.constant 0 : index
    %91 = vector.load %arg7[%c1_32, %c0_33, %c0_34] : memref<4x64x64xbf16, #tpu.memory_space<vmem>>, vector<1x64x64xbf16>
    %92 = vector.shape_cast %91 : vector<1x64x64xbf16> to vector<64x64xbf16>
    %93 = arith.extf %92 : vector<64x64xbf16> to vector<64x64xf32>
    %94 = vector.broadcast %90 : vector<1x32xf32> to vector<128x32xf32>
    %95 = arith.mulf %36, %94 : vector<128x32xf32>
    %96 = arith.truncf %95 : vector<128x32xf32> to vector<128x32xbf16>
    %97 = vector.broadcast %90 : vector<1x32xf32> to vector<128x32xf32>
    %98 = arith.mulf %38, %97 : vector<128x32xf32>
    %99 = arith.truncf %98 : vector<128x32xf32> to vector<128x32xbf16>
    %100 = vector.extract_strided_slice %96 {offsets = [0, 0], sizes = [64, 32], strides = [1, 1]} : vector<128x32xbf16> to vector<64x32xbf16>
    %101 = vector.extract_strided_slice %39 {offsets = [0, 0], sizes = [64, 32], strides = [1, 1]} : vector<128x32xbf16> to vector<64x32xbf16>
    %cst_35 = arith.constant dense<0.000000e+00> : vector<64x64xf32>
    %102 = tpu.matmul %100, %101, %cst_35 {dimension_numbers = #tpu.dot_dimension_numbers<[1], [1], [0], [0], [0, 0, 1, 0], [], []>} : vector<64x32xbf16>, vector<64x32xbf16>, vector<64x64xf32> -> vector<64x64xf32>
    %103 = arith.addf %102, %93 : vector<64x64xf32>
    %cst_36 = arith.constant dense<0xFF800000> : vector<64xf32>
    %104 = vector.multi_reduction <maximumf>, %103, %cst_36 [1] : vector<64x64xf32> to vector<64xf32>
    %105 = vector.shape_cast %104 : vector<64xf32> to vector<64x1xf32>
    %106 = vector.broadcast %105 : vector<64x1xf32> to vector<64x64xf32>
    %107 = arith.subf %103, %106 : vector<64x64xf32>
    %108 = math.exp %107 : vector<64x64xf32>
    %cst_37 = arith.constant dense<0.000000e+00> : vector<64xf32>
    %109 = vector.multi_reduction <add>, %108, %cst_37 [1] : vector<64x64xf32> to vector<64xf32>
    %110 = vector.shape_cast %109 : vector<64xf32> to vector<64x1xf32>
    %111 = tpu.reciprocal %110 {approx = true} : vector<64x1xf32> -> vector<64x1xf32>
    %112 = vector.broadcast %111 : vector<64x1xf32> to vector<64x64xf32>
    %113 = arith.mulf %108, %112 : vector<64x64xf32>
    %114 = arith.truncf %113 : vector<64x64xf32> to vector<64x64xbf16>
    %115 = vector.extract_strided_slice %99 {offsets = [0, 0], sizes = [64, 32], strides = [1, 1]} : vector<128x32xbf16> to vector<64x32xbf16>
    %cst_38 = arith.constant dense<0.000000e+00> : vector<64x32xf32>
    %116 = tpu.matmul %114, %115, %cst_38 {dimension_numbers = #tpu.dot_dimension_numbers<[1], [0], [0], [1], [0, 0, 1, 1], [], []>} : vector<64x64xbf16>, vector<64x32xbf16>, vector<64x32xf32> -> vector<64x32xf32>
    %117 = arith.addf %70, %116 : vector<64x32xf32>
    %118 = vector.extract_strided_slice %96 {offsets = [64, 0], sizes = [64, 32], strides = [1, 1]} : vector<128x32xbf16> to vector<64x32xbf16>
    %119 = vector.extract_strided_slice %39 {offsets = [64, 0], sizes = [64, 32], strides = [1, 1]} : vector<128x32xbf16> to vector<64x32xbf16>
    %cst_39 = arith.constant dense<0.000000e+00> : vector<64x64xf32>
    %120 = tpu.matmul %118, %119, %cst_39 {dimension_numbers = #tpu.dot_dimension_numbers<[1], [1], [0], [0], [0, 0, 1, 0], [], []>} : vector<64x32xbf16>, vector<64x32xbf16>, vector<64x64xf32> -> vector<64x64xf32>
    %121 = arith.addf %120, %93 : vector<64x64xf32>
    %cst_40 = arith.constant dense<0xFF800000> : vector<64xf32>
    %122 = vector.multi_reduction <maximumf>, %121, %cst_40 [1] : vector<64x64xf32> to vector<64xf32>
    %123 = vector.shape_cast %122 : vector<64xf32> to vector<64x1xf32>
    %124 = vector.broadcast %123 : vector<64x1xf32> to vector<64x64xf32>
    %125 = arith.subf %121, %124 : vector<64x64xf32>
    %126 = math.exp %125 : vector<64x64xf32>
    %cst_41 = arith.constant dense<0.000000e+00> : vector<64xf32>
    %127 = vector.multi_reduction <add>, %126, %cst_41 [1] : vector<64x64xf32> to vector<64xf32>
    %128 = vector.shape_cast %127 : vector<64xf32> to vector<64x1xf32>
    %129 = tpu.reciprocal %128 {approx = true} : vector<64x1xf32> -> vector<64x1xf32>
    %130 = vector.broadcast %129 : vector<64x1xf32> to vector<64x64xf32>
    %131 = arith.mulf %126, %130 : vector<64x64xf32>
    %132 = arith.truncf %131 : vector<64x64xf32> to vector<64x64xbf16>
    %133 = vector.extract_strided_slice %99 {offsets = [64, 0], sizes = [64, 32], strides = [1, 1]} : vector<128x32xbf16> to vector<64x32xbf16>
    %cst_42 = arith.constant dense<0.000000e+00> : vector<64x32xf32>
    %134 = tpu.matmul %132, %133, %cst_42 {dimension_numbers = #tpu.dot_dimension_numbers<[1], [0], [0], [1], [0, 0, 1, 1], [], []>} : vector<64x64xbf16>, vector<64x32xbf16>, vector<64x32xf32> -> vector<64x32xf32>
    %135 = arith.addf %88, %134 : vector<64x32xf32>
    %c2 = arith.constant 2 : index
    %c0_43 = arith.constant 0 : index
    %c0_44 = arith.constant 0 : index
    %136 = vector.load %arg6[%c2, %c0_43, %c0_44] : memref<4x1x32xf32, #tpu.memory_space<vmem>>, vector<1x1x32xf32>
    %137 = vector.shape_cast %136 : vector<1x1x32xf32> to vector<1x32xf32>
    %c2_45 = arith.constant 2 : index
    %c0_46 = arith.constant 0 : index
    %c0_47 = arith.constant 0 : index
    %138 = vector.load %arg7[%c2_45, %c0_46, %c0_47] : memref<4x64x64xbf16, #tpu.memory_space<vmem>>, vector<1x64x64xbf16>
    %139 = vector.shape_cast %138 : vector<1x64x64xbf16> to vector<64x64xbf16>
    %140 = arith.extf %139 : vector<64x64xbf16> to vector<64x64xf32>
    %141 = vector.broadcast %137 : vector<1x32xf32> to vector<128x32xf32>
    %142 = arith.mulf %36, %141 : vector<128x32xf32>
    %143 = arith.truncf %142 : vector<128x32xf32> to vector<128x32xbf16>
    %144 = vector.broadcast %137 : vector<1x32xf32> to vector<128x32xf32>
    %145 = arith.mulf %38, %144 : vector<128x32xf32>
    %146 = arith.truncf %145 : vector<128x32xf32> to vector<128x32xbf16>
    %147 = vector.extract_strided_slice %143 {offsets = [0, 0], sizes = [64, 32], strides = [1, 1]} : vector<128x32xbf16> to vector<64x32xbf16>
    %148 = vector.extract_strided_slice %39 {offsets = [0, 0], sizes = [64, 32], strides = [1, 1]} : vector<128x32xbf16> to vector<64x32xbf16>
    %cst_48 = arith.constant dense<0.000000e+00> : vector<64x64xf32>
    %149 = tpu.matmul %147, %148, %cst_48 {dimension_numbers = #tpu.dot_dimension_numbers<[1], [1], [0], [0], [0, 0, 1, 0], [], []>} : vector<64x32xbf16>, vector<64x32xbf16>, vector<64x64xf32> -> vector<64x64xf32>
    %150 = arith.addf %149, %140 : vector<64x64xf32>
    %cst_49 = arith.constant dense<0xFF800000> : vector<64xf32>
    %151 = vector.multi_reduction <maximumf>, %150, %cst_49 [1] : vector<64x64xf32> to vector<64xf32>
    %152 = vector.shape_cast %151 : vector<64xf32> to vector<64x1xf32>
    %153 = vector.broadcast %152 : vector<64x1xf32> to vector<64x64xf32>
    %154 = arith.subf %150, %153 : vector<64x64xf32>
    %155 = math.exp %154 : vector<64x64xf32>
    %cst_50 = arith.constant dense<0.000000e+00> : vector<64xf32>
    %156 = vector.multi_reduction <add>, %155, %cst_50 [1] : vector<64x64xf32> to vector<64xf32>
    %157 = vector.shape_cast %156 : vector<64xf32> to vector<64x1xf32>
    %158 = tpu.reciprocal %157 {approx = true} : vector<64x1xf32> -> vector<64x1xf32>
    %159 = vector.broadcast %158 : vector<64x1xf32> to vector<64x64xf32>
    %160 = arith.mulf %155, %159 : vector<64x64xf32>
    %161 = arith.truncf %160 : vector<64x64xf32> to vector<64x64xbf16>
    %162 = vector.extract_strided_slice %146 {offsets = [0, 0], sizes = [64, 32], strides = [1, 1]} : vector<128x32xbf16> to vector<64x32xbf16>
    %cst_51 = arith.constant dense<0.000000e+00> : vector<64x32xf32>
    %163 = tpu.matmul %161, %162, %cst_51 {dimension_numbers = #tpu.dot_dimension_numbers<[1], [0], [0], [1], [0, 0, 1, 1], [], []>} : vector<64x64xbf16>, vector<64x32xbf16>, vector<64x32xf32> -> vector<64x32xf32>
    %164 = arith.addf %117, %163 : vector<64x32xf32>
    %165 = vector.extract_strided_slice %143 {offsets = [64, 0], sizes = [64, 32], strides = [1, 1]} : vector<128x32xbf16> to vector<64x32xbf16>
    %166 = vector.extract_strided_slice %39 {offsets = [64, 0], sizes = [64, 32], strides = [1, 1]} : vector<128x32xbf16> to vector<64x32xbf16>
    %cst_52 = arith.constant dense<0.000000e+00> : vector<64x64xf32>
    %167 = tpu.matmul %165, %166, %cst_52 {dimension_numbers = #tpu.dot_dimension_numbers<[1], [1], [0], [0], [0, 0, 1, 0], [], []>} : vector<64x32xbf16>, vector<64x32xbf16>, vector<64x64xf32> -> vector<64x64xf32>
    %168 = arith.addf %167, %140 : vector<64x64xf32>
    %cst_53 = arith.constant dense<0xFF800000> : vector<64xf32>
    %169 = vector.multi_reduction <maximumf>, %168, %cst_53 [1] : vector<64x64xf32> to vector<64xf32>
    %170 = vector.shape_cast %169 : vector<64xf32> to vector<64x1xf32>
    %171 = vector.broadcast %170 : vector<64x1xf32> to vector<64x64xf32>
    %172 = arith.subf %168, %171 : vector<64x64xf32>
    %173 = math.exp %172 : vector<64x64xf32>
    %cst_54 = arith.constant dense<0.000000e+00> : vector<64xf32>
    %174 = vector.multi_reduction <add>, %173, %cst_54 [1] : vector<64x64xf32> to vector<64xf32>
    %175 = vector.shape_cast %174 : vector<64xf32> to vector<64x1xf32>
    %176 = tpu.reciprocal %175 {approx = true} : vector<64x1xf32> -> vector<64x1xf32>
    %177 = vector.broadcast %176 : vector<64x1xf32> to vector<64x64xf32>
    %178 = arith.mulf %173, %177 : vector<64x64xf32>
    %179 = arith.truncf %178 : vector<64x64xf32> to vector<64x64xbf16>
    %180 = vector.extract_strided_slice %146 {offsets = [64, 0], sizes = [64, 32], strides = [1, 1]} : vector<128x32xbf16> to vector<64x32xbf16>
    %cst_55 = arith.constant dense<0.000000e+00> : vector<64x32xf32>
    %181 = tpu.matmul %179, %180, %cst_55 {dimension_numbers = #tpu.dot_dimension_numbers<[1], [0], [0], [1], [0, 0, 1, 1], [], []>} : vector<64x64xbf16>, vector<64x32xbf16>, vector<64x32xf32> -> vector<64x32xf32>
    %182 = arith.addf %135, %181 : vector<64x32xf32>
    %c3 = arith.constant 3 : index
    %c0_56 = arith.constant 0 : index
    %c0_57 = arith.constant 0 : index
    %183 = vector.load %arg6[%c3, %c0_56, %c0_57] : memref<4x1x32xf32, #tpu.memory_space<vmem>>, vector<1x1x32xf32>
    %184 = vector.shape_cast %183 : vector<1x1x32xf32> to vector<1x32xf32>
    %c3_58 = arith.constant 3 : index
    %c0_59 = arith.constant 0 : index
    %c0_60 = arith.constant 0 : index
    %185 = vector.load %arg7[%c3_58, %c0_59, %c0_60] : memref<4x64x64xbf16, #tpu.memory_space<vmem>>, vector<1x64x64xbf16>
    %186 = vector.shape_cast %185 : vector<1x64x64xbf16> to vector<64x64xbf16>
    %187 = arith.extf %186 : vector<64x64xbf16> to vector<64x64xf32>
    %188 = vector.broadcast %184 : vector<1x32xf32> to vector<128x32xf32>
    %189 = arith.mulf %36, %188 : vector<128x32xf32>
    %190 = arith.truncf %189 : vector<128x32xf32> to vector<128x32xbf16>
    %191 = vector.broadcast %184 : vector<1x32xf32> to vector<128x32xf32>
    %192 = arith.mulf %38, %191 : vector<128x32xf32>
    %193 = arith.truncf %192 : vector<128x32xf32> to vector<128x32xbf16>
    %194 = vector.extract_strided_slice %190 {offsets = [0, 0], sizes = [64, 32], strides = [1, 1]} : vector<128x32xbf16> to vector<64x32xbf16>
    %195 = vector.extract_strided_slice %39 {offsets = [0, 0], sizes = [64, 32], strides = [1, 1]} : vector<128x32xbf16> to vector<64x32xbf16>
    %cst_61 = arith.constant dense<0.000000e+00> : vector<64x64xf32>
    %196 = tpu.matmul %194, %195, %cst_61 {dimension_numbers = #tpu.dot_dimension_numbers<[1], [1], [0], [0], [0, 0, 1, 0], [], []>} : vector<64x32xbf16>, vector<64x32xbf16>, vector<64x64xf32> -> vector<64x64xf32>
    %197 = arith.addf %196, %187 : vector<64x64xf32>
    %cst_62 = arith.constant dense<0xFF800000> : vector<64xf32>
    %198 = vector.multi_reduction <maximumf>, %197, %cst_62 [1] : vector<64x64xf32> to vector<64xf32>
    %199 = vector.shape_cast %198 : vector<64xf32> to vector<64x1xf32>
    %200 = vector.broadcast %199 : vector<64x1xf32> to vector<64x64xf32>
    %201 = arith.subf %197, %200 : vector<64x64xf32>
    %202 = math.exp %201 : vector<64x64xf32>
    %cst_63 = arith.constant dense<0.000000e+00> : vector<64xf32>
    %203 = vector.multi_reduction <add>, %202, %cst_63 [1] : vector<64x64xf32> to vector<64xf32>
    %204 = vector.shape_cast %203 : vector<64xf32> to vector<64x1xf32>
    %205 = tpu.reciprocal %204 {approx = true} : vector<64x1xf32> -> vector<64x1xf32>
    %206 = vector.broadcast %205 : vector<64x1xf32> to vector<64x64xf32>
    %207 = arith.mulf %202, %206 : vector<64x64xf32>
    %208 = arith.truncf %207 : vector<64x64xf32> to vector<64x64xbf16>
    %209 = vector.extract_strided_slice %193 {offsets = [0, 0], sizes = [64, 32], strides = [1, 1]} : vector<128x32xbf16> to vector<64x32xbf16>
    %cst_64 = arith.constant dense<0.000000e+00> : vector<64x32xf32>
    %210 = tpu.matmul %208, %209, %cst_64 {dimension_numbers = #tpu.dot_dimension_numbers<[1], [0], [0], [1], [0, 0, 1, 1], [], []>} : vector<64x64xbf16>, vector<64x32xbf16>, vector<64x32xf32> -> vector<64x32xf32>
    %211 = arith.addf %164, %210 : vector<64x32xf32>
    %212 = vector.extract_strided_slice %190 {offsets = [64, 0], sizes = [64, 32], strides = [1, 1]} : vector<128x32xbf16> to vector<64x32xbf16>
    %213 = vector.extract_strided_slice %39 {offsets = [64, 0], sizes = [64, 32], strides = [1, 1]} : vector<128x32xbf16> to vector<64x32xbf16>
    %cst_65 = arith.constant dense<0.000000e+00> : vector<64x64xf32>
    %214 = tpu.matmul %212, %213, %cst_65 {dimension_numbers = #tpu.dot_dimension_numbers<[1], [1], [0], [0], [0, 0, 1, 0], [], []>} : vector<64x32xbf16>, vector<64x32xbf16>, vector<64x64xf32> -> vector<64x64xf32>
    %215 = arith.addf %214, %187 : vector<64x64xf32>
    %cst_66 = arith.constant dense<0xFF800000> : vector<64xf32>
    %216 = vector.multi_reduction <maximumf>, %215, %cst_66 [1] : vector<64x64xf32> to vector<64xf32>
    %217 = vector.shape_cast %216 : vector<64xf32> to vector<64x1xf32>
    %218 = vector.broadcast %217 : vector<64x1xf32> to vector<64x64xf32>
    %219 = arith.subf %215, %218 : vector<64x64xf32>
    %220 = math.exp %219 : vector<64x64xf32>
    %cst_67 = arith.constant dense<0.000000e+00> : vector<64xf32>
    %221 = vector.multi_reduction <add>, %220, %cst_67 [1] : vector<64x64xf32> to vector<64xf32>
    %222 = vector.shape_cast %221 : vector<64xf32> to vector<64x1xf32>
    %223 = tpu.reciprocal %222 {approx = true} : vector<64x1xf32> -> vector<64x1xf32>
    %224 = vector.broadcast %223 : vector<64x1xf32> to vector<64x64xf32>
    %225 = arith.mulf %220, %224 : vector<64x64xf32>
    %226 = arith.truncf %225 : vector<64x64xf32> to vector<64x64xbf16>
    %227 = vector.extract_strided_slice %193 {offsets = [64, 0], sizes = [64, 32], strides = [1, 1]} : vector<128x32xbf16> to vector<64x32xbf16>
    %cst_68 = arith.constant dense<0.000000e+00> : vector<64x32xf32>
    %228 = tpu.matmul %226, %227, %cst_68 {dimension_numbers = #tpu.dot_dimension_numbers<[1], [0], [0], [1], [0, 0, 1, 1], [], []>} : vector<64x64xbf16>, vector<64x32xbf16>, vector<64x32xf32> -> vector<64x32xf32>
    %229 = arith.addf %182, %228 : vector<64x32xf32>
    %230 = tpu.concatenate %211, %229 in 0 : vector<64x32xf32>, vector<64x32xf32> -> vector<128x32xf32>
    %231 = arith.truncf %230 : vector<128x32xf32> to vector<128x32xbf16>
    %c0_69 = arith.constant 0 : index
    %c0_70 = arith.constant 0 : index
    %232 = vector.load %arg8[%c0_69, %c0_70] : memref<32x32xbf16, #tpu.memory_space<vmem>>, vector<32x32xbf16>
    %cst_71 = arith.constant dense<0.000000e+00> : vector<128x32xf32>
    %233 = tpu.matmul %231, %232, %cst_71 {dimension_numbers = #tpu.dot_dimension_numbers<[1], [0], [0], [1], [0, 0, 1, 1], [], []>} : vector<128x32xbf16>, vector<32x32xbf16>, vector<128x32xf32> -> vector<128x32xf32>
    %c0_72 = arith.constant 0 : index
    %c0_73 = arith.constant 0 : index
    %234 = vector.load %arg9[%c0_72, %c0_73] : memref<1x32xf32, #tpu.memory_space<vmem>>, vector<1x32xf32>
    %235 = vector.broadcast %234 : vector<1x32xf32> to vector<128x32xf32>
    %236 = arith.addf %233, %235 : vector<128x32xf32>
    %237 = arith.addf %5, %236 : vector<128x32xf32>
    %c0_74 = arith.constant 0 : index
    %c0_75 = arith.constant 0 : index
    %238 = vector.load %arg10[%c0_74, %c0_75] : memref<1x32xf32, #tpu.memory_space<vmem>>, vector<1x32xf32>
    %c0_76 = arith.constant 0 : index
    %c0_77 = arith.constant 0 : index
    %239 = vector.load %arg11[%c0_76, %c0_77] : memref<1x32xf32, #tpu.memory_space<vmem>>, vector<1x32xf32>
    %cst_78 = arith.constant dense<0.000000e+00> : vector<128xf32>
    %240 = vector.multi_reduction <add>, %237, %cst_78 [1] : vector<128x32xf32> to vector<128xf32>
    %241 = vector.shape_cast %240 : vector<128xf32> to vector<128x1xf32>
    %cst_79 = arith.constant 3.200000e+01 : f32
    %242 = vector.broadcast %cst_79 : f32 to vector<128x1xf32>
    %243 = arith.divf %241, %242 : vector<128x1xf32>
    %244 = vector.broadcast %243 : vector<128x1xf32> to vector<128x32xf32>
    %245 = arith.subf %237, %244 : vector<128x32xf32>
    %246 = arith.mulf %245, %245 : vector<128x32xf32>
    %cst_80 = arith.constant dense<0.000000e+00> : vector<128xf32>
    %247 = vector.multi_reduction <add>, %246, %cst_80 [1] : vector<128x32xf32> to vector<128xf32>
    %248 = vector.shape_cast %247 : vector<128xf32> to vector<128x1xf32>
    %cst_81 = arith.constant 3.200000e+01 : f32
    %249 = vector.broadcast %cst_81 : f32 to vector<128x1xf32>
    %250 = arith.divf %248, %249 : vector<128x1xf32>
    %251 = vector.broadcast %243 : vector<128x1xf32> to vector<128x32xf32>
    %252 = arith.subf %237, %251 : vector<128x32xf32>
    %cst_82 = arith.constant 9.99999974E-6 : f32
    %253 = vector.broadcast %cst_82 : f32 to vector<128x1xf32>
    %254 = arith.addf %250, %253 : vector<128x1xf32>
    %255 = math.rsqrt %254 : vector<128x1xf32>
    %256 = vector.broadcast %255 : vector<128x1xf32> to vector<128x32xf32>
    %257 = arith.mulf %252, %256 : vector<128x32xf32>
    %258 = vector.broadcast %238 : vector<1x32xf32> to vector<128x32xf32>
    %259 = arith.mulf %257, %258 : vector<128x32xf32>
    %260 = vector.broadcast %239 : vector<1x32xf32> to vector<128x32xf32>
    %261 = arith.addf %259, %260 : vector<128x32xf32>
    %262 = arith.truncf %261 : vector<128x32xf32> to vector<128x32xbf16>
    %c0_83 = arith.constant 0 : index
    %c0_84 = arith.constant 0 : index
    %263 = vector.load %arg12[%c0_83, %c0_84] : memref<32x64xbf16, #tpu.memory_space<vmem>>, vector<32x64xbf16>
    %cst_85 = arith.constant dense<0.000000e+00> : vector<128x64xf32>
    %264 = tpu.matmul %262, %263, %cst_85 {dimension_numbers = #tpu.dot_dimension_numbers<[1], [0], [0], [1], [0, 0, 1, 1], [], []>} : vector<128x32xbf16>, vector<32x64xbf16>, vector<128x64xf32> -> vector<128x64xf32>
    %c0_86 = arith.constant 0 : index
    %c0_87 = arith.constant 0 : index
    %265 = vector.load %arg13[%c0_86, %c0_87] : memref<1x64xf32, #tpu.memory_space<vmem>>, vector<1x64xf32>
    %266 = vector.broadcast %265 : vector<1x64xf32> to vector<128x64xf32>
    %267 = arith.addf %264, %266 : vector<128x64xf32>
    %cst_88 = arith.constant 5.000000e-01 : f32
    %268 = vector.broadcast %cst_88 : f32 to vector<128x64xf32>
    %269 = arith.mulf %268, %267 : vector<128x64xf32>
    %cst_89 = arith.constant 0.707106769 : f32
    %270 = vector.broadcast %cst_89 : f32 to vector<128x64xf32>
    %271 = arith.mulf %267, %270 : vector<128x64xf32>
    %cst_90 = arith.constant 0.000000e+00 : f32
    %272 = vector.broadcast %cst_90 : f32 to vector<128x64xf32>
    %273 = arith.cmpf oge, %271, %272 : vector<128x64xf32>
    %cst_91 = arith.constant 1.000000e+00 : f32
    %cst_92 = arith.constant -1.000000e+00 : f32
    %274 = vector.broadcast %cst_91 : f32 to vector<128x64xf32>
    %275 = vector.broadcast %cst_92 : f32 to vector<128x64xf32>
    %276 = arith.select %273, %274, %275 : vector<128x64xi1>, vector<128x64xf32>
    %277 = math.absf %271 : vector<128x64xf32>
    %cst_93 = arith.constant 0.327591091 : f32
    %278 = vector.broadcast %cst_93 : f32 to vector<128x64xf32>
    %279 = arith.mulf %278, %277 : vector<128x64xf32>
    %cst_94 = arith.constant 1.000000e+00 : f32
    %280 = vector.broadcast %cst_94 : f32 to vector<128x64xf32>
    %281 = arith.addf %280, %279 : vector<128x64xf32>
    %cst_95 = arith.constant 1.000000e+00 : f32
    %282 = vector.broadcast %cst_95 : f32 to vector<128x64xf32>
    %283 = arith.divf %282, %281 : vector<128x64xf32>
    %cst_96 = arith.constant 1.06140542 : f32
    %284 = vector.broadcast %cst_96 : f32 to vector<128x64xf32>
    %285 = arith.mulf %284, %283 : vector<128x64xf32>
    %cst_97 = arith.constant -1.45315206 : f32
    %286 = vector.broadcast %cst_97 : f32 to vector<128x64xf32>
    %287 = arith.addf %285, %286 : vector<128x64xf32>
    %288 = arith.mulf %287, %283 : vector<128x64xf32>
    %cst_98 = arith.constant 1.42141378 : f32
    %289 = vector.broadcast %cst_98 : f32 to vector<128x64xf32>
    %290 = arith.addf %288, %289 : vector<128x64xf32>
    %291 = arith.mulf %290, %283 : vector<128x64xf32>
    %cst_99 = arith.constant -0.284496725 : f32
    %292 = vector.broadcast %cst_99 : f32 to vector<128x64xf32>
    %293 = arith.addf %291, %292 : vector<128x64xf32>
    %294 = arith.mulf %293, %283 : vector<128x64xf32>
    %cst_100 = arith.constant 0.254829586 : f32
    %295 = vector.broadcast %cst_100 : f32 to vector<128x64xf32>
    %296 = arith.addf %294, %295 : vector<128x64xf32>
    %297 = arith.mulf %296, %283 : vector<128x64xf32>
    %cst_101 = arith.constant 0.000000e+00 : f32
    %298 = vector.broadcast %cst_101 : f32 to vector<128x64xf32>
    %299 = arith.subf %298, %277 : vector<128x64xf32>
    %300 = arith.mulf %299, %277 : vector<128x64xf32>
    %301 = math.exp %300 : vector<128x64xf32>
    %302 = arith.mulf %297, %301 : vector<128x64xf32>
    %cst_102 = arith.constant 1.000000e+00 : f32
    %303 = vector.broadcast %cst_102 : f32 to vector<128x64xf32>
    %304 = arith.subf %303, %302 : vector<128x64xf32>
    %305 = arith.mulf %276, %304 : vector<128x64xf32>
    %cst_103 = arith.constant 1.000000e+00 : f32
    %306 = vector.broadcast %cst_103 : f32 to vector<128x64xf32>
    %307 = arith.addf %306, %305 : vector<128x64xf32>
    %308 = arith.mulf %269, %307 : vector<128x64xf32>
    %309 = arith.truncf %308 : vector<128x64xf32> to vector<128x64xbf16>
    %c0_104 = arith.constant 0 : index
    %c0_105 = arith.constant 0 : index
    %310 = vector.load %arg14[%c0_104, %c0_105] : memref<64x32xbf16, #tpu.memory_space<vmem>>, vector<64x32xbf16>
    %cst_106 = arith.constant dense<0.000000e+00> : vector<128x32xf32>
    %311 = tpu.matmul %309, %310, %cst_106 {dimension_numbers = #tpu.dot_dimension_numbers<[1], [0], [0], [1], [0, 0, 1, 1], [], []>} : vector<128x64xbf16>, vector<64x32xbf16>, vector<128x32xf32> -> vector<128x32xf32>
    %c0_107 = arith.constant 0 : index
    %c0_108 = arith.constant 0 : index
    %312 = vector.load %arg15[%c0_107, %c0_108] : memref<1x32xf32, #tpu.memory_space<vmem>>, vector<1x32xf32>
    %313 = vector.broadcast %312 : vector<1x32xf32> to vector<128x32xf32>
    %314 = arith.addf %311, %313 : vector<128x32xf32>
    %315 = arith.addf %237, %314 : vector<128x32xf32>
    %316 = vector.extract_strided_slice %315 {offsets = [0, 0], sizes = [32, 32], strides = [1, 1]} : vector<128x32xf32> to vector<32x32xf32>
    %317 = vector.extract_strided_slice %315 {offsets = [32, 0], sizes = [32, 32], strides = [1, 1]} : vector<128x32xf32> to vector<32x32xf32>
    %318 = vector.extract_strided_slice %315 {offsets = [64, 0], sizes = [32, 32], strides = [1, 1]} : vector<128x32xf32> to vector<32x32xf32>
    %319 = vector.extract_strided_slice %315 {offsets = [96, 0], sizes = [32, 32], strides = [1, 1]} : vector<128x32xf32> to vector<32x32xf32>
    %320 = tpu.concatenate %316, %317, %318, %319 in 1 : vector<32x32xf32>, vector<32x32xf32>, vector<32x32xf32>, vector<32x32xf32> -> vector<32x128xf32>
    %c0_109 = arith.constant 0 : index
    %c0_110 = arith.constant 0 : index
    %321 = vector.load %arg16[%c0_109, %c0_110] : memref<32x128xf32, #tpu.memory_space<vmem>>, vector<32x128xf32>
    tpu.vector_store %arg16[%c0_109, %c0_110], %320 {strides = array<i32>} : memref<32x128xf32, #tpu.memory_space<vmem>>, vector<32x128xf32>,
    return
  }
  func.func @transform_0(%arg0: i32) -> (i32, i32) {
    %c0_i32 = arith.constant 0 : i32
    %c0_i32_0 = arith.constant 0 : i32
    return %arg0, %c0_i32 : i32, i32
  }
  func.func @transform_1(%arg0: i32) -> (i32, i32) {
    %c0_i32 = arith.constant 0 : i32
    %c0_i32_0 = arith.constant 0 : i32
    %c0_i32_1 = arith.constant 0 : i32
    return %c0_i32, %c0_i32_0 : i32, i32
  }
  func.func @transform_2(%arg0: i32) -> (i32, i32) {
    %c0_i32 = arith.constant 0 : i32
    %c0_i32_0 = arith.constant 0 : i32
    %c0_i32_1 = arith.constant 0 : i32
    return %c0_i32, %c0_i32_0 : i32, i32
  }
  func.func @transform_3(%arg0: i32) -> (i32, i32) {
    %c0_i32 = arith.constant 0 : i32
    %c0_i32_0 = arith.constant 0 : i32
    %c0_i32_1 = arith.constant 0 : i32
    return %c0_i32, %c0_i32_0 : i32, i32
  }
  func.func @transform_4(%arg0: i32) -> (i32, i32) {
    %c0_i32 = arith.constant 0 : i32
    %c0_i32_0 = arith.constant 0 : i32
    %c0_i32_1 = arith.constant 0 : i32
    return %c0_i32, %c0_i32_0 : i32, i32
  }
  func.func @transform_5(%arg0: i32) -> (i32, i32, i32) {
    %c0_i32 = arith.constant 0 : i32
    %c0_i32_0 = arith.constant 0 : i32
    %c0_i32_1 = arith.constant 0 : i32
    %c0_i32_2 = arith.constant 0 : i32
    return %c0_i32, %c0_i32_0, %c0_i32_1 : i32, i32, i32
  }
  func.func @transform_6(%arg0: i32) -> (i32, i32, i32) {
    %c0_i32 = arith.constant 0 : i32
    %c0_i32_0 = arith.constant 0 : i32
    %c0_i32_1 = arith.constant 0 : i32
    %c0_i32_2 = arith.constant 0 : i32
    return %c0_i32, %c0_i32_0, %c0_i32_1 : i32, i32, i32
  }
  func.func @transform_7(%arg0: i32) -> (i32, i32) {
    %c0_i32 = arith.constant 0 : i32
    %c0_i32_0 = arith.constant 0 : i32
    %c0_i32_1 = arith.constant 0 : i32
    return %c0_i32, %c0_i32_0 : i32, i32
  }
  func.func @transform_8(%arg0: i32) -> (i32, i32) {
    %c0_i32 = arith.constant 0 : i32
    %c0_i32_0 = arith.constant 0 : i32
    %c0_i32_1 = arith.constant 0 : i32
    return %c0_i32, %c0_i32_0 : i32, i32
  }
  func.func @transform_9(%arg0: i32) -> (i32, i32) {
    %c0_i32 = arith.constant 0 : i32
    %c0_i32_0 = arith.constant 0 : i32
    %c0_i32_1 = arith.constant 0 : i32
    return %c0_i32, %c0_i32_0 : i32, i32
  }
  func.func @transform_10(%arg0: i32) -> (i32, i32) {
    %c0_i32 = arith.constant 0 : i32
    %c0_i32_0 = arith.constant 0 : i32
    %c0_i32_1 = arith.constant 0 : i32
    return %c0_i32, %c0_i32_0 : i32, i32
  }
  func.func @transform_11(%arg0: i32) -> (i32, i32) {
    %c0_i32 = arith.constant 0 : i32
    %c0_i32_0 = arith.constant 0 : i32
    %c0_i32_1 = arith.constant 0 : i32
    return %c0_i32, %c0_i32_0 : i32, i32
  }
  func.func @transform_12(%arg0: i32) -> (i32, i32) {
    %c0_i32 = arith.constant 0 : i32
    %c0_i32_0 = arith.constant 0 : i32
    %c0_i32_1 = arith.constant 0 : i32
    return %c0_i32, %c0_i32_0 : i32, i32
  }
  func.func @transform_13(%arg0: i32) -> (i32, i32) {
    %c0_i32 = arith.constant 0 : i32
    %c0_i32_0 = arith.constant 0 : i32
    %c0_i32_1 = arith.constant 0 : i32
    return %c0_i32, %c0_i32_0 : i32, i32
  }
  func.func @transform_14(%arg0: i32) -> (i32, i32) {
    %c0_i32 = arith.constant 0 : i32
    %c0_i32_0 = arith.constant 0 : i32
    %c0_i32_1 = arith.constant 0 : i32
    return %c0_i32, %c0_i32_0 : i32, i32
  }
  func.func @transform_15(%arg0: i32) -> (i32, i32) {
    %c0_i32 = arith.constant 0 : i32
    %c0_i32_0 = arith.constant 0 : i32
    return %arg0, %c0_i32 : i32, i32
  }
}

</mosaic_0001>

<llo_original>
// kernel: tpu_custom_call.1
$region0: #{tpu_custom_call.1}
  #allocation0 [shape = 'u32[]', space=smem, size = 0x4, offset = 0x4, fixed_abs, tag = 'smem constant byte address 0x4 - core index']
  #allocation1 [shape = 'u32[144,128]{1,0:T(1,128)}', space=vmem, size = 0x12000, scoped, tag = 'internal scratch']
  %s0 = inlined_call_operand.hbm [shape: f32[64,128], index: 0, kind: input, shape index: {}]
  %s1 = inlined_call_operand.vmem [shape: f32[1,32], index: 1, kind: input, shape index: {}]
  %s2 = inlined_call_operand.vmem [shape: f32[1,32], index: 2, kind: input, shape index: {}]
  %s3 = inlined_call_operand.vmem [shape: bf16[32,128], index: 3, kind: input, shape index: {}]
  %s4 = inlined_call_operand.vmem [shape: f32[1,128], index: 4, kind: input, shape index: {}]
  %s5 = inlined_call_operand.vmem [shape: f32[4,1,32], index: 5, kind: input, shape index: {}]
  %s6 = inlined_call_operand.hbm [shape: bf16[4,64,64], index: 6, kind: input, shape index: {}]
  %s7 = inlined_call_operand.vmem [shape: bf16[32,32], index: 7, kind: input, shape index: {}]
  %s8 = inlined_call_operand.vmem [shape: f32[1,32], index: 8, kind: input, shape index: {}]
  %s9 = inlined_call_operand.vmem [shape: f32[1,32], index: 9, kind: input, shape index: {}]
  %s10 = inlined_call_operand.vmem [shape: f32[1,32], index: 10, kind: input, shape index: {}]
  %s11 = inlined_call_operand.vmem [shape: bf16[32,64], index: 11, kind: input, shape index: {}]
  %s12 = inlined_call_operand.vmem [shape: f32[1,64], index: 12, kind: input, shape index: {}]
  %s13 = inlined_call_operand.vmem [shape: bf16[64,32], index: 13, kind: input, shape index: {}]
  %s14 = inlined_call_operand.vmem [shape: f32[1,32], index: 14, kind: input, shape index: {}]
  %s15 = inlined_call_operand.hbm [shape: f32[64,128], index: 15, kind: output, shape index: {}]
  %s16 = sld [smem:[#allocation0]]
  $region101: #{tpu_custom_call.1} parent=0
    _
  %s18 = ssub.s32 1, %s16
  %s19 = scalar_select 0, %s18, %s16
  $region1: #{tpu_custom_call.1} parent=0
    #allocation2 [shape = 'u8[32768]{0}', space=vmem, size = 0x8000, scoped, tag = 'input window, operand 0']
    #allocation3 [shape = 's32[2]{0}', space=sflag, size = 0x8, scoped, tag = 'scoped memory for tpu_custom_call.1']
    #allocation4 [shape = 's32[2]{0}', space=sflag, size = 0x8, scoped, tag = 'scoped memory for tpu_custom_call.1']
    #allocation5 [shape = 'u8[65536]{0}', space=vmem, size = 0x10000, scoped, tag = 'input window, operand 6, single buffered']
    #allocation6 [shape = 's32[1]{0}', space=sflag, size = 0x4, scoped, tag = 'scoped memory for tpu_custom_call.1']
    #allocation7 [shape = 'u8[32768]{0}', space=vmem, size = 0x8000, scoped, tag = 'output window, operand 0']
    %20 = vsyncpa [#allocation3], 0
    %s21 = scalar_lea.sflag [#allocation3], 1
    %22 = vsyncpa %s21, 0
    %23 = vsyncpa [#allocation6], 0
    %24 = vsyncpa [#allocation4], 0
    %s25 = scalar_lea.sflag [#allocation4], 1
    %26 = vsyncpa %s25, 0
    loop: start=0, step=1, limit=4
    $region2: #{tpu_custom_call.1} parent=1 // loop_pre_header
      _
    $region3: #{tpu_custom_call.1} parent=1 // loop_header
      %s28 = sphi 0, %s32
      %p29 = scmp.ge.s32.totalorder %s28, 4
      %s38 = sphi 0, %s40
      %s41 = sphi 0, %s38
      %s42 = sphi 0, %s41
      %s58 = sphi 0, %s42
      %s62 = sphi 0, %s62
      %s64 = sphi 0, %s62
      %s65 = sphi 0, %s64
      %s79 = sphi 0, %s65
      %s83 = sphi 0, %s83
      %s85 = sphi 0, %s83
      %s86 = sphi 0, %s85
      %s100 = sphi 0, %s86
      %s104 = sphi 0, %s104
      %s106 = sphi 0, %s104
      %s107 = sphi 0, %s106
      %s121 = sphi 0, %s107
      %s125 = sphi 0, %s125
      %s127 = sphi 0, %s125
      %s128 = sphi 0, %s127
      %s142 = sphi 0, %s128
      %s146 = sphi 0, %s146
      %s148 = sphi 0, %s146
      %s149 = sphi 0, %s148
      %s163 = sphi 0, %s149
      %s167 = sphi 0, %s167
      %s169 = sphi 0, %s167
      %s170 = sphi 0, %s169
      %s184 = sphi 0, %s170
      %s188 = sphi 0, %s188
      %s190 = sphi 0, %s188
      %s191 = sphi 0, %s190
      %s205 = sphi 0, %s191
      %s209 = sphi 0, %s209
      %s211 = sphi 0, %s209
      %s212 = sphi 0, %s211
      %s226 = sphi 0, %s212
      %s230 = sphi 0, %s230
      %s232 = sphi 0, %s230
      %s233 = sphi 0, %s232
      %s247 = sphi 0, %s233
      %s251 = sphi 0, %s251
      %s253 = sphi 0, %s251
      %s254 = sphi 0, %s253
      %s268 = sphi 0, %s254
      %s272 = sphi 0, %s272
      %s274 = sphi 0, %s272
      %s275 = sphi 0, %s274
      %s289 = sphi 0, %s275
      %s293 = sphi 0, %s293
      %s295 = sphi 0, %s293
      %s296 = sphi 0, %s295
      %s310 = sphi 0, %s296
      %s314 = sphi 0, %s314
      %s316 = sphi 0, %s314
      %s317 = sphi 0, %s316
      %s331 = sphi 0, %s317
      %s335 = sphi 0, %s335
      %s337 = sphi 0, %s335
      %s338 = sphi 0, %s337
      %s352 = sphi 0, %s338
      %s358 = sphi 0, %s360
      %s361 = sphi 0, %s358
      %s362 = sphi 0, %s361
      %s378 = sphi 0, %s362
    $region4: #{tpu_custom_call.1} parent=1 // loop_header_branch
      %31 = sbr.rel (%p29) target = $region8
    $region5: #{tpu_custom_call.1} parent=1 // loop_body
      %s33 = ssub.s32 %s28, 1
      %s34 = ssub.s32 %s28, 2
      %s35 = sadd.s32 %s28, 1
      %s36 = ssub.s32 %s28, %s35
      %p37 = scmp.eq.s32.totalorder %s36, 0
      %s39 = sadd.s32 %s38, 1
      %s40 = scalar_select %p37, %s38, %s39
      %p43 = pneg %p37
      %p44 = scmp.eq.s32.totalorder %s28, 1
      %p45 = por %p43, %p44
      %p46 = scmp.ne.s32.totalorder %s38, %s41
      %p47 = scmp.eq.s32.totalorder %s28, 0
      %p48 = por %p46, %p47
      %p49 = scmp.ne.s32.totalorder %s38, %s41
      %p50 = scmp.eq.s32.totalorder %s33, 1
      %p51 = por %p49, %p50
      %p52 = scmp.ne.s32.totalorder %s41, %s42
      %p53 = scmp.eq.s32.totalorder %s33, 0
      %p54 = por %p52, %p53
      %p55 = scmp.ne.s32.totalorder %s41, %s42
      %p56 = scmp.eq.s32.totalorder %s34, 1
      %p57 = por %p55, %p56
      %p59 = scmp.ne.s32.totalorder %s42, %s58
      %p60 = scmp.eq.s32.totalorder %s34, 0
      %p61 = por %p59, %p60
      %s63 = sadd.s32 %s62, 1
      %p66 = scmp.eq.s32.totalorder %s28, 1
      %p67 = scmp.ne.s32.totalorder %s62, %s64
      %p68 = scmp.eq.s32.totalorder %s28, 0
      %p69 = por %p67, %p68
      %p70 = scmp.ne.s32.totalorder %s62, %s64
      %p71 = scmp.eq.s32.totalorder %s33, 1
      %p72 = por %p70, %p71
      %p73 = scmp.ne.s32.totalorder %s64, %s65
      %p74 = scmp.eq.s32.totalorder %s33, 0
      %p75 = por %p73, %p74
      %p76 = scmp.ne.s32.totalorder %s64, %s65
      %p77 = scmp.eq.s32.totalorder %s34, 1
      %p78 = por %p76, %p77
      %p80 = scmp.ne.s32.totalorder %s65, %s79
      %p81 = scmp.eq.s32.totalorder %s34, 0
      %p82 = por %p80, %p81
      %s84 = sadd.s32 %s83, 1
      %p87 = scmp.eq.s32.totalorder %s28, 1
      %p88 = scmp.ne.s32.totalorder %s83, %s85
      %p89 = scmp.eq.s32.totalorder %s28, 0
      %p90 = por %p88, %p89
      %p91 = scmp.ne.s32.totalorder %s83, %s85
      %p92 = scmp.eq.s32.totalorder %s33, 1
      %p93 = por %p91, %p92
      %p94 = scmp.ne.s32.totalorder %s85, %s86
      %p95 = scmp.eq.s32.totalorder %s33, 0
      %p96 = por %p94, %p95
      %p97 = scmp.ne.s32.totalorder %s85, %s86
      %p98 = scmp.eq.s32.totalorder %s34, 1
      %p99 = por %p97, %p98
      %p101 = scmp.ne.s32.totalorder %s86, %s100
      %p102 = scmp.eq.s32.totalorder %s34, 0
      %p103 = por %p101, %p102
      %s105 = sadd.s32 %s104, 1
      %p108 = scmp.eq.s32.totalorder %s28, 1
      %p109 = scmp.ne.s32.totalorder %s104, %s106
      %p110 = scmp.eq.s32.totalorder %s28, 0
      %p111 = por %p109, %p110
      %p112 = scmp.ne.s32.totalorder %s104, %s106
      %p113 = scmp.eq.s32.totalorder %s33, 1
      %p114 = por %p112, %p113
      %p115 = scmp.ne.s32.totalorder %s106, %s107
      %p116 = scmp.eq.s32.totalorder %s33, 0
      %p117 = por %p115, %p116
      %p118 = scmp.ne.s32.totalorder %s106, %s107
      %p119 = scmp.eq.s32.totalorder %s34, 1
      %p120 = por %p118, %p119
      %p122 = scmp.ne.s32.totalorder %s107, %s121
      %p123 = scmp.eq.s32.totalorder %s34, 0
      %p124 = por %p122, %p123
      %s126 = sadd.s32 %s125, 1
      %p129 = scmp.eq.s32.totalorder %s28, 1
      %p130 = scmp.ne.s32.totalorder %s125, %s127
      %p131 = scmp.eq.s32.totalorder %s28, 0
      %p132 = por %p130, %p131
      %p133 = scmp.ne.s32.totalorder %s125, %s127
      %p134 = scmp.eq.s32.totalorder %s33, 1
      %p135 = por %p133, %p134
      %p136 = scmp.ne.s32.totalorder %s127, %s128
      %p137 = scmp.eq.s32.totalorder %s33, 0
      %p138 = por %p136, %p137
      %p139 = scmp.ne.s32.totalorder %s127, %s128
      %p140 = scmp.eq.s32.totalorder %s34, 1
      %p141 = por %p139, %p140
      %p143 = scmp.ne.s32.totalorder %s128, %s142
      %p144 = scmp.eq.s32.totalorder %s34, 0
      %p145 = por %p143, %p144
      %s147 = sadd.s32 %s146, 1
      %p150 = scmp.eq.s32.totalorder %s28, 1
      %p151 = scmp.ne.s32.totalorder %s146, %s148
      %p152 = scmp.eq.s32.totalorder %s28, 0
      %p153 = por %p151, %p152
      %p154 = scmp.ne.s32.totalorder %s146, %s148
      %p155 = scmp.eq.s32.totalorder %s33, 1
      %p156 = por %p154, %p155
      %p157 = scmp.ne.s32.totalorder %s148, %s149
      %p158 = scmp.eq.s32.totalorder %s33, 0
      %p159 = por %p157, %p158
      %p160 = scmp.ne.s32.totalorder %s148, %s149
      %p161 = scmp.eq.s32.totalorder %s34, 1
      %p162 = por %p160, %p161
      %p164 = scmp.ne.s32.totalorder %s149, %s163
      %p165 = scmp.eq.s32.totalorder %s34, 0
      %p166 = por %p164, %p165
      %s168 = sadd.s32 %s167, 1
      %p171 = scmp.eq.s32.totalorder %s28, 1
      %p172 = scmp.ne.s32.totalorder %s167, %s169
      %p173 = scmp.eq.s32.totalorder %s28, 0
      %p174 = por %p172, %p173
      %p175 = scmp.ne.s32.totalorder %s167, %s169
      %p176 = scmp.eq.s32.totalorder %s33, 1
      %p177 = por %p175, %p176
      %p178 = scmp.ne.s32.totalorder %s169, %s170
      %p179 = scmp.eq.s32.totalorder %s33, 0
      %p180 = por %p178, %p179
      %p181 = scmp.ne.s32.totalorder %s169, %s170
      %p182 = scmp.eq.s32.totalorder %s34, 1
      %p183 = por %p181, %p182
      %p185 = scmp.ne.s32.totalorder %s170, %s184
      %p186 = scmp.eq.s32.totalorder %s34, 0
      %p187 = por %p185, %p186
      %s189 = sadd.s32 %s188, 1
      %p192 = scmp.eq.s32.totalorder %s28, 1
      %p193 = scmp.ne.s32.totalorder %s188, %s190
      %p194 = scmp.eq.s32.totalorder %s28, 0
      %p195 = por %p193, %p194
      %p196 = scmp.ne.s32.totalorder %s188, %s190
      %p197 = scmp.eq.s32.totalorder %s33, 1
      %p198 = por %p196, %p197
      %p199 = scmp.ne.s32.totalorder %s190, %s191
      %p200 = scmp.eq.s32.totalorder %s33, 0
      %p201 = por %p199, %p200
      %p202 = scmp.ne.s32.totalorder %s190, %s191
      %p203 = scmp.eq.s32.totalorder %s34, 1
      %p204 = por %p202, %p203
      %p206 = scmp.ne.s32.totalorder %s191, %s205
      %p207 = scmp.eq.s32.totalorder %s34, 0
      %p208 = por %p206, %p207
      %s210 = sadd.s32 %s209, 1
      %p213 = scmp.eq.s32.totalorder %s28, 1
      %p214 = scmp.ne.s32.totalorder %s209, %s211
      %p215 = scmp.eq.s32.totalorder %s28, 0
      %p216 = por %p214, %p215
      %p217 = scmp.ne.s32.totalorder %s209, %s211
      %p218 = scmp.eq.s32.totalorder %s33, 1
      %p219 = por %p217, %p218
      %p220 = scmp.ne.s32.totalorder %s211, %s212
      %p221 = scmp.eq.s32.totalorder %s33, 0
      %p222 = por %p220, %p221
      %p223 = scmp.ne.s32.totalorder %s211, %s212
      %p224 = scmp.eq.s32.totalorder %s34, 1
      %p225 = por %p223, %p224
      %p227 = scmp.ne.s32.totalorder %s212, %s226
      %p228 = scmp.eq.s32.totalorder %s34, 0
      %p229 = por %p227, %p228
      %s231 = sadd.s32 %s230, 1
      %p234 = scmp.eq.s32.totalorder %s28, 1
      %p235 = scmp.ne.s32.totalorder %s230, %s232
      %p236 = scmp.eq.s32.totalorder %s28, 0
      %p237 = por %p235, %p236
      %p238 = scmp.ne.s32.totalorder %s230, %s232
      %p239 = scmp.eq.s32.totalorder %s33, 1
      %p240 = por %p238, %p239
      %p241 = scmp.ne.s32.totalorder %s232, %s233
      %p242 = scmp.eq.s32.totalorder %s33, 0
      %p243 = por %p241, %p242
      %p244 = scmp.ne.s32.totalorder %s232, %s233
      %p245 = scmp.eq.s32.totalorder %s34, 1
      %p246 = por %p244, %p245
      %p248 = scmp.ne.s32.totalorder %s233, %s247
      %p249 = scmp.eq.s32.totalorder %s34, 0
      %p250 = por %p248, %p249
      %s252 = sadd.s32 %s251, 1
      %p255 = scmp.eq.s32.totalorder %s28, 1
      %p256 = scmp.ne.s32.totalorder %s251, %s253
      %p257 = scmp.eq.s32.totalorder %s28, 0
      %p258 = por %p256, %p257
      %p259 = scmp.ne.s32.totalorder %s251, %s253
      %p260 = scmp.eq.s32.totalorder %s33, 1
      %p261 = por %p259, %p260
      %p262 = scmp.ne.s32.totalorder %s253, %s254
      %p263 = scmp.eq.s32.totalorder %s33, 0
      %p264 = por %p262, %p263
      %p265 = scmp.ne.s32.totalorder %s253, %s254
      %p266 = scmp.eq.s32.totalorder %s34, 1
      %p267 = por %p265, %p266
      %p269 = scmp.ne.s32.totalorder %s254, %s268
      %p270 = scmp.eq.s32.totalorder %s34, 0
      %p271 = por %p269, %p270
      %s273 = sadd.s32 %s272, 1
      %p276 = scmp.eq.s32.totalorder %s28, 1
      %p277 = scmp.ne.s32.totalorder %s272, %s274
      %p278 = scmp.eq.s32.totalorder %s28, 0
      %p279 = por %p277, %p278
      %p280 = scmp.ne.s32.totalorder %s272, %s274
      %p281 = scmp.eq.s32.totalorder %s33, 1
      %p282 = por %p280, %p281
      %p283 = scmp.ne.s32.totalorder %s274, %s275
      %p284 = scmp.eq.s32.totalorder %s33, 0
      %p285 = por %p283, %p284
      %p286 = scmp.ne.s32.totalorder %s274, %s275
      %p287 = scmp.eq.s32.totalorder %s34, 1
      %p288 = por %p286, %p287
      %p290 = scmp.ne.s32.totalorder %s275, %s289
      %p291 = scmp.eq.s32.totalorder %s34, 0
      %p292 = por %p290, %p291
      %s294 = sadd.s32 %s293, 1
      %p297 = scmp.eq.s32.totalorder %s28, 1
      %p298 = scmp.ne.s32.totalorder %s293, %s295
      %p299 = scmp.eq.s32.totalorder %s28, 0
      %p300 = por %p298, %p299
      %p301 = scmp.ne.s32.totalorder %s293, %s295
      %p302 = scmp.eq.s32.totalorder %s33, 1
      %p303 = por %p301, %p302
      %p304 = scmp.ne.s32.totalorder %s295, %s296
      %p305 = scmp.eq.s32.totalorder %s33, 0
      %p306 = por %p304, %p305
      %p307 = scmp.ne.s32.totalorder %s295, %s296
      %p308 = scmp.eq.s32.totalorder %s34, 1
      %p309 = por %p307, %p308
      %p311 = scmp.ne.s32.totalorder %s296, %s310
      %p312 = scmp.eq.s32.totalorder %s34, 0
      %p313 = por %p311, %p312
      %s315 = sadd.s32 %s314, 1
      %p318 = scmp.eq.s32.totalorder %s28, 1
      %p319 = scmp.ne.s32.totalorder %s314, %s316
      %p320 = scmp.eq.s32.totalorder %s28, 0
      %p321 = por %p319, %p320
      %p322 = scmp.ne.s32.totalorder %s314, %s316
      %p323 = scmp.eq.s32.totalorder %s33, 1
      %p324 = por %p322, %p323
      %p325 = scmp.ne.s32.totalorder %s316, %s317
      %p326 = scmp.eq.s32.totalorder %s33, 0
      %p327 = por %p325, %p326
      %p328 = scmp.ne.s32.totalorder %s316, %s317
      %p329 = scmp.eq.s32.totalorder %s34, 1
      %p330 = por %p328, %p329
      %p332 = scmp.ne.s32.totalorder %s317, %s331
      %p333 = scmp.eq.s32.totalorder %s34, 0
      %p334 = por %p332, %p333
      %s336 = sadd.s32 %s335, 1
      %p339 = scmp.eq.s32.totalorder %s28, 1
      %p340 = scmp.ne.s32.totalorder %s335, %s337
      %p341 = scmp.eq.s32.totalorder %s28, 0
      %p342 = por %p340, %p341
      %p343 = scmp.ne.s32.totalorder %s335, %s337
      %p344 = scmp.eq.s32.totalorder %s33, 1
      %p345 = por %p343, %p344
      %p346 = scmp.ne.s32.totalorder %s337, %s338
      %p347 = scmp.eq.s32.totalorder %s33, 0
      %p348 = por %p346, %p347
      %p349 = scmp.ne.s32.totalorder %s337, %s338
      %p350 = scmp.eq.s32.totalorder %s34, 1
      %p351 = por %p349, %p350
      %p353 = scmp.ne.s32.totalorder %s338, %s352
      %p354 = scmp.eq.s32.totalorder %s34, 0
      %p355 = por %p353, %p354
      %s356 = ssub.s32 %s28, %s35
      %p357 = scmp.eq.s32.totalorder %s356, 0
      %s359 = sadd.s32 %s358, 1
      %s360 = scalar_select %p357, %s358, %s359
      %p363 = pneg %p357
      %p364 = scmp.eq.s32.totalorder %s28, 1
      %p365 = por %p363, %p364
      %p366 = scmp.ne.s32.totalorder %s358, %s361
      %p367 = scmp.eq.s32.totalorder %s28, 0
      %p368 = por %p366, %p367
      %p369 = scmp.ne.s32.totalorder %s358, %s361
      %p370 = scmp.eq.s32.totalorder %s33, 1
      %p371 = por %p369, %p370
      %p372 = scmp.ne.s32.totalorder %s361, %s362
      %p373 = scmp.eq.s32.totalorder %s33, 0
      %p374 = por %p372, %p373
      %p375 = scmp.ne.s32.totalorder %s361, %s362
      %p376 = scmp.eq.s32.totalorder %s34, 1
      %p377 = por %p375, %p376
      %p379 = scmp.ne.s32.totalorder %s362, %s378
      %p380 = scmp.eq.s32.totalorder %s34, 0
      %p381 = por %p379, %p380
      %p382 = scmp.le.s32.totalorder 1, %s28
      %p383 = scmp.lt.s32.totalorder %s28, 3
      %p384 = pnand %p382, %p383
      %p385 = pneg %p384
      // Predicated region
      $region9: #{tpu_custom_call.1} parent=5 // pred_check
        _
      $region10: #{tpu_custom_call.1} parent=5 // pred_check_branch
        %387 = sbr.rel (%p384) target = $region12
      $region11: #{tpu_custom_call.1} parent=5 // pred_region
        %s388 = ssub.s32 %s28, 1
        // Predicated region
        $region13: #{tpu_custom_call.1} parent=11 // pred_check
          %p389 = pneg %p75
        $region14: #{tpu_custom_call.1} parent=11 // pred_check_branch
          %391 = sbr.rel (%p389) target = $region16
        $region15: #{tpu_custom_call.1} parent=11 // pred_region
          _
        $region16: #{tpu_custom_call.1} parent=11 // pred_fallthru
          _
        // Predicated region
        $region17: #{tpu_custom_call.1} parent=11 // pred_check
          %p392 = pneg %p96
        $region18: #{tpu_custom_call.1} parent=11 // pred_check_branch
          %394 = sbr.rel (%p392) target = $region20
        $region19: #{tpu_custom_call.1} parent=11 // pred_region
          _
        $region20: #{tpu_custom_call.1} parent=11 // pred_fallthru
          _
        // Predicated region
        $region21: #{tpu_custom_call.1} parent=11 // pred_check
          %p395 = pneg %p117
        $region22: #{tpu_custom_call.1} parent=11 // pred_check_branch
          %397 = sbr.rel (%p395) target = $region24
        $region23: #{tpu_custom_call.1} parent=11 // pred_region
          _
        $region24: #{tpu_custom_call.1} parent=11 // pred_fallthru
          _
        // Predicated region
        $region25: #{tpu_custom_call.1} parent=11 // pred_check
          %p398 = pneg %p138
        $region26: #{tpu_custom_call.1} parent=11 // pred_check_branch
          %400 = sbr.rel (%p398) target = $region28
        $region27: #{tpu_custom_call.1} parent=11 // pred_region
          _
        $region28: #{tpu_custom_call.1} parent=11 // pred_fallthru
          _
        // Predicated region
        $region29: #{tpu_custom_call.1} parent=11 // pred_check
          %p401 = pneg %p159
        $region30: #{tpu_custom_call.1} parent=11 // pred_check_branch
          %403 = sbr.rel (%p401) target = $region32
        $region31: #{tpu_custom_call.1} parent=11 // pred_region
          _
        $region32: #{tpu_custom_call.1} parent=11 // pred_fallthru
          _
        // Predicated region
        $region33: #{tpu_custom_call.1} parent=11 // pred_check
          %p404 = pneg %p180
        $region34: #{tpu_custom_call.1} parent=11 // pred_check_branch
          %406 = sbr.rel (%p404) target = $region36
        $region35: #{tpu_custom_call.1} parent=11 // pred_region
          %s408 = ssub.s32 2048, 2048
          %409 = vsyncadd [#allocation6], %s408
          %s410 = sshll.u32 [#allocation5], 4
          %s411 = int_to_ptr.vmem [resolvable:$true] %s410
          %416 = dma.hbm_to_vmem [thread:$0]  %s6, 2048, %s411, [#allocation6], 64, 64, 4
        $region36: #{tpu_custom_call.1} parent=11 // pred_fallthru
          _
        // Predicated region
        $region37: #{tpu_custom_call.1} parent=11 // pred_check
          %p417 = pneg %p201
        $region38: #{tpu_custom_call.1} parent=11 // pred_check_branch
          %419 = sbr.rel (%p417) target = $region40
        $region39: #{tpu_custom_call.1} parent=11 // pred_region
          _
        $region40: #{tpu_custom_call.1} parent=11 // pred_fallthru
          _
        // Predicated region
        $region41: #{tpu_custom_call.1} parent=11 // pred_check
          %p420 = pneg %p222
        $region42: #{tpu_custom_call.1} parent=11 // pred_check_branch
          %422 = sbr.rel (%p420) target = $region44
        $region43: #{tpu_custom_call.1} parent=11 // pred_region
          _
        $region44: #{tpu_custom_call.1} parent=11 // pred_fallthru
          _
        // Predicated region
        $region45: #{tpu_custom_call.1} parent=11 // pred_check
          %p423 = pneg %p243
        $region46: #{tpu_custom_call.1} parent=11 // pred_check_branch
          %425 = sbr.rel (%p423) target = $region48
        $region47: #{tpu_custom_call.1} parent=11 // pred_region
          _
        $region48: #{tpu_custom_call.1} parent=11 // pred_fallthru
          _
        // Predicated region
        $region49: #{tpu_custom_call.1} parent=11 // pred_check
          %p426 = pneg %p264
        $region50: #{tpu_custom_call.1} parent=11 // pred_check_branch
          %428 = sbr.rel (%p426) target = $region52
        $region51: #{tpu_custom_call.1} parent=11 // pred_region
          _
        $region52: #{tpu_custom_call.1} parent=11 // pred_fallthru
          _
        // Predicated region
        $region53: #{tpu_custom_call.1} parent=11 // pred_check
          %p429 = pneg %p285
        $region54: #{tpu_custom_call.1} parent=11 // pred_check_branch
          %431 = sbr.rel (%p429) target = $region56
        $region55: #{tpu_custom_call.1} parent=11 // pred_region
          _
        $region56: #{tpu_custom_call.1} parent=11 // pred_fallthru
          _
        // Predicated region
        $region57: #{tpu_custom_call.1} parent=11 // pred_check
          %p432 = pneg %p306
        $region58: #{tpu_custom_call.1} parent=11 // pred_check_branch
          %434 = sbr.rel (%p432) target = $region60
        $region59: #{tpu_custom_call.1} parent=11 // pred_region
          _
        $region60: #{tpu_custom_call.1} parent=11 // pred_fallthru
          _
        // Predicated region
        $region61: #{tpu_custom_call.1} parent=11 // pred_check
          %p435 = pneg %p327
        $region62: #{tpu_custom_call.1} parent=11 // pred_check_branch
          %437 = sbr.rel (%p435) target = $region64
        $region63: #{tpu_custom_call.1} parent=11 // pred_region
          _
        $region64: #{tpu_custom_call.1} parent=11 // pred_fallthru
          _
        // Predicated region
        $region65: #{tpu_custom_call.1} parent=11 // pred_check
          %p438 = pneg %p348
        $region66: #{tpu_custom_call.1} parent=11 // pred_check_branch
          %440 = sbr.rel (%p438) target = $region68
        $region67: #{tpu_custom_call.1} parent=11 // pred_region
          _
        $region68: #{tpu_custom_call.1} parent=11 // pred_fallthru
          _
      $region12: #{tpu_custom_call.1} parent=5 // pred_fallthru
        _
      %p441 = scmp.lt.s32.totalorder %s28, 2
      // Predicated region
      $region69: #{tpu_custom_call.1} parent=5 // pred_check
        %p442 = pneg %p441
      $region70: #{tpu_custom_call.1} parent=5 // pred_check_branch
        %444 = sbr.rel (%p442) target = $region72
      $region71: #{tpu_custom_call.1} parent=5 // pred_region
        // Predicated region
        $region73: #{tpu_custom_call.1} parent=71 // pred_check
          %p445 = pneg %p48
        $region74: #{tpu_custom_call.1} parent=71 // pred_check_branch
          %447 = sbr.rel (%p445) target = $region76
        $region75: #{tpu_custom_call.1} parent=71 // pred_region
          %s448 = sand.u32 %s38, 1
          %s449 = scalar_lea.sflag [#allocation3], %s448
          %s450 = sand.u32 %s38, 1
          %s451 = smul.addr %s450, 32
          %s452 = scalar_lea.vmem [#allocation2], %s451
          %s453 = smul.u32 4, %s28
          %s455 = ssub.s32 512, 512
          %456 = vsyncadd %s449, %s455
          %s457 = smul.addr %s453, 128
          %s458 = scalar_lea.hbm %s0, %s457
          %s459 = sshll.u32 %s452, 4
          %s460 = int_to_ptr.vmem [resolvable:$true] %s459
          %465 = dma.hbm_to_vmem [thread:$0]  %s458, 512, %s460, %s449, 128, 128, 8
        $region76: #{tpu_custom_call.1} parent=71 // pred_fallthru
          _
      $region72: #{tpu_custom_call.1} parent=5 // pred_fallthru
        _
      %p466 = scmp.le.s32.totalorder 1, %s28
      %p467 = scmp.lt.s32.totalorder %s28, 3
      %p468 = pnand %p466, %p467
      %p469 = pneg %p468
      // Predicated region
      $region77: #{tpu_custom_call.1} parent=5 // pred_check
        _
      $region78: #{tpu_custom_call.1} parent=5 // pred_check_branch
        %471 = sbr.rel (%p468) target = $region80
      $region79: #{tpu_custom_call.1} parent=5 // pred_region
        %s472 = ssub.s32 %s28, 1
        %s473 = sand.u32 %s41, 1
        %s474 = scalar_lea.sflag [#allocation3], %s473
        %s475 = sand.u32 %s41, 1
        %s476 = smul.addr %s475, 32
        %s477 = scalar_lea.vmem [#allocation2], %s476
        // Predicated region
        $region81: #{tpu_custom_call.1} parent=79 // pred_check
          %p478 = pneg %p54
        $region82: #{tpu_custom_call.1} parent=79 // pred_check_branch
          %480 = sbr.rel (%p478) target = $region84
        $region83: #{tpu_custom_call.1} parent=79 // pred_region
          %481 = dma.done %s474, 512
        $region84: #{tpu_custom_call.1} parent=79 // pred_fallthru
          _
        // Predicated region
        $region85: #{tpu_custom_call.1} parent=79 // pred_check
          %p482 = pneg %p180
        $region86: #{tpu_custom_call.1} parent=79 // pred_check_branch
          %484 = sbr.rel (%p482) target = $region88
        $region87: #{tpu_custom_call.1} parent=79 // pred_region
          %485 = dma.done [#allocation6], 2048
        $region88: #{tpu_custom_call.1} parent=79 // pred_fallthru
          _
        %s486 = sand.u32 %s41, 1
        %s487 = scalar_lea.sflag [#allocation3], %s486
        %s488 = sand.u32 %s41, 1
        %s489 = smul.addr %s488, 32
        %s490 = scalar_lea.vmem [#allocation2], %s489
        %p491 = pneg %p54
        %p492 = pneg %p51
        %p493 = pneg %p75
        %p494 = pneg %p72
        %p495 = pneg %p96
        %p496 = pneg %p93
        %p497 = pneg %p117
        %p498 = pneg %p114
        %p499 = pneg %p138
        %p500 = pneg %p135
        %p501 = pneg %p159
        %p502 = pneg %p156
        %p503 = pneg %p180
        %p504 = pneg %p177
        %p505 = pneg %p201
        %p506 = pneg %p198
        %p507 = pneg %p222
        %p508 = pneg %p219
        %p509 = pneg %p243
        %p510 = pneg %p240
        %p511 = pneg %p264
        %p512 = pneg %p261
        %p513 = pneg %p285
        %p514 = pneg %p282
        %p515 = pneg %p306
        %p516 = pneg %p303
        %p517 = pneg %p327
        %p518 = pneg %p324
        %p519 = pneg %p348
        %p520 = pneg %p345
        %p521 = pneg %p374
        %p522 = pneg %p371
        %s523 = sand.u32 %s361, 1
        %s524 = scalar_lea.sflag [#allocation4], %s523
        %s525 = sand.u32 %s361, 1
        %s526 = smul.addr %s525, 32
        %s527 = scalar_lea.vmem [#allocation7], %s526
        %s528 = smul.u32 4, %s33
        %s529 = smul.u32 4, %s33
        %v531 = vld [vmem:[%s477] sm:$0xff]
        %v532 = vld [vmem:[%s477 + $0x8] sm:$0xff]
        %v533 = vld [vmem:[%s477 + $0x10] sm:$0xff]
        %v534 = vld [vmem:[%s477 + $0x18] sm:$0xff]
        %539 = vrot.lane.b32.xlu0 %v531, 96
        %v540 = vpop.permute.xlu0 %539
        %541 = vrot.lane.b32.xlu0 %v532, 96
        %v542 = vpop.permute.xlu0 %541
        %543 = vrot.lane.b32.xlu0 %v533, 96
        %v544 = vpop.permute.xlu0 %543
        %545 = vrot.lane.b32.xlu0 %v534, 96
        %v546 = vpop.permute.xlu0 %545
        %551 = vrot.lane.b32.xlu0 %v531, 64
        %v552 = vpop.permute.xlu0 %551
        %553 = vrot.lane.b32.xlu0 %v532, 64
        %v554 = vpop.permute.xlu0 %553
        %555 = vrot.lane.b32.xlu0 %v533, 64
        %v556 = vpop.permute.xlu0 %555
        %557 = vrot.lane.b32.xlu0 %v534, 64
        %v558 = vpop.permute.xlu0 %557
        %563 = vrot.lane.b32.xlu0 %v531, 32
        %v564 = vpop.permute.xlu0 %563
        %565 = vrot.lane.b32.xlu0 %v532, 32
        %v566 = vpop.permute.xlu0 %565
        %567 = vrot.lane.b32.xlu0 %v533, 32
        %v568 = vpop.permute.xlu0 %567
        %569 = vrot.lane.b32.xlu0 %v534, 32
        %v570 = vpop.permute.xlu0 %569
        %v575 = vld [vmem:[%s1] sm:$0x1]
        %v576 = vld [vmem:[%s2] sm:$0x1]
        %vm577 = vcmask 261120
        %v578 = vsel %vm577, %v531, 0.0
        %579 = vadd.xlane.f32.xlu0 %v578
        %v580 = vpop.xlane.xlu0 %579
        %v581 = vsel %vm577, %v532, 0.0
        %582 = vadd.xlane.f32.xlu0 %v581
        %v583 = vpop.xlane.xlu0 %582
        %v584 = vsel %vm577, %v533, 0.0
        %585 = vadd.xlane.f32.xlu0 %v584
        %v586 = vpop.xlane.xlu0 %585
        %v587 = vsel %vm577, %v534, 0.0
        %588 = vadd.xlane.f32.xlu0 %v587
        %v589 = vpop.xlane.xlu0 %588
        %v590 = vsel %vm577, %v540, 0.0
        %591 = vadd.xlane.f32.xlu0 %v590
        %v592 = vpop.xlane.xlu0 %591
        %v593 = vsel %vm577, %v542, 0.0
        %594 = vadd.xlane.f32.xlu0 %v593
        %v595 = vpop.xlane.xlu0 %594
        %v596 = vsel %vm577, %v544, 0.0
        %597 = vadd.xlane.f32.xlu0 %v596
        %v598 = vpop.xlane.xlu0 %597
        %v599 = vsel %vm577, %v546, 0.0
        %600 = vadd.xlane.f32.xlu0 %v599
        %v601 = vpop.xlane.xlu0 %600
        %v602 = vsel %vm577, %v552, 0.0
        %603 = vadd.xlane.f32.xlu0 %v602
        %v604 = vpop.xlane.xlu0 %603
        %v605 = vsel %vm577, %v554, 0.0
        %606 = vadd.xlane.f32.xlu0 %v605
        %v607 = vpop.xlane.xlu0 %606
        %v608 = vsel %vm577, %v556, 0.0
        %609 = vadd.xlane.f32.xlu0 %v608
        %v610 = vpop.xlane.xlu0 %609
        %v611 = vsel %vm577, %v558, 0.0
        %612 = vadd.xlane.f32.xlu0 %v611
        %v613 = vpop.xlane.xlu0 %612
        %v614 = vsel %vm577, %v564, 0.0
        %615 = vadd.xlane.f32.xlu0 %v614
        %v616 = vpop.xlane.xlu0 %615
        %v617 = vsel %vm577, %v566, 0.0
        %618 = vadd.xlane.f32.xlu0 %v617
        %v619 = vpop.xlane.xlu0 %618
        %v620 = vsel %vm577, %v568, 0.0
        %621 = vadd.xlane.f32.xlu0 %v620
        %v622 = vpop.xlane.xlu0 %621
        %v623 = vsel %vm577, %v570, 0.0
        %624 = vadd.xlane.f32.xlu0 %v623
        %v625 = vpop.xlane.xlu0 %624
        %v626 = vrcp.pop 32.0
        %v627 = vmul.f32 %v580, %v626
        %v628 = vmul.f32 %v583, %v626
        %v629 = vmul.f32 %v586, %v626
        %v630 = vmul.f32 %v589, %v626
        %v631 = vmul.f32 %v592, %v626
        %v632 = vmul.f32 %v595, %v626
        %v633 = vmul.f32 %v598, %v626
        %v634 = vmul.f32 %v601, %v626
        %v635 = vmul.f32 %v604, %v626
        %v636 = vmul.f32 %v607, %v626
        %v637 = vmul.f32 %v610, %v626
        %v638 = vmul.f32 %v613, %v626
        %v639 = vmul.f32 %v616, %v626
        %v640 = vmul.f32 %v619, %v626
        %v641 = vmul.f32 %v622, %v626
        %v642 = vmul.f32 %v625, %v626
        %v643 = vsub.f32 %v531, %v627
        %v644 = vsub.f32 %v532, %v628
        %v645 = vsub.f32 %v533, %v629
        %v646 = vsub.f32 %v534, %v630
        %v647 = vsub.f32 %v540, %v631
        %v648 = vsub.f32 %v542, %v632
        %v649 = vsub.f32 %v544, %v633
        %v650 = vsub.f32 %v546, %v634
        %v651 = vsub.f32 %v552, %v635
        %v652 = vsub.f32 %v554, %v636
        %v653 = vsub.f32 %v556, %v637
        %v654 = vsub.f32 %v558, %v638
        %v655 = vsub.f32 %v564, %v639
        %v656 = vsub.f32 %v566, %v640
        %v657 = vsub.f32 %v568, %v641
        %v658 = vsub.f32 %v570, %v642
        %v659 = vmul.f32 %v643, %v643
        %v660 = vmul.f32 %v644, %v644
        %v661 = vmul.f32 %v645, %v645
        %v662 = vmul.f32 %v646, %v646
        %v663 = vmul.f32 %v647, %v647
        %v664 = vmul.f32 %v648, %v648
        %v665 = vmul.f32 %v649, %v649
        %v666 = vmul.f32 %v650, %v650
        %v667 = vmul.f32 %v651, %v651
        %v668 = vmul.f32 %v652, %v652
        %v669 = vmul.f32 %v653, %v653
        %v670 = vmul.f32 %v654, %v654
        %v671 = vmul.f32 %v655, %v655
        %v672 = vmul.f32 %v656, %v656
        %v673 = vmul.f32 %v657, %v657
        %v674 = vmul.f32 %v658, %v658
        %v675 = vsel %vm577, %v659, 0.0
        %676 = vadd.xlane.f32.xlu0 %v675
        %v677 = vpop.xlane.xlu0 %676
        %v678 = vsel %vm577, %v660, 0.0
        %679 = vadd.xlane.f32.xlu0 %v678
        %v680 = vpop.xlane.xlu0 %679
        %v681 = vsel %vm577, %v661, 0.0
        %682 = vadd.xlane.f32.xlu0 %v681
        %v683 = vpop.xlane.xlu0 %682
        %v684 = vsel %vm577, %v662, 0.0
        %685 = vadd.xlane.f32.xlu0 %v684
        %v686 = vpop.xlane.xlu0 %685
        %v687 = vsel %vm577, %v663, 0.0
        %688 = vadd.xlane.f32.xlu0 %v687
        %v689 = vpop.xlane.xlu0 %688
        %v690 = vsel %vm577, %v664, 0.0
        %691 = vadd.xlane.f32.xlu0 %v690
        %v692 = vpop.xlane.xlu0 %691
        %v693 = vsel %vm577, %v665, 0.0
        %694 = vadd.xlane.f32.xlu0 %v693
        %v695 = vpop.xlane.xlu0 %694
        %v696 = vsel %vm577, %v666, 0.0
        %697 = vadd.xlane.f32.xlu0 %v696
        %v698 = vpop.xlane.xlu0 %697
        %v699 = vsel %vm577, %v667, 0.0
        %700 = vadd.xlane.f32.xlu0 %v699
        %v701 = vpop.xlane.xlu0 %700
        %v702 = vsel %vm577, %v668, 0.0
        %703 = vadd.xlane.f32.xlu0 %v702
        %v704 = vpop.xlane.xlu0 %703
        %v705 = vsel %vm577, %v669, 0.0
        %706 = vadd.xlane.f32.xlu0 %v705
        %v707 = vpop.xlane.xlu0 %706
        %v708 = vsel %vm577, %v670, 0.0
        %709 = vadd.xlane.f32.xlu0 %v708
        %v710 = vpop.xlane.xlu0 %709
        %v711 = vsel %vm577, %v671, 0.0
        %712 = vadd.xlane.f32.xlu0 %v711
        %v713 = vpop.xlane.xlu0 %712
        %v714 = vsel %vm577, %v672, 0.0
        %715 = vadd.xlane.f32.xlu0 %v714
        %v716 = vpop.xlane.xlu0 %715
        %v717 = vsel %vm577, %v673, 0.0
        %718 = vadd.xlane.f32.xlu0 %v717
        %v719 = vpop.xlane.xlu0 %718
        %v720 = vsel %vm577, %v674, 0.0
        %721 = vadd.xlane.f32.xlu0 %v720
        %v722 = vpop.xlane.xlu0 %721
        %v723 = vmul.f32 %v677, %v626
        %v724 = vmul.f32 %v680, %v626
        %v725 = vmul.f32 %v683, %v626
        %v726 = vmul.f32 %v686, %v626
        %v727 = vmul.f32 %v689, %v626
        %v728 = vmul.f32 %v692, %v626
        %v729 = vmul.f32 %v695, %v626
        %v730 = vmul.f32 %v698, %v626
        %v731 = vmul.f32 %v701, %v626
        %v732 = vmul.f32 %v704, %v626
        %v733 = vmul.f32 %v707, %v626
        %v734 = vmul.f32 %v710, %v626
        %v735 = vmul.f32 %v713, %v626
        %v736 = vmul.f32 %v716, %v626
        %v737 = vmul.f32 %v719, %v626
        %v738 = vmul.f32 %v722, %v626
        %v739 = vadd.f32 %v723, 1e-05
        %v740 = vadd.f32 %v724, 1e-05
        %v741 = vadd.f32 %v725, 1e-05
        %v742 = vadd.f32 %v726, 1e-05
        %v743 = vadd.f32 %v727, 1e-05
        %v744 = vadd.f32 %v728, 1e-05
        %v745 = vadd.f32 %v729, 1e-05
        %v746 = vadd.f32 %v730, 1e-05
        %v747 = vadd.f32 %v731, 1e-05
        %v748 = vadd.f32 %v732, 1e-05
        %v749 = vadd.f32 %v733, 1e-05
        %v750 = vadd.f32 %v734, 1e-05
        %v751 = vadd.f32 %v735, 1e-05
        %v752 = vadd.f32 %v736, 1e-05
        %v753 = vadd.f32 %v737, 1e-05
        %v754 = vadd.f32 %v738, 1e-05
        %v755 = vrsqrt.pop %v739
        %v756 = vrsqrt.pop %v740
        %v757 = vrsqrt.pop %v741
        %v758 = vrsqrt.pop %v742
        %v759 = vrsqrt.pop %v743
        %v760 = vrsqrt.pop %v744
        %v761 = vrsqrt.pop %v745
        %v762 = vrsqrt.pop %v746
        %v763 = vrsqrt.pop %v747
        %v764 = vrsqrt.pop %v748
        %v765 = vrsqrt.pop %v749
        %v766 = vrsqrt.pop %v750
        %v767 = vrsqrt.pop %v751
        %v768 = vrsqrt.pop %v752
        %v769 = vrsqrt.pop %v753
        %v770 = vrsqrt.pop %v754
        %v771 = vmul.f32 %v643, %v755
        %v772 = vmul.f32 %v644, %v756
        %v773 = vmul.f32 %v645, %v757
        %v774 = vmul.f32 %v646, %v758
        %v775 = vmul.f32 %v647, %v759
        %v776 = vmul.f32 %v648, %v760
        %v777 = vmul.f32 %v649, %v761
        %v778 = vmul.f32 %v650, %v762
        %v779 = vmul.f32 %v651, %v763
        %v780 = vmul.f32 %v652, %v764
        %v781 = vmul.f32 %v653, %v765
        %v782 = vmul.f32 %v654, %v766
        %v783 = vmul.f32 %v655, %v767
        %v784 = vmul.f32 %v656, %v768
        %v785 = vmul.f32 %v657, %v769
        %v786 = vmul.f32 %v658, %v770
        %v788 = vlaneseq
        %v789 = vshrl.u32 %v788, 7
        %v790 = vsub.s32 0, %v789
        %v791 = vrot.slane %v575, %v790
        %v793 = vmul.f32 %v771, %v791
        %v794 = vmul.f32 %v772, %v791
        %v795 = vmul.f32 %v773, %v791
        %v796 = vmul.f32 %v774, %v791
        %v797 = vmul.f32 %v775, %v791
        %v798 = vmul.f32 %v776, %v791
        %v799 = vmul.f32 %v777, %v791
        %v800 = vmul.f32 %v778, %v791
        %v801 = vmul.f32 %v779, %v791
        %v802 = vmul.f32 %v780, %v791
        %v803 = vmul.f32 %v781, %v791
        %v804 = vmul.f32 %v782, %v791
        %v805 = vmul.f32 %v783, %v791
        %v806 = vmul.f32 %v784, %v791
        %v807 = vmul.f32 %v785, %v791
        %v808 = vmul.f32 %v786, %v791
        %v810 = vlaneseq
        %v811 = vshrl.u32 %v810, 7
        %v812 = vsub.s32 0, %v811
        %v813 = vrot.slane %v576, %v812
        %v815 = vadd.f32 %v793, %v813
        %v816 = vadd.f32 %v794, %v813
        %v817 = vadd.f32 %v795, %v813
        %v818 = vadd.f32 %v796, %v813
        %v819 = vadd.f32 %v797, %v813
        %v820 = vadd.f32 %v798, %v813
        %v821 = vadd.f32 %v799, %v813
        %v822 = vadd.f32 %v800, %v813
        %v823 = vadd.f32 %v801, %v813
        %v824 = vadd.f32 %v802, %v813
        %v825 = vadd.f32 %v803, %v813
        %v826 = vadd.f32 %v804, %v813
        %v827 = vadd.f32 %v805, %v813
        %v828 = vadd.f32 %v806, %v813
        %v829 = vadd.f32 %v807, %v813
        %v830 = vadd.f32 %v808, %v813
        %v831 = vpack.c.bf16 %v816, %v815
        %v832 = vpack.c.bf16 %v818, %v817
        %v833 = vpack.c.bf16 %v820, %v819
        %v834 = vpack.c.bf16 %v822, %v821
        %v835 = vpack.c.bf16 %v824, %v823
        %v836 = vpack.c.bf16 %v826, %v825
        %v837 = vpack.c.bf16 %v828, %v827
        %v838 = vpack.c.bf16 %v830, %v829
        %v839 = vld [vmem:[%s3] sm:$0xf]
        %v840 = vld [vmem:[%s3 + $0x4] sm:$0xf]
        %v841 = vld [vmem:[%s3 + $0x8] sm:$0xf]
        %v842 = vld [vmem:[%s3 + $0xc] sm:$0xf]
        %v843 = vld [vmem:[%s4] sm:$0x1]
        %v845 = vlaneseq
        %v846 = vshrl.u32 %v845, 7
        %v847 = vsub.s32 0, %v846
        %v848 = vrot.slane %v843, %v847
        %v854 = vunpack.c.l.b16 %v839
        %v855 = vunpack.c.l.b16 %v840
        %v856 = vunpack.c.l.b16 %v841
        %v857 = vunpack.c.l.b16 %v842
        %v858 = vpack.c.b16 %v855, %v854
        %v859 = vpack.c.b16 %v857, %v856
        %v863 = vsel %vm577, %v831, 0
        %v866 = vsel %vm577, %v832, 0
        %v869 = vsel %vm577, %v833, 0
        %v872 = vsel %vm577, %v834, 0
        %v875 = vsel %vm577, %v835, 0
        %v878 = vsel %vm577, %v836, 0
        %v881 = vsel %vm577, %v837, 0
        %v884 = vsel %vm577, %v838, 0
        %886 = vmatprep.subr.bf16.mxu0 0
        %887 = vmatpush1.bf16.msra.mxu0 %v858
        %888 = vmatprep.subr.bf16.mxu0 0
        %889 = vmatpush1.bf16.msra.mxu0 %v859
        %890 = vmatprep.subr.bf16.mxu0 0
        %891 = vmatpush1.bf16.msra.mxu0 0
        %892 = vmatprep.subr.bf16.mxu0 0
        %893 = vmatpush1.bf16.msra.mxu0 0
        %894 = vmatprep.subr.bf16.mxu0 0
        %895 = vmatpush1.bf16.msra.mxu0 0
        %896 = vmatprep.subr.bf16.mxu0 0
        %897 = vmatpush1.bf16.msra.mxu0 0
        %898 = vmatprep.subr.bf16.mxu0 0
        %899 = vmatpush1.bf16.msra.mxu0 0
        %900 = vmatprep.subr.bf16.mxu0 0
        %901 = vmatpush1.bf16.msra.mxu0 0
        %902 = vmatprep.subr.bf16.mxu0 0
        %903 = vmatpush1.bf16.msra.mxu0 0
        %904 = vmatprep.subr.bf16.mxu0 0
        %905 = vmatpush1.bf16.msra.mxu0 0
        %906 = vmatprep.subr.bf16.mxu0 0
        %907 = vmatpush1.bf16.msra.mxu0 0
        %908 = vmatprep.subr.bf16.mxu0 0
        %909 = vmatpush1.bf16.msra.mxu0 0
        %910 = vmatprep.subr.bf16.mxu0 0
        %911 = vmatpush1.bf16.msra.mxu0 0
        %912 = vmatprep.subr.bf16.mxu0 0
        %913 = vmatpush1.bf16.msra.mxu0 0
        %914 = vmatprep.subr.bf16.mxu0 0
        %915 = vmatpush1.bf16.msra.mxu0 0
        %916 = vmatprep.subr.bf16.mxu0 0
        %917 = vmatpush1.bf16.msra.mxu0 0
        %918 = vmatprep.mubr.bf16.mxu0 0
        %919 = vmatmul.mubr.bf16.gmra.mrb[0].mxu0 %v863
        %v920 = vpop.f32.mrb[0].mxu0
        %v921 = vadd.f32 %v848, %v920
        %v922 = vpop.f32.mrb[0].mxu0
        %v923 = vpop.f32.mrb[0].mxu0
        %v924 = vadd.f32 %v848, %v923
        %v925 = vpop.f32.mrb[0].mxu0
        %926 = vmatprep.mubr.bf16.mxu0 0
        %927 = vmatmul.mubr.bf16.gmra.mrb[0].mxu0 %v866
        %v928 = vpop.f32.mrb[0].mxu0
        %v929 = vadd.f32 %v848, %v928
        %v930 = vpop.f32.mrb[0].mxu0
        %v931 = vpop.f32.mrb[0].mxu0
        %v932 = vadd.f32 %v848, %v931
        %v933 = vpop.f32.mrb[0].mxu0
        %934 = vmatprep.mubr.bf16.mxu0 0
        %935 = vmatmul.mubr.bf16.gmra.mrb[0].mxu0 %v869
        %v936 = vpop.f32.mrb[0].mxu0
        %v937 = vadd.f32 %v848, %v936
        %v938 = vpop.f32.mrb[0].mxu0
        %v939 = vpop.f32.mrb[0].mxu0
        %v940 = vadd.f32 %v848, %v939
        %v941 = vpop.f32.mrb[0].mxu0
        %942 = vmatprep.mubr.bf16.mxu0 0
        %943 = vmatmul.mubr.bf16.gmra.mrb[0].mxu0 %v872
        %v944 = vpop.f32.mrb[0].mxu0
        %v945 = vadd.f32 %v848, %v944
        %v946 = vpop.f32.mrb[0].mxu0
        %v947 = vpop.f32.mrb[0].mxu0
        %v948 = vadd.f32 %v848, %v947
        %v949 = vpop.f32.mrb[0].mxu0
        %950 = vmatprep.mubr.bf16.mxu0 0
        %951 = vmatmul.mubr.bf16.gmra.mrb[0].mxu0 %v875
        %v952 = vpop.f32.mrb[0].mxu0
        %v953 = vadd.f32 %v848, %v952
        %v954 = vpop.f32.mrb[0].mxu0
        %v955 = vpop.f32.mrb[0].mxu0
        %v956 = vadd.f32 %v848, %v955
        %v957 = vpop.f32.mrb[0].mxu0
        %958 = vmatprep.mubr.bf16.mxu0 0
        %959 = vmatmul.mubr.bf16.gmra.mrb[0].mxu0 %v878
        %v960 = vpop.f32.mrb[0].mxu0
        %v961 = vadd.f32 %v848, %v960
        %v962 = vpop.f32.mrb[0].mxu0
        %v963 = vpop.f32.mrb[0].mxu0
        %v964 = vadd.f32 %v848, %v963
        %v965 = vpop.f32.mrb[0].mxu0
        %966 = vmatprep.mubr.bf16.mxu0 0
        %967 = vmatmul.mubr.bf16.gmra.mrb[0].mxu0 %v881
        %v968 = vpop.f32.mrb[0].mxu0
        %v969 = vadd.f32 %v848, %v968
        %v970 = vpop.f32.mrb[0].mxu0
        %v971 = vpop.f32.mrb[0].mxu0
        %v972 = vadd.f32 %v848, %v971
        %v973 = vpop.f32.mrb[0].mxu0
        %974 = vmatprep.mubr.bf16.mxu0 0
        %975 = vmatmul.mubr.bf16.gmra.mrb[0].mxu0 %v884
        %v976 = vpop.f32.mrb[0].mxu0
        %v977 = vadd.f32 %v848, %v976
        %v978 = vpop.f32.mrb[0].mxu0
        %v979 = vpop.f32.mrb[0].mxu0
        %v980 = vadd.f32 %v848, %v979
        %v981 = vpop.f32.mrb[0].mxu0
        %982 = vdwg.mxu0
        %v983 = vpack.c.bf16 %v924, %v921
        %v984 = vpack.c.bf16 %v932, %v929
        %v985 = vpack.c.bf16 %v940, %v937
        %v986 = vpack.c.bf16 %v948, %v945
        %v987 = vpack.c.bf16 %v956, %v953
        %v988 = vpack.c.bf16 %v964, %v961
        %v989 = vpack.c.bf16 %v972, %v969
        %v990 = vpack.c.bf16 %v980, %v977
        %v991 = vld [vmem:[%s5] sm:$0x1]
        %v992 = vld [vmem:[#allocation5] sm:$0xf]
        %v993 = vld [vmem:[#allocation5 + $0x4] sm:$0xf]
        %v994 = vld [vmem:[#allocation5 + $0x8] sm:$0xf]
        %v995 = vld [vmem:[#allocation5 + $0xc] sm:$0xf]
        %v996 = vld [vmem:[#allocation5 + $0x10] sm:$0xf]
        %v997 = vld [vmem:[#allocation5 + $0x14] sm:$0xf]
        %v998 = vld [vmem:[#allocation5 + $0x18] sm:$0xf]
        %v999 = vld [vmem:[#allocation5 + $0x1c] sm:$0xf]
        %v1000 = vunpack.c.l.bf16 %v992
        %v1001 = vunpack.c.l.bf16 %v993
        %v1002 = vunpack.c.l.bf16 %v994
        %v1003 = vunpack.c.l.bf16 %v995
        %v1004 = vunpack.c.l.bf16 %v996
        %v1005 = vunpack.c.l.bf16 %v997
        %v1006 = vunpack.c.l.bf16 %v998
        %v1007 = vunpack.c.l.bf16 %v999
        %v1009 = vlaneseq
        %v1010 = vshrl.u32 %v1009, 7
        %v1011 = vsub.s32 0, %v1010
        %v1012 = vrot.slane %v991, %v1011
        %v1014 = vmul.f32 %v921, %v1012
        %v1015 = vmul.f32 %v924, %v1012
        %v1016 = vmul.f32 %v929, %v1012
        %v1017 = vmul.f32 %v932, %v1012
        %v1018 = vmul.f32 %v937, %v1012
        %v1019 = vmul.f32 %v940, %v1012
        %v1020 = vmul.f32 %v945, %v1012
        %v1021 = vmul.f32 %v948, %v1012
        %v1022 = vmul.f32 %v953, %v1012
        %v1023 = vmul.f32 %v956, %v1012
        %v1024 = vmul.f32 %v961, %v1012
        %v1025 = vmul.f32 %v964, %v1012
        %v1026 = vmul.f32 %v969, %v1012
        %v1027 = vmul.f32 %v972, %v1012
        %v1028 = vmul.f32 %v977, %v1012
        %v1029 = vmul.f32 %v980, %v1012
        %v1030 = vpack.c.bf16 %v1015, %v1014
        %v1031 = vpack.c.bf16 %v1017, %v1016
        %v1032 = vpack.c.bf16 %v1019, %v1018
        %v1033 = vpack.c.bf16 %v1021, %v1020
        %v1034 = vpack.c.bf16 %v1023, %v1022
        %v1035 = vpack.c.bf16 %v1025, %v1024
        %v1036 = vpack.c.bf16 %v1027, %v1026
        %v1037 = vpack.c.bf16 %v1029, %v1028
        %1038 = vrot.lane.b32.xlu0 %v1012, 64
        %v1039 = vpop.permute.xlu0 %1038
        %v1041 = vmul.f32 %v921, %v1039
        %v1042 = vmul.f32 %v924, %v1039
        %v1043 = vmul.f32 %v929, %v1039
        %v1044 = vmul.f32 %v932, %v1039
        %v1045 = vmul.f32 %v937, %v1039
        %v1046 = vmul.f32 %v940, %v1039
        %v1047 = vmul.f32 %v945, %v1039
        %v1048 = vmul.f32 %v948, %v1039
        %v1049 = vmul.f32 %v953, %v1039
        %v1050 = vmul.f32 %v956, %v1039
        %v1051 = vmul.f32 %v961, %v1039
        %v1052 = vmul.f32 %v964, %v1039
        %v1053 = vmul.f32 %v969, %v1039
        %v1054 = vmul.f32 %v972, %v1039
        %v1055 = vmul.f32 %v977, %v1039
        %v1056 = vmul.f32 %v980, %v1039
        %v1057 = vpack.c.bf16 %v1042, %v1041
        %v1058 = vpack.c.bf16 %v1044, %v1043
        %v1059 = vpack.c.bf16 %v1046, %v1045
        %v1060 = vpack.c.bf16 %v1048, %v1047
        %v1061 = vpack.c.bf16 %v1050, %v1049
        %v1062 = vpack.c.bf16 %v1052, %v1051
        %v1063 = vpack.c.bf16 %v1054, %v1053
        %v1064 = vpack.c.bf16 %v1056, %v1055
        %1069 = vrot.lane.b32.xlu0 %v983, 96
        %v1070 = vpop.permute.xlu0 %1069
        %1071 = vrot.lane.b32.xlu0 %v984, 96
        %v1072 = vpop.permute.xlu0 %1071
        %1073 = vrot.lane.b32.xlu0 %v985, 96
        %v1074 = vpop.permute.xlu0 %1073
        %1075 = vrot.lane.b32.xlu0 %v986, 96
        %v1076 = vpop.permute.xlu0 %1075
        %v1078 = vsel %vm577, %v1030, 0
        %v1081 = vsel %vm577, %v1031, 0
        %v1084 = vsel %vm577, %v1032, 0
        %v1087 = vsel %vm577, %v1033, 0
        %v1090 = vsel %vm577, %v1070, 0
        %v1093 = vsel %vm577, %v1072, 0
        %v1096 = vsel %vm577, %v1074, 0
        %v1099 = vsel %vm577, %v1076, 0
        %1101 = vmatprep.subr.bf16.mxu0 0
        %1102 = vmatpush1.bf16.xpose.msra.mxu0 %v1090
        %1103 = vmatprep.subr.bf16.mxu0 0
        %1104 = vmatpush1.bf16.xpose.msra.mxu0 %v1093
        %1105 = vmatprep.subr.bf16.mxu0 0
        %1106 = vmatpush1.bf16.xpose.msra.mxu0 %v1096
        %1107 = vmatprep.subr.bf16.mxu0 0
        %1108 = vmatpush1.bf16.xpose.msra.mxu0 %v1099
        %1109 = vmatprep.subr.bf16.mxu0 0
        %1110 = vmatpush1.bf16.xpose.msra.mxu0 0
        %1111 = vmatprep.subr.bf16.mxu0 0
        %1112 = vmatpush1.bf16.xpose.msra.mxu0 0
        %1113 = vmatprep.subr.bf16.mxu0 0
        %1114 = vmatpush1.bf16.xpose.msra.mxu0 0
        %1115 = vmatprep.subr.bf16.mxu0 0
        %1116 = vmatpush1.bf16.xpose.msra.mxu0 0
        %1117 = vmatprep.subr.bf16.mxu0 0
        %1118 = vmatpush1.bf16.xpose.msra.mxu0 0
        %1119 = vmatprep.subr.bf16.mxu0 0
        %1120 = vmatpush1.bf16.xpose.msra.mxu0 0
        %1121 = vmatprep.subr.bf16.mxu0 0
        %1122 = vmatpush1.bf16.xpose.msra.mxu0 0
        %1123 = vmatprep.subr.bf16.mxu0 0
        %1124 = vmatpush1.bf16.xpose.msra.mxu0 0
        %1125 = vmatprep.subr.bf16.mxu0 0
        %1126 = vmatpush1.bf16.xpose.msra.mxu0 0
        %1127 = vmatprep.subr.bf16.mxu0 0
        %1128 = vmatpush1.bf16.xpose.msra.mxu0 0
        %1129 = vmatprep.subr.bf16.mxu0 0
        %1130 = vmatpush1.bf16.xpose.msra.mxu0 0
        %1131 = vmatprep.subr.bf16.mxu0 0
        %1132 = vmatpush1.bf16.xpose.msra.mxu0 0
        %1133 = vmatprep.mubr.bf16.mxu0 0
        %1134 = vmatmul.mubr.bf16.gmra.mrb[0].mxu0 %v1078
        %v1135 = vpop.f32.mrb[0].mxu0
        %v1136 = vadd.f32 %v1000, %v1135
        %v1137 = vpop.f32.mrb[0].mxu0
        %v1138 = vpop.f32.mrb[0].mxu0
        %v1139 = vadd.f32 %v1001, %v1138
        %v1140 = vpop.f32.mrb[0].mxu0
        %1141 = vmatprep.mubr.bf16.mxu0 0
        %1142 = vmatmul.mubr.bf16.gmra.mrb[0].mxu0 %v1081
        %v1143 = vpop.f32.mrb[0].mxu0
        %v1144 = vadd.f32 %v1002, %v1143
        %v1145 = vpop.f32.mrb[0].mxu0
        %v1146 = vpop.f32.mrb[0].mxu0
        %v1147 = vadd.f32 %v1003, %v1146
        %v1148 = vpop.f32.mrb[0].mxu0
        %1149 = vmatprep.mubr.bf16.mxu0 0
        %1150 = vmatmul.mubr.bf16.gmra.mrb[0].mxu0 %v1084
        %v1151 = vpop.f32.mrb[0].mxu0
        %v1152 = vadd.f32 %v1004, %v1151
        %v1153 = vpop.f32.mrb[0].mxu0
        %v1154 = vpop.f32.mrb[0].mxu0
        %v1155 = vadd.f32 %v1005, %v1154
        %v1156 = vpop.f32.mrb[0].mxu0
        %1157 = vmatprep.mubr.bf16.mxu0 0
        %1158 = vmatmul.mubr.bf16.gmra.mrb[0].mxu0 %v1087
        %v1159 = vpop.f32.mrb[0].mxu0
        %v1160 = vadd.f32 %v1006, %v1159
        %v1161 = vpop.f32.mrb[0].mxu0
        %v1162 = vpop.f32.mrb[0].mxu0
        %v1163 = vadd.f32 %v1007, %v1162
        %v1164 = vpop.f32.mrb[0].mxu0
        %1165 = vdwg.mxu0
        %vm1166 = vcmask 523264
        %v1167 = vsel %vm1166, %v1136, -inf
        %1168 = vmax.xlane.f32.xlu0 %v1167
        %v1169 = vpop.xlane.xlu0 %1168
        %v1170 = vsel %vm1166, %v1139, -inf
        %1171 = vmax.xlane.f32.xlu0 %v1170
        %v1172 = vpop.xlane.xlu0 %1171
        %v1173 = vsel %vm1166, %v1144, -inf
        %1174 = vmax.xlane.f32.xlu0 %v1173
        %v1175 = vpop.xlane.xlu0 %1174
        %v1176 = vsel %vm1166, %v1147, -inf
        %1177 = vmax.xlane.f32.xlu0 %v1176
        %v1178 = vpop.xlane.xlu0 %1177
        %v1179 = vsel %vm1166, %v1152, -inf
        %1180 = vmax.xlane.f32.xlu0 %v1179
        %v1181 = vpop.xlane.xlu0 %1180
        %v1182 = vsel %vm1166, %v1155, -inf
        %1183 = vmax.xlane.f32.xlu0 %v1182
        %v1184 = vpop.xlane.xlu0 %1183
        %v1185 = vsel %vm1166, %v1160, -inf
        %1186 = vmax.xlane.f32.xlu0 %v1185
        %v1187 = vpop.xlane.xlu0 %1186
        %v1188 = vsel %vm1166, %v1163, -inf
        %1189 = vmax.xlane.f32.xlu0 %v1188
        %v1190 = vpop.xlane.xlu0 %1189
        %v1191 = vsub.f32 %v1136, %v1169
        %v1192 = vsub.f32 %v1139, %v1172
        %v1193 = vsub.f32 %v1144, %v1175
        %v1194 = vsub.f32 %v1147, %v1178
        %v1195 = vsub.f32 %v1152, %v1181
        %v1196 = vsub.f32 %v1155, %v1184
        %v1197 = vsub.f32 %v1160, %v1187
        %v1198 = vsub.f32 %v1163, %v1190
        %v1199 = vmul.f32 %v1191, 1.442695
        %v1200 = vpow.pop %v1199
        %v1201 = vmul.f32 %v1192, 1.442695
        %v1202 = vpow.pop %v1201
        %v1203 = vmul.f32 %v1193, 1.442695
        %v1204 = vpow.pop %v1203
        %v1205 = vmul.f32 %v1194, 1.442695
        %v1206 = vpow.pop %v1205
        %v1207 = vmul.f32 %v1195, 1.442695
        %v1208 = vpow.pop %v1207
        %v1209 = vmul.f32 %v1196, 1.442695
        %v1210 = vpow.pop %v1209
        %v1211 = vmul.f32 %v1197, 1.442695
        %v1212 = vpow.pop %v1211
        %v1213 = vmul.f32 %v1198, 1.442695
        %v1214 = vpow.pop %v1213
        %v1215 = vsel %vm1166, %v1200, 0.0
        %1216 = vadd.xlane.f32.xlu0 %v1215
        %v1217 = vpop.xlane.xlu0 %1216
        %v1218 = vsel %vm1166, %v1202, 0.0
        %1219 = vadd.xlane.f32.xlu0 %v1218
        %v1220 = vpop.xlane.xlu0 %1219
        %v1221 = vsel %vm1166, %v1204, 0.0
        %1222 = vadd.xlane.f32.xlu0 %v1221
        %v1223 = vpop.xlane.xlu0 %1222
        %v1224 = vsel %vm1166, %v1206, 0.0
        %1225 = vadd.xlane.f32.xlu0 %v1224
        %v1226 = vpop.xlane.xlu0 %1225
        %v1227 = vsel %vm1166, %v1208, 0.0
        %1228 = vadd.xlane.f32.xlu0 %v1227
        %v1229 = vpop.xlane.xlu0 %1228
        %v1230 = vsel %vm1166, %v1210, 0.0
        %1231 = vadd.xlane.f32.xlu0 %v1230
        %v1232 = vpop.xlane.xlu0 %1231
        %v1233 = vsel %vm1166, %v1212, 0.0
        %1234 = vadd.xlane.f32.xlu0 %v1233
        %v1235 = vpop.xlane.xlu0 %1234
        %v1236 = vsel %vm1166, %v1214, 0.0
        %1237 = vadd.xlane.f32.xlu0 %v1236
        %v1238 = vpop.xlane.xlu0 %1237
        %v1239 = vrcp.pop %v1217
        %v1240 = vrcp.pop %v1220
        %v1241 = vrcp.pop %v1223
        %v1242 = vrcp.pop %v1226
        %v1243 = vrcp.pop %v1229
        %v1244 = vrcp.pop %v1232
        %v1245 = vrcp.pop %v1235
        %v1246 = vrcp.pop %v1238
        %v1247 = vmul.f32 %v1200, %v1239
        %v1248 = vmul.f32 %v1202, %v1240
        %v1249 = vmul.f32 %v1204, %v1241
        %v1250 = vmul.f32 %v1206, %v1242
        %v1251 = vmul.f32 %v1208, %v1243
        %v1252 = vmul.f32 %v1210, %v1244
        %v1253 = vmul.f32 %v1212, %v1245
        %v1254 = vmul.f32 %v1214, %v1246
        %v1255 = vpack.c.bf16 %v1248, %v1247
        %v1256 = vpack.c.bf16 %v1250, %v1249
        %v1257 = vpack.c.bf16 %v1252, %v1251
        %v1258 = vpack.c.bf16 %v1254, %v1253
        %1263 = vrot.lane.b32.xlu0 %v987, 96
        %v1264 = vpop.permute.xlu0 %1263
        %1265 = vrot.lane.b32.xlu0 %v988, 96
        %v1266 = vpop.permute.xlu0 %1265
        %1267 = vrot.lane.b32.xlu0 %v989, 96
        %v1268 = vpop.permute.xlu0 %1267
        %1269 = vrot.lane.b32.xlu0 %v990, 96
        %v1270 = vpop.permute.xlu0 %1269
        %v1272 = vsel %vm577, %v1034, 0
        %v1275 = vsel %vm577, %v1035, 0
        %v1278 = vsel %vm577, %v1036, 0
        %v1281 = vsel %vm577, %v1037, 0
        %v1284 = vsel %vm577, %v1264, 0
        %v1287 = vsel %vm577, %v1266, 0
        %v1290 = vsel %vm577, %v1268, 0
        %v1293 = vsel %vm577, %v1270, 0
        %1295 = vmatprep.subr.bf16.mxu0 0
        %1296 = vmatpush1.bf16.xpose.msra.mxu0 %v1284
        %1297 = vmatprep.subr.bf16.mxu0 0
        %1298 = vmatpush1.bf16.xpose.msra.mxu0 %v1287
        %1299 = vmatprep.subr.bf16.mxu0 0
        %1300 = vmatpush1.bf16.xpose.msra.mxu0 %v1290
        %1301 = vmatprep.subr.bf16.mxu0 0
        %1302 = vmatpush1.bf16.xpose.msra.mxu0 %v1293
        %1303 = vmatprep.subr.bf16.mxu0 0
        %1304 = vmatpush1.bf16.xpose.msra.mxu0 0
        %1305 = vmatprep.subr.bf16.mxu0 0
        %1306 = vmatpush1.bf16.xpose.msra.mxu0 0
        %1307 = vmatprep.subr.bf16.mxu0 0
        %1308 = vmatpush1.bf16.xpose.msra.mxu0 0
        %1309 = vmatprep.subr.bf16.mxu0 0
        %1310 = vmatpush1.bf16.xpose.msra.mxu0 0
        %1311 = vmatprep.subr.bf16.mxu0 0
        %1312 = vmatpush1.bf16.xpose.msra.mxu0 0
        %1313 = vmatprep.subr.bf16.mxu0 0
        %1314 = vmatpush1.bf16.xpose.msra.mxu0 0
        %1315 = vmatprep.subr.bf16.mxu0 0
        %1316 = vmatpush1.bf16.xpose.msra.mxu0 0
        %1317 = vmatprep.subr.bf16.mxu0 0
        %1318 = vmatpush1.bf16.xpose.msra.mxu0 0
        %1319 = vmatprep.subr.bf16.mxu0 0
        %1320 = vmatpush1.bf16.xpose.msra.mxu0 0
        %1321 = vmatprep.subr.bf16.mxu0 0
        %1322 = vmatpush1.bf16.xpose.msra.mxu0 0
        %1323 = vmatprep.subr.bf16.mxu0 0
        %1324 = vmatpush1.bf16.xpose.msra.mxu0 0
        %1325 = vmatprep.subr.bf16.mxu0 0
        %1326 = vmatpush1.bf16.xpose.msra.mxu0 0
        %1327 = vmatprep.mubr.bf16.mxu0 0
        %1328 = vmatmul.mubr.bf16.gmra.mrb[0].mxu0 %v1272
        %v1329 = vpop.f32.mrb[0].mxu0
        %v1330 = vadd.f32 %v1000, %v1329
        %v1331 = vpop.f32.mrb[0].mxu0
        %v1332 = vpop.f32.mrb[0].mxu0
        %v1333 = vadd.f32 %v1001, %v1332
        %v1334 = vpop.f32.mrb[0].mxu0
        %1335 = vmatprep.mubr.bf16.mxu0 0
        %1336 = vmatmul.mubr.bf16.gmra.mrb[0].mxu0 %v1275
        %v1337 = vpop.f32.mrb[0].mxu0
        %v1338 = vadd.f32 %v1002, %v1337
        %v1339 = vpop.f32.mrb[0].mxu0
        %v1340 = vpop.f32.mrb[0].mxu0
        %v1341 = vadd.f32 %v1003, %v1340
        %v1342 = vpop.f32.mrb[0].mxu0
        %1343 = vmatprep.mubr.bf16.mxu0 0
        %1344 = vmatmul.mubr.bf16.gmra.mrb[0].mxu0 %v1278
        %v1345 = vpop.f32.mrb[0].mxu0
        %v1346 = vadd.f32 %v1004, %v1345
        %v1347 = vpop.f32.mrb[0].mxu0
        %v1348 = vpop.f32.mrb[0].mxu0
        %v1349 = vadd.f32 %v1005, %v1348
        %v1350 = vpop.f32.mrb[0].mxu0
        %1351 = vmatprep.mubr.bf16.mxu0 0
        %1352 = vmatmul.mubr.bf16.gmra.mrb[0].mxu0 %v1281
        %v1353 = vpop.f32.mrb[0].mxu0
        %v1354 = vadd.f32 %v1006, %v1353
        %v1355 = vpop.f32.mrb[0].mxu0
        %v1356 = vpop.f32.mrb[0].mxu0
        %v1357 = vadd.f32 %v1007, %v1356
        %v1358 = vpop.f32.mrb[0].mxu0
        %1359 = vdwg.mxu0
        %v1360 = vsel %vm1166, %v1330, -inf
        %1361 = vmax.xlane.f32.xlu0 %v1360
        %v1362 = vpop.xlane.xlu0 %1361
        %v1363 = vsel %vm1166, %v1333, -inf
        %1364 = vmax.xlane.f32.xlu0 %v1363
        %v1365 = vpop.xlane.xlu0 %1364
        %v1366 = vsel %vm1166, %v1338, -inf
        %1367 = vmax.xlane.f32.xlu0 %v1366
        %v1368 = vpop.xlane.xlu0 %1367
        %v1369 = vsel %vm1166, %v1341, -inf
        %1370 = vmax.xlane.f32.xlu0 %v1369
        %v1371 = vpop.xlane.xlu0 %1370
        %v1372 = vsel %vm1166, %v1346, -inf
        %1373 = vmax.xlane.f32.xlu0 %v1372
        %v1374 = vpop.xlane.xlu0 %1373
        %v1375 = vsel %vm1166, %v1349, -inf
        %1376 = vmax.xlane.f32.xlu0 %v1375
        %v1377 = vpop.xlane.xlu0 %1376
        %v1378 = vsel %vm1166, %v1354, -inf
        %1379 = vmax.xlane.f32.xlu0 %v1378
        %v1380 = vpop.xlane.xlu0 %1379
        %v1381 = vsel %vm1166, %v1357, -inf
        %1382 = vmax.xlane.f32.xlu0 %v1381
        %v1383 = vpop.xlane.xlu0 %1382
        %v1384 = vsub.f32 %v1330, %v1362
        %v1385 = vsub.f32 %v1333, %v1365
        %v1386 = vsub.f32 %v1338, %v1368
        %v1387 = vsub.f32 %v1341, %v1371
        %v1388 = vsub.f32 %v1346, %v1374
        %v1389 = vsub.f32 %v1349, %v1377
        %v1390 = vsub.f32 %v1354, %v1380
        %v1391 = vsub.f32 %v1357, %v1383
        %v1392 = vmul.f32 %v1384, 1.442695
        %v1393 = vpow.pop %v1392
        %v1394 = vmul.f32 %v1385, 1.442695
        %v1395 = vpow.pop %v1394
        %v1396 = vmul.f32 %v1386, 1.442695
        %v1397 = vpow.pop %v1396
        %v1398 = vmul.f32 %v1387, 1.442695
        %v1399 = vpow.pop %v1398
        %v1400 = vmul.f32 %v1388, 1.442695
        %v1401 = vpow.pop %v1400
        %v1402 = vmul.f32 %v1389, 1.442695
        %v1403 = vpow.pop %v1402
        %v1404 = vmul.f32 %v1390, 1.442695
        %v1405 = vpow.pop %v1404
        %v1406 = vmul.f32 %v1391, 1.442695
        %v1407 = vpow.pop %v1406
        %v1408 = vsel %vm1166, %v1393, 0.0
        %1409 = vadd.xlane.f32.xlu0 %v1408
        %v1410 = vpop.xlane.xlu0 %1409
        %v1411 = vsel %vm1166, %v1395, 0.0
        %1412 = vadd.xlane.f32.xlu0 %v1411
        %v1413 = vpop.xlane.xlu0 %1412
        %v1414 = vsel %vm1166, %v1397, 0.0
        %1415 = vadd.xlane.f32.xlu0 %v1414
        %v1416 = vpop.xlane.xlu0 %1415
        %v1417 = vsel %vm1166, %v1399, 0.0
        %1418 = vadd.xlane.f32.xlu0 %v1417
        %v1419 = vpop.xlane.xlu0 %1418
        %v1420 = vsel %vm1166, %v1401, 0.0
        %1421 = vadd.xlane.f32.xlu0 %v1420
        %v1422 = vpop.xlane.xlu0 %1421
        %v1423 = vsel %vm1166, %v1403, 0.0
        %1424 = vadd.xlane.f32.xlu0 %v1423
        %v1425 = vpop.xlane.xlu0 %1424
        %v1426 = vsel %vm1166, %v1405, 0.0
        %1427 = vadd.xlane.f32.xlu0 %v1426
        %v1428 = vpop.xlane.xlu0 %1427
        %v1429 = vsel %vm1166, %v1407, 0.0
        %1430 = vadd.xlane.f32.xlu0 %v1429
        %v1431 = vpop.xlane.xlu0 %1430
        %v1432 = vrcp.pop %v1410
        %v1433 = vrcp.pop %v1413
        %v1434 = vrcp.pop %v1416
        %v1435 = vrcp.pop %v1419
        %v1436 = vrcp.pop %v1422
        %v1437 = vrcp.pop %v1425
        %v1438 = vrcp.pop %v1428
        %v1439 = vrcp.pop %v1431
        %v1440 = vmul.f32 %v1393, %v1432
        %v1441 = vmul.f32 %v1395, %v1433
        %v1442 = vmul.f32 %v1397, %v1434
        %v1443 = vmul.f32 %v1399, %v1435
        %v1444 = vmul.f32 %v1401, %v1436
        %v1445 = vmul.f32 %v1403, %v1437
        %v1446 = vmul.f32 %v1405, %v1438
        %v1447 = vmul.f32 %v1407, %v1439
        %v1448 = vpack.c.bf16 %v1441, %v1440
        %v1449 = vpack.c.bf16 %v1443, %v1442
        %v1450 = vpack.c.bf16 %v1445, %v1444
        %v1451 = vpack.c.bf16 %v1447, %v1446
        %s1452 = scalar_lea.vmem %s5, 1
        %v1453 = vld [vmem:[%s1452] sm:$0x1]
        %s1454 = scalar_lea.vmem [#allocation5], 32
        %v1455 = vld [vmem:[%s1454] sm:$0xf]
        %v1456 = vld [vmem:[%s1454 + $0x4] sm:$0xf]
        %v1457 = vld [vmem:[%s1454 + $0x8] sm:$0xf]
        %v1458 = vld [vmem:[%s1454 + $0xc] sm:$0xf]
        %v1459 = vld [vmem:[%s1454 + $0x10] sm:$0xf]
        %v1460 = vld [vmem:[%s1454 + $0x14] sm:$0xf]
        %v1461 = vld [vmem:[%s1454 + $0x18] sm:$0xf]
        %v1462 = vld [vmem:[%s1454 + $0x1c] sm:$0xf]
        %v1463 = vunpack.c.l.bf16 %v1455
        %v1464 = vunpack.c.l.bf16 %v1456
        %v1465 = vunpack.c.l.bf16 %v1457
        %v1466 = vunpack.c.l.bf16 %v1458
        %v1467 = vunpack.c.l.bf16 %v1459
        %v1468 = vunpack.c.l.bf16 %v1460
        %v1469 = vunpack.c.l.bf16 %v1461
        %v1470 = vunpack.c.l.bf16 %v1462
        %v1472 = vlaneseq
        %v1473 = vshrl.u32 %v1472, 7
        %v1474 = vsub.s32 0, %v1473
        %v1475 = vrot.slane %v1453, %v1474
        %v1477 = vmul.f32 %v921, %v1475
        %v1478 = vmul.f32 %v924, %v1475
        %v1479 = vmul.f32 %v929, %v1475
        %v1480 = vmul.f32 %v932, %v1475
        %v1481 = vmul.f32 %v937, %v1475
        %v1482 = vmul.f32 %v940, %v1475
        %v1483 = vmul.f32 %v945, %v1475
        %v1484 = vmul.f32 %v948, %v1475
        %v1485 = vmul.f32 %v953, %v1475
        %v1486 = vmul.f32 %v956, %v1475
        %v1487 = vmul.f32 %v961, %v1475
        %v1488 = vmul.f32 %v964, %v1475
        %v1489 = vmul.f32 %v969, %v1475
        %v1490 = vmul.f32 %v972, %v1475
        %v1491 = vmul.f32 %v977, %v1475
        %v1492 = vmul.f32 %v980, %v1475
        %v1493 = vpack.c.bf16 %v1478, %v1477
        %v1494 = vpack.c.bf16 %v1480, %v1479
        %v1495 = vpack.c.bf16 %v1482, %v1481
        %v1496 = vpack.c.bf16 %v1484, %v1483
        %v1497 = vpack.c.bf16 %v1486, %v1485
        %v1498 = vpack.c.bf16 %v1488, %v1487
        %v1499 = vpack.c.bf16 %v1490, %v1489
        %v1500 = vpack.c.bf16 %v1492, %v1491
        %1501 = vrot.lane.b32.xlu0 %v1475, 64
        %v1502 = vpop.permute.xlu0 %1501
        %v1504 = vmul.f32 %v921, %v1502
        %v1505 = vmul.f32 %v924, %v1502
        %v1506 = vmul.f32 %v929, %v1502
        %v1507 = vmul.f32 %v932, %v1502
        %v1508 = vmul.f32 %v937, %v1502
        %v1509 = vmul.f32 %v940, %v1502
        %v1510 = vmul.f32 %v945, %v1502
        %v1511 = vmul.f32 %v948, %v1502
        %v1512 = vmul.f32 %v953, %v1502
        %v1513 = vmul.f32 %v956, %v1502
        %v1514 = vmul.f32 %v961, %v1502
        %v1515 = vmul.f32 %v964, %v1502
        %v1516 = vmul.f32 %v969, %v1502
        %v1517 = vmul.f32 %v972, %v1502
        %v1518 = vmul.f32 %v977, %v1502
        %v1519 = vmul.f32 %v980, %v1502
        %v1520 = vpack.c.bf16 %v1505, %v1504
        %v1521 = vpack.c.bf16 %v1507, %v1506
        %v1522 = vpack.c.bf16 %v1509, %v1508
        %v1523 = vpack.c.bf16 %v1511, %v1510
        %v1524 = vpack.c.bf16 %v1513, %v1512
        %v1525 = vpack.c.bf16 %v1515, %v1514
        %v1526 = vpack.c.bf16 %v1517, %v1516
        %v1527 = vpack.c.bf16 %v1519, %v1518
        %v1529 = vsel %vm577, %v1493, 0
        %v1532 = vsel %vm577, %v1494, 0
        %v1535 = vsel %vm577, %v1495, 0
        %v1538 = vsel %vm577, %v1496, 0
        %1540 = vmatprep.subr.bf16.mxu0 0
        %1541 = vmatpush1.bf16.xpose.msra.mxu0 %v1090
        %1542 = vmatprep.subr.bf16.mxu0 0
        %1543 = vmatpush1.bf16.xpose.msra.mxu0 %v1093
        %1544 = vmatprep.subr.bf16.mxu0 0
        %1545 = vmatpush1.bf16.xpose.msra.mxu0 %v1096
        %1546 = vmatprep.subr.bf16.mxu0 0
        %1547 = vmatpush1.bf16.xpose.msra.mxu0 %v1099
        %1548 = vmatprep.subr.bf16.mxu0 0
        %1549 = vmatpush1.bf16.xpose.msra.mxu0 0
        %1550 = vmatprep.subr.bf16.mxu0 0
        %1551 = vmatpush1.bf16.xpose.msra.mxu0 0
        %1552 = vmatprep.subr.bf16.mxu0 0
        %1553 = vmatpush1.bf16.xpose.msra.mxu0 0
        %1554 = vmatprep.subr.bf16.mxu0 0
        %1555 = vmatpush1.bf16.xpose.msra.mxu0 0
        %1556 = vmatprep.subr.bf16.mxu0 0
        %1557 = vmatpush1.bf16.xpose.msra.mxu0 0
        %1558 = vmatprep.subr.bf16.mxu0 0
        %1559 = vmatpush1.bf16.xpose.msra.mxu0 0
        %1560 = vmatprep.subr.bf16.mxu0 0
        %1561 = vmatpush1.bf16.xpose.msra.mxu0 0
        %1562 = vmatprep.subr.bf16.mxu0 0
        %1563 = vmatpush1.bf16.xpose.msra.mxu0 0
        %1564 = vmatprep.subr.bf16.mxu0 0
        %1565 = vmatpush1.bf16.xpose.msra.mxu0 0
        %1566 = vmatprep.subr.bf16.mxu0 0
        %1567 = vmatpush1.bf16.xpose.msra.mxu0 0
        %1568 = vmatprep.subr.bf16.mxu0 0
        %1569 = vmatpush1.bf16.xpose.msra.mxu0 0
        %1570 = vmatprep.subr.bf16.mxu0 0
        %1571 = vmatpush1.bf16.xpose.msra.mxu0 0
        %1572 = vmatprep.mubr.bf16.mxu0 0
        %1573 = vmatmul.mubr.bf16.gmra.mrb[0].mxu0 %v1529
        %v1574 = vpop.f32.mrb[0].mxu0
        %v1575 = vadd.f32 %v1463, %v1574
        %v1576 = vpop.f32.mrb[0].mxu0
        %v1577 = vpop.f32.mrb[0].mxu0
        %v1578 = vadd.f32 %v1464, %v1577
        %v1579 = vpop.f32.mrb[0].mxu0
        %1580 = vmatprep.mubr.bf16.mxu0 0
        %1581 = vmatmul.mubr.bf16.gmra.mrb[0].mxu0 %v1532
        %v1582 = vpop.f32.mrb[0].mxu0
        %v1583 = vadd.f32 %v1465, %v1582
        %v1584 = vpop.f32.mrb[0].mxu0
        %v1585 = vpop.f32.mrb[0].mxu0
        %v1586 = vadd.f32 %v1466, %v1585
        %v1587 = vpop.f32.mrb[0].mxu0
        %1588 = vmatprep.mubr.bf16.mxu0 0
        %1589 = vmatmul.mubr.bf16.gmra.mrb[0].mxu0 %v1535
        %v1590 = vpop.f32.mrb[0].mxu0
        %v1591 = vadd.f32 %v1467, %v1590
        %v1592 = vpop.f32.mrb[0].mxu0
        %v1593 = vpop.f32.mrb[0].mxu0
        %v1594 = vadd.f32 %v1468, %v1593
        %v1595 = vpop.f32.mrb[0].mxu0
        %1596 = vmatprep.mubr.bf16.mxu0 0
        %1597 = vmatmul.mubr.bf16.gmra.mrb[0].mxu0 %v1538
        %v1598 = vpop.f32.mrb[0].mxu0
        %v1599 = vadd.f32 %v1469, %v1598
        %v1600 = vpop.f32.mrb[0].mxu0
        %v1601 = vpop.f32.mrb[0].mxu0
        %v1602 = vadd.f32 %v1470, %v1601
        %v1603 = vpop.f32.mrb[0].mxu0
        %1604 = vdwg.mxu0
        %v1605 = vsel %vm1166, %v1575, -inf
        %1606 = vmax.xlane.f32.xlu0 %v1605
        %v1607 = vpop.xlane.xlu0 %1606
        %v1608 = vsel %vm1166, %v1578, -inf
        %1609 = vmax.xlane.f32.xlu0 %v1608
        %v1610 = vpop.xlane.xlu0 %1609
        %v1611 = vsel %vm1166, %v1583, -inf
        %1612 = vmax.xlane.f32.xlu0 %v1611
        %v1613 = vpop.xlane.xlu0 %1612
        %v1614 = vsel %vm1166, %v1586, -inf
        %1615 = vmax.xlane.f32.xlu0 %v1614
        %v1616 = vpop.xlane.xlu0 %1615
        %v1617 = vsel %vm1166, %v1591, -inf
        %1618 = vmax.xlane.f32.xlu0 %v1617
        %v1619 = vpop.xlane.xlu0 %1618
        %v1620 = vsel %vm1166, %v1594, -inf
        %1621 = vmax.xlane.f32.xlu0 %v1620
        %v1622 = vpop.xlane.xlu0 %1621
        %v1623 = vsel %vm1166, %v1599, -inf
        %1624 = vmax.xlane.f32.xlu0 %v1623
        %v1625 = vpop.xlane.xlu0 %1624
        %v1626 = vsel %vm1166, %v1602, -inf
        %1627 = vmax.xlane.f32.xlu0 %v1626
        %v1628 = vpop.xlane.xlu0 %1627
        %v1629 = vsub.f32 %v1575, %v1607
        %v1630 = vsub.f32 %v1578, %v1610
        %v1631 = vsub.f32 %v1583, %v1613
        %v1632 = vsub.f32 %v1586, %v1616
        %v1633 = vsub.f32 %v1591, %v1619
        %v1634 = vsub.f32 %v1594, %v1622
        %v1635 = vsub.f32 %v1599, %v1625
        %v1636 = vsub.f32 %v1602, %v1628
        %v1637 = vmul.f32 %v1629, 1.442695
        %v1638 = vpow.pop %v1637
        %v1639 = vmul.f32 %v1630, 1.442695
        %v1640 = vpow.pop %v1639
        %v1641 = vmul.f32 %v1631, 1.442695
        %v1642 = vpow.pop %v1641
        %v1643 = vmul.f32 %v1632, 1.442695
        %v1644 = vpow.pop %v1643
        %v1645 = vmul.f32 %v1633, 1.442695
        %v1646 = vpow.pop %v1645
        %v1647 = vmul.f32 %v1634, 1.442695
        %v1648 = vpow.pop %v1647
        %v1649 = vmul.f32 %v1635, 1.442695
        %v1650 = vpow.pop %v1649
        %v1651 = vmul.f32 %v1636, 1.442695
        %v1652 = vpow.pop %v1651
        %v1653 = vsel %vm1166, %v1638, 0.0
        %1654 = vadd.xlane.f32.xlu0 %v1653
        %v1655 = vpop.xlane.xlu0 %1654
        %v1656 = vsel %vm1166, %v1640, 0.0
        %1657 = vadd.xlane.f32.xlu0 %v1656
        %v1658 = vpop.xlane.xlu0 %1657
        %v1659 = vsel %vm1166, %v1642, 0.0
        %1660 = vadd.xlane.f32.xlu0 %v1659
        %v1661 = vpop.xlane.xlu0 %1660
        %v1662 = vsel %vm1166, %v1644, 0.0
        %1663 = vadd.xlane.f32.xlu0 %v1662
        %v1664 = vpop.xlane.xlu0 %1663
        %v1665 = vsel %vm1166, %v1646, 0.0
        %1666 = vadd.xlane.f32.xlu0 %v1665
        %v1667 = vpop.xlane.xlu0 %1666
        %v1668 = vsel %vm1166, %v1648, 0.0
        %1669 = vadd.xlane.f32.xlu0 %v1668
        %v1670 = vpop.xlane.xlu0 %1669
        %v1671 = vsel %vm1166, %v1650, 0.0
        %1672 = vadd.xlane.f32.xlu0 %v1671
        %v1673 = vpop.xlane.xlu0 %1672
        %v1674 = vsel %vm1166, %v1652, 0.0
        %1675 = vadd.xlane.f32.xlu0 %v1674
        %v1676 = vpop.xlane.xlu0 %1675
        %v1677 = vrcp.pop %v1655
        %v1678 = vrcp.pop %v1658
        %v1679 = vrcp.pop %v1661
        %v1680 = vrcp.pop %v1664
        %v1681 = vrcp.pop %v1667
        %v1682 = vrcp.pop %v1670
        %v1683 = vrcp.pop %v1673
        %v1684 = vrcp.pop %v1676
        %v1685 = vmul.f32 %v1638, %v1677
        %v1686 = vmul.f32 %v1640, %v1678
        %v1687 = vmul.f32 %v1642, %v1679
        %v1688 = vmul.f32 %v1644, %v1680
        %v1689 = vmul.f32 %v1646, %v1681
        %v1690 = vmul.f32 %v1648, %v1682
        %v1691 = vmul.f32 %v1650, %v1683
        %v1692 = vmul.f32 %v1652, %v1684
        %v1693 = vpack.c.bf16 %v1686, %v1685
        %v1694 = vpack.c.bf16 %v1688, %v1687
        %v1695 = vpack.c.bf16 %v1690, %v1689
        %v1696 = vpack.c.bf16 %v1692, %v1691
        %1701 = vrot.lane.b32.xlu0 %v1520, 64
        %v1702 = vpop.permute.xlu0 %1701
        %1703 = vrot.lane.b32.xlu0 %v1521, 64
        %v1704 = vpop.permute.xlu0 %1703
        %1705 = vrot.lane.b32.xlu0 %v1522, 64
        %v1706 = vpop.permute.xlu0 %1705
        %1707 = vrot.lane.b32.xlu0 %v1523, 64
        %v1708 = vpop.permute.xlu0 %1707
        %v1714 = vsel %vm1166, %v1693, 0
        %v1717 = vsel %vm1166, %v1694, 0
        %v1720 = vsel %vm1166, %v1695, 0
        %v1723 = vsel %vm1166, %v1696, 0
        %1725 = vmatprep.subr.bf16.mxu0 0
        %1726 = vmatpush1.bf16.msra.mxu0 %v1702
        %1727 = vmatprep.subr.bf16.mxu0 0
        %1728 = vmatpush1.bf16.msra.mxu0 %v1704
        %1729 = vmatprep.subr.bf16.mxu0 0
        %1730 = vmatpush1.bf16.msra.mxu0 %v1706
        %1731 = vmatprep.subr.bf16.mxu0 0
        %1732 = vmatpush1.bf16.msra.mxu0 %v1708
        %1733 = vmatprep.subr.bf16.mxu0 0
        %1734 = vmatpush1.bf16.msra.mxu0 0
        %1735 = vmatprep.subr.bf16.mxu0 0
        %1736 = vmatpush1.bf16.msra.mxu0 0
        %1737 = vmatprep.subr.bf16.mxu0 0
        %1738 = vmatpush1.bf16.msra.mxu0 0
        %1739 = vmatprep.subr.bf16.mxu0 0
        %1740 = vmatpush1.bf16.msra.mxu0 0
        %1741 = vmatprep.subr.bf16.mxu0 0
        %1742 = vmatpush1.bf16.msra.mxu0 0
        %1743 = vmatprep.subr.bf16.mxu0 0
        %1744 = vmatpush1.bf16.msra.mxu0 0
        %1745 = vmatprep.subr.bf16.mxu0 0
        %1746 = vmatpush1.bf16.msra.mxu0 0
        %1747 = vmatprep.subr.bf16.mxu0 0
        %1748 = vmatpush1.bf16.msra.mxu0 0
        %1749 = vmatprep.subr.bf16.mxu0 0
        %1750 = vmatpush1.bf16.msra.mxu0 0
        %1751 = vmatprep.subr.bf16.mxu0 0
        %1752 = vmatpush1.bf16.msra.mxu0 0
        %1753 = vmatprep.subr.bf16.mxu0 0
        %1754 = vmatpush1.bf16.msra.mxu0 0
        %1755 = vmatprep.subr.bf16.mxu0 0
        %1756 = vmatpush1.bf16.msra.mxu0 0
        %1757 = vmatprep.mubr.bf16.mxu0 0
        %1758 = vmatmul.mubr.bf16.gmra.mrb[0].mxu0 %v1714
        %v1759 = vpop.f32.mrb[0].mxu0
        %v1760 = vadd.f32 0.0, %v1759
        %v1761 = vpop.f32.mrb[0].mxu0
        %v1762 = vpop.f32.mrb[0].mxu0
        %v1763 = vadd.f32 0.0, %v1762
        %v1764 = vpop.f32.mrb[0].mxu0
        %1765 = vmatprep.mubr.bf16.mxu0 0
        %1766 = vmatmul.mubr.bf16.gmra.mrb[0].mxu0 %v1717
        %v1767 = vpop.f32.mrb[0].mxu0
        %v1768 = vadd.f32 0.0, %v1767
        %v1769 = vpop.f32.mrb[0].mxu0
        %v1770 = vpop.f32.mrb[0].mxu0
        %v1771 = vadd.f32 0.0, %v1770
        %v1772 = vpop.f32.mrb[0].mxu0
        %1773 = vmatprep.mubr.bf16.mxu0 0
        %1774 = vmatmul.mubr.bf16.gmra.mrb[0].mxu0 %v1720
        %v1775 = vpop.f32.mrb[0].mxu0
        %v1776 = vadd.f32 0.0, %v1775
        %v1777 = vpop.f32.mrb[0].mxu0
        %v1778 = vpop.f32.mrb[0].mxu0
        %v1779 = vadd.f32 0.0, %v1778
        %v1780 = vpop.f32.mrb[0].mxu0
        %1781 = vmatprep.mubr.bf16.mxu0 0
        %1782 = vmatmul.mubr.bf16.gmra.mrb[0].mxu0 %v1723
        %v1783 = vpop.f32.mrb[0].mxu0
        %v1784 = vadd.f32 0.0, %v1783
        %v1785 = vpop.f32.mrb[0].mxu0
        %v1786 = vpop.f32.mrb[0].mxu0
        %v1787 = vadd.f32 0.0, %v1786
        %v1788 = vpop.f32.mrb[0].mxu0
        %1789 = vdwg.mxu0
        %1794 = vrot.lane.b32.xlu0 %v1057, 64
        %v1795 = vpop.permute.xlu0 %1794
        %1796 = vrot.lane.b32.xlu0 %v1058, 64
        %v1797 = vpop.permute.xlu0 %1796
        %1798 = vrot.lane.b32.xlu0 %v1059, 64
        %v1799 = vpop.permute.xlu0 %1798
        %1800 = vrot.lane.b32.xlu0 %v1060, 64
        %v1801 = vpop.permute.xlu0 %1800
        %v1807 = vsel %vm1166, %v1255, 0
        %v1810 = vsel %vm1166, %v1256, 0
        %v1813 = vsel %vm1166, %v1257, 0
        %v1816 = vsel %vm1166, %v1258, 0
        %1818 = vmatprep.subr.bf16.mxu0 0
        %1819 = vmatpush1.bf16.msra.mxu0 %v1795
        %1820 = vmatprep.subr.bf16.mxu0 0
        %1821 = vmatpush1.bf16.msra.mxu0 %v1797
        %1822 = vmatprep.subr.bf16.mxu0 0
        %1823 = vmatpush1.bf16.msra.mxu0 %v1799
        %1824 = vmatprep.subr.bf16.mxu0 0
        %1825 = vmatpush1.bf16.msra.mxu0 %v1801
        %1826 = vmatprep.subr.bf16.mxu0 0
        %1827 = vmatpush1.bf16.msra.mxu0 0
        %1828 = vmatprep.subr.bf16.mxu0 0
        %1829 = vmatpush1.bf16.msra.mxu0 0
        %1830 = vmatprep.subr.bf16.mxu0 0
        %1831 = vmatpush1.bf16.msra.mxu0 0
        %1832 = vmatprep.subr.bf16.mxu0 0
        %1833 = vmatpush1.bf16.msra.mxu0 0
        %1834 = vmatprep.subr.bf16.mxu0 0
        %1835 = vmatpush1.bf16.msra.mxu0 0
        %1836 = vmatprep.subr.bf16.mxu0 0
        %1837 = vmatpush1.bf16.msra.mxu0 0
        %1838 = vmatprep.subr.bf16.mxu0 0
        %1839 = vmatpush1.bf16.msra.mxu0 0
        %1840 = vmatprep.subr.bf16.mxu0 0
        %1841 = vmatpush1.bf16.msra.mxu0 0
        %1842 = vmatprep.subr.bf16.mxu0 0
        %1843 = vmatpush1.bf16.msra.mxu0 0
        %1844 = vmatprep.subr.bf16.mxu0 0
        %1845 = vmatpush1.bf16.msra.mxu0 0
        %1846 = vmatprep.subr.bf16.mxu0 0
        %1847 = vmatpush1.bf16.msra.mxu0 0
        %1848 = vmatprep.subr.bf16.mxu0 0
        %1849 = vmatpush1.bf16.msra.mxu0 0
        %1850 = vmatprep.mubr.bf16.mxu0 0
        %1851 = vmatmul.mubr.bf16.gmra.mrb[0].mxu0 %v1807
        %v1852 = vpop.f32.mrb[0].mxu0
        %v1853 = vadd.f32 %v1760, %v1852
        %v1854 = vpop.f32.mrb[0].mxu0
        %v1855 = vpop.f32.mrb[0].mxu0
        %v1856 = vadd.f32 %v1763, %v1855
        %v1857 = vpop.f32.mrb[0].mxu0
        %1858 = vmatprep.mubr.bf16.mxu0 0
        %1859 = vmatmul.mubr.bf16.gmra.mrb[0].mxu0 %v1810
        %v1860 = vpop.f32.mrb[0].mxu0
        %v1861 = vadd.f32 %v1768, %v1860
        %v1862 = vpop.f32.mrb[0].mxu0
        %v1863 = vpop.f32.mrb[0].mxu0
        %v1864 = vadd.f32 %v1771, %v1863
        %v1865 = vpop.f32.mrb[0].mxu0
        %1866 = vmatprep.mubr.bf16.mxu0 0
        %1867 = vmatmul.mubr.bf16.gmra.mrb[0].mxu0 %v1813
        %v1868 = vpop.f32.mrb[0].mxu0
        %v1869 = vadd.f32 %v1776, %v1868
        %v1870 = vpop.f32.mrb[0].mxu0
        %v1871 = vpop.f32.mrb[0].mxu0
        %v1872 = vadd.f32 %v1779, %v1871
        %v1873 = vpop.f32.mrb[0].mxu0
        %1874 = vmatprep.mubr.bf16.mxu0 0
        %1875 = vmatmul.mubr.bf16.gmra.mrb[0].mxu0 %v1816
        %v1876 = vpop.f32.mrb[0].mxu0
        %v1877 = vadd.f32 %v1784, %v1876
        %v1878 = vpop.f32.mrb[0].mxu0
        %v1879 = vpop.f32.mrb[0].mxu0
        %v1880 = vadd.f32 %v1787, %v1879
        %v1881 = vpop.f32.mrb[0].mxu0
        %1882 = vdwg.mxu0
        %v1884 = vsel %vm577, %v1497, 0
        %v1887 = vsel %vm577, %v1498, 0
        %v1890 = vsel %vm577, %v1499, 0
        %v1893 = vsel %vm577, %v1500, 0
        %1895 = vmatprep.subr.bf16.mxu0 0
        %1896 = vmatpush1.bf16.xpose.msra.mxu0 %v1284
        %1897 = vmatprep.subr.bf16.mxu0 0
        %1898 = vmatpush1.bf16.xpose.msra.mxu0 %v1287
        %1899 = vmatprep.subr.bf16.mxu0 0
        %1900 = vmatpush1.bf16.xpose.msra.mxu0 %v1290
        %1901 = vmatprep.subr.bf16.mxu0 0
        %1902 = vmatpush1.bf16.xpose.msra.mxu0 %v1293
        %1903 = vmatprep.subr.bf16.mxu0 0
        %1904 = vmatpush1.bf16.xpose.msra.mxu0 0
        %1905 = vmatprep.subr.bf16.mxu0 0
        %1906 = vmatpush1.bf16.xpose.msra.mxu0 0
        %1907 = vmatprep.subr.bf16.mxu0 0
        %1908 = vmatpush1.bf16.xpose.msra.mxu0 0
        %1909 = vmatprep.subr.bf16.mxu0 0
        %1910 = vmatpush1.bf16.xpose.msra.mxu0 0
        %1911 = vmatprep.subr.bf16.mxu0 0
        %1912 = vmatpush1.bf16.xpose.msra.mxu0 0
        %1913 = vmatprep.subr.bf16.mxu0 0
        %1914 = vmatpush1.bf16.xpose.msra.mxu0 0
        %1915 = vmatprep.subr.bf16.mxu0 0
        %1916 = vmatpush1.bf16.xpose.msra.mxu0 0
        %1917 = vmatprep.subr.bf16.mxu0 0
        %1918 = vmatpush1.bf16.xpose.msra.mxu0 0
        %1919 = vmatprep.subr.bf16.mxu0 0
        %1920 = vmatpush1.bf16.xpose.msra.mxu0 0
        %1921 = vmatprep.subr.bf16.mxu0 0
        %1922 = vmatpush1.bf16.xpose.msra.mxu0 0
        %1923 = vmatprep.subr.bf16.mxu0 0
        %1924 = vmatpush1.bf16.xpose.msra.mxu0 0
        %1925 = vmatprep.subr.bf16.mxu0 0
        %1926 = vmatpush1.bf16.xpose.msra.mxu0 0
        %1927 = vmatprep.mubr.bf16.mxu0 0
        %1928 = vmatmul.mubr.bf16.gmra.mrb[0].mxu0 %v1884
        %v1929 = vpop.f32.mrb[0].mxu0
        %v1930 = vadd.f32 %v1463, %v1929
        %v1931 = vpop.f32.mrb[0].mxu0
        %v1932 = vpop.f32.mrb[0].mxu0
        %v1933 = vadd.f32 %v1464, %v1932
        %v1934 = vpop.f32.mrb[0].mxu0
        %1935 = vmatprep.mubr.bf16.mxu0 0
        %1936 = vmatmul.mubr.bf16.gmra.mrb[0].mxu0 %v1887
        %v1937 = vpop.f32.mrb[0].mxu0
        %v1938 = vadd.f32 %v1465, %v1937
        %v1939 = vpop.f32.mrb[0].mxu0
        %v1940 = vpop.f32.mrb[0].mxu0
        %v1941 = vadd.f32 %v1466, %v1940
        %v1942 = vpop.f32.mrb[0].mxu0
        %1943 = vmatprep.mubr.bf16.mxu0 0
        %1944 = vmatmul.mubr.bf16.gmra.mrb[0].mxu0 %v1890
        %v1945 = vpop.f32.mrb[0].mxu0
        %v1946 = vadd.f32 %v1467, %v1945
        %v1947 = vpop.f32.mrb[0].mxu0
        %v1948 = vpop.f32.mrb[0].mxu0
        %v1949 = vadd.f32 %v1468, %v1948
        %v1950 = vpop.f32.mrb[0].mxu0
        %1951 = vmatprep.mubr.bf16.mxu0 0
        %1952 = vmatmul.mubr.bf16.gmra.mrb[0].mxu0 %v1893
        %v1953 = vpop.f32.mrb[0].mxu0
        %v1954 = vadd.f32 %v1469, %v1953
        %v1955 = vpop.f32.mrb[0].mxu0
        %v1956 = vpop.f32.mrb[0].mxu0
        %v1957 = vadd.f32 %v1470, %v1956
        %v1958 = vpop.f32.mrb[0].mxu0
        %1959 = vdwg.mxu0
        %v1960 = vsel %vm1166, %v1930, -inf
        %1961 = vmax.xlane.f32.xlu0 %v1960
        %v1962 = vpop.xlane.xlu0 %1961
        %v1963 = vsel %vm1166, %v1933, -inf
        %1964 = vmax.xlane.f32.xlu0 %v1963
        %v1965 = vpop.xlane.xlu0 %1964
        %v1966 = vsel %vm1166, %v1938, -inf
        %1967 = vmax.xlane.f32.xlu0 %v1966
        %v1968 = vpop.xlane.xlu0 %1967
        %v1969 = vsel %vm1166, %v1941, -inf
        %1970 = vmax.xlane.f32.xlu0 %v1969
        %v1971 = vpop.xlane.xlu0 %1970
        %v1972 = vsel %vm1166, %v1946, -inf
        %1973 = vmax.xlane.f32.xlu0 %v1972
        %v1974 = vpop.xlane.xlu0 %1973
        %v1975 = vsel %vm1166, %v1949, -inf
        %1976 = vmax.xlane.f32.xlu0 %v1975
        %v1977 = vpop.xlane.xlu0 %1976
        %v1978 = vsel %vm1166, %v1954, -inf
        %1979 = vmax.xlane.f32.xlu0 %v1978
        %v1980 = vpop.xlane.xlu0 %1979
        %v1981 = vsel %vm1166, %v1957, -inf
        %1982 = vmax.xlane.f32.xlu0 %v1981
        %v1983 = vpop.xlane.xlu0 %1982
        %v1984 = vsub.f32 %v1930, %v1962
        %v1985 = vsub.f32 %v1933, %v1965
        %v1986 = vsub.f32 %v1938, %v1968
        %v1987 = vsub.f32 %v1941, %v1971
        %v1988 = vsub.f32 %v1946, %v1974
        %v1989 = vsub.f32 %v1949, %v1977
        %v1990 = vsub.f32 %v1954, %v1980
        %v1991 = vsub.f32 %v1957, %v1983
        %v1992 = vmul.f32 %v1984, 1.442695
        %v1993 = vpow.pop %v1992
        %v1994 = vmul.f32 %v1985, 1.442695
        %v1995 = vpow.pop %v1994
        %v1996 = vmul.f32 %v1986, 1.442695
        %v1997 = vpow.pop %v1996
        %v1998 = vmul.f32 %v1987, 1.442695
        %v1999 = vpow.pop %v1998
        %v2000 = vmul.f32 %v1988, 1.442695
        %v2001 = vpow.pop %v2000
        %v2002 = vmul.f32 %v1989, 1.442695
        %v2003 = vpow.pop %v2002
        %v2004 = vmul.f32 %v1990, 1.442695
        %v2005 = vpow.pop %v2004
        %v2006 = vmul.f32 %v1991, 1.442695
        %v2007 = vpow.pop %v2006
        %v2008 = vsel %vm1166, %v1993, 0.0
        %2009 = vadd.xlane.f32.xlu0 %v2008
        %v2010 = vpop.xlane.xlu0 %2009
        %v2011 = vsel %vm1166, %v1995, 0.0
        %2012 = vadd.xlane.f32.xlu0 %v2011
        %v2013 = vpop.xlane.xlu0 %2012
        %v2014 = vsel %vm1166, %v1997, 0.0
        %2015 = vadd.xlane.f32.xlu0 %v2014
        %v2016 = vpop.xlane.xlu0 %2015
        %v2017 = vsel %vm1166, %v1999, 0.0
        %2018 = vadd.xlane.f32.xlu0 %v2017
        %v2019 = vpop.xlane.xlu0 %2018
        %v2020 = vsel %vm1166, %v2001, 0.0
        %2021 = vadd.xlane.f32.xlu0 %v2020
        %v2022 = vpop.xlane.xlu0 %2021
        %v2023 = vsel %vm1166, %v2003, 0.0
        %2024 = vadd.xlane.f32.xlu0 %v2023
        %v2025 = vpop.xlane.xlu0 %2024
        %v2026 = vsel %vm1166, %v2005, 0.0
        %2027 = vadd.xlane.f32.xlu0 %v2026
        %v2028 = vpop.xlane.xlu0 %2027
        %v2029 = vsel %vm1166, %v2007, 0.0
        %2030 = vadd.xlane.f32.xlu0 %v2029
        %v2031 = vpop.xlane.xlu0 %2030
        %v2032 = vrcp.pop %v2010
        %v2033 = vrcp.pop %v2013
        %v2034 = vrcp.pop %v2016
        %v2035 = vrcp.pop %v2019
        %v2036 = vrcp.pop %v2022
        %v2037 = vrcp.pop %v2025
        %v2038 = vrcp.pop %v2028
        %v2039 = vrcp.pop %v2031
        %v2040 = vmul.f32 %v1993, %v2032
        %v2041 = vmul.f32 %v1995, %v2033
        %v2042 = vmul.f32 %v1997, %v2034
        %v2043 = vmul.f32 %v1999, %v2035
        %v2044 = vmul.f32 %v2001, %v2036
        %v2045 = vmul.f32 %v2003, %v2037
        %v2046 = vmul.f32 %v2005, %v2038
        %v2047 = vmul.f32 %v2007, %v2039
        %v2048 = vpack.c.bf16 %v2041, %v2040
        %v2049 = vpack.c.bf16 %v2043, %v2042
        %v2050 = vpack.c.bf16 %v2045, %v2044
        %v2051 = vpack.c.bf16 %v2047, %v2046
        %2056 = vrot.lane.b32.xlu0 %v1524, 64
        %v2057 = vpop.permute.xlu0 %2056
        %2058 = vrot.lane.b32.xlu0 %v1525, 64
        %v2059 = vpop.permute.xlu0 %2058
        %2060 = vrot.lane.b32.xlu0 %v1526, 64
        %v2061 = vpop.permute.xlu0 %2060
        %2062 = vrot.lane.b32.xlu0 %v1527, 64
        %v2063 = vpop.permute.xlu0 %2062
        %v2069 = vsel %vm1166, %v2048, 0
        %v2072 = vsel %vm1166, %v2049, 0
        %v2075 = vsel %vm1166, %v2050, 0
        %v2078 = vsel %vm1166, %v2051, 0
        %2080 = vmatprep.subr.bf16.mxu0 0
        %2081 = vmatpush1.bf16.msra.mxu0 %v2057
        %2082 = vmatprep.subr.bf16.mxu0 0
        %2083 = vmatpush1.bf16.msra.mxu0 %v2059
        %2084 = vmatprep.subr.bf16.mxu0 0
        %2085 = vmatpush1.bf16.msra.mxu0 %v2061
        %2086 = vmatprep.subr.bf16.mxu0 0
        %2087 = vmatpush1.bf16.msra.mxu0 %v2063
        %2088 = vmatprep.subr.bf16.mxu0 0
        %2089 = vmatpush1.bf16.msra.mxu0 0
        %2090 = vmatprep.subr.bf16.mxu0 0
        %2091 = vmatpush1.bf16.msra.mxu0 0
        %2092 = vmatprep.subr.bf16.mxu0 0
        %2093 = vmatpush1.bf16.msra.mxu0 0
        %2094 = vmatprep.subr.bf16.mxu0 0
        %2095 = vmatpush1.bf16.msra.mxu0 0
        %2096 = vmatprep.subr.bf16.mxu0 0
        %2097 = vmatpush1.bf16.msra.mxu0 0
        %2098 = vmatprep.subr.bf16.mxu0 0
        %2099 = vmatpush1.bf16.msra.mxu0 0
        %2100 = vmatprep.subr.bf16.mxu0 0
        %2101 = vmatpush1.bf16.msra.mxu0 0
        %2102 = vmatprep.subr.bf16.mxu0 0
        %2103 = vmatpush1.bf16.msra.mxu0 0
        %2104 = vmatprep.subr.bf16.mxu0 0
        %2105 = vmatpush1.bf16.msra.mxu0 0
        %2106 = vmatprep.subr.bf16.mxu0 0
        %2107 = vmatpush1.bf16.msra.mxu0 0
        %2108 = vmatprep.subr.bf16.mxu0 0
        %2109 = vmatpush1.bf16.msra.mxu0 0
        %2110 = vmatprep.subr.bf16.mxu0 0
        %2111 = vmatpush1.bf16.msra.mxu0 0
        %2112 = vmatprep.mubr.bf16.mxu0 0
        %2113 = vmatmul.mubr.bf16.gmra.mrb[0].mxu0 %v2069
        %v2114 = vpop.f32.mrb[0].mxu0
        %v2115 = vadd.f32 0.0, %v2114
        %v2116 = vpop.f32.mrb[0].mxu0
        %v2117 = vpop.f32.mrb[0].mxu0
        %v2118 = vadd.f32 0.0, %v2117
        %v2119 = vpop.f32.mrb[0].mxu0
        %2120 = vmatprep.mubr.bf16.mxu0 0
        %2121 = vmatmul.mubr.bf16.gmra.mrb[0].mxu0 %v2072
        %v2122 = vpop.f32.mrb[0].mxu0
        %v2123 = vadd.f32 0.0, %v2122
        %v2124 = vpop.f32.mrb[0].mxu0
        %v2125 = vpop.f32.mrb[0].mxu0
        %v2126 = vadd.f32 0.0, %v2125
        %v2127 = vpop.f32.mrb[0].mxu0
        %2128 = vmatprep.mubr.bf16.mxu0 0
        %2129 = vmatmul.mubr.bf16.gmra.mrb[0].mxu0 %v2075
        %v2130 = vpop.f32.mrb[0].mxu0
        %v2131 = vadd.f32 0.0, %v2130
        %v2132 = vpop.f32.mrb[0].mxu0
        %v2133 = vpop.f32.mrb[0].mxu0
        %v2134 = vadd.f32 0.0, %v2133
        %v2135 = vpop.f32.mrb[0].mxu0
        %2136 = vmatprep.mubr.bf16.mxu0 0
        %2137 = vmatmul.mubr.bf16.gmra.mrb[0].mxu0 %v2078
        %v2138 = vpop.f32.mrb[0].mxu0
        %v2139 = vadd.f32 0.0, %v2138
        %v2140 = vpop.f32.mrb[0].mxu0
        %v2141 = vpop.f32.mrb[0].mxu0
        %v2142 = vadd.f32 0.0, %v2141
        %v2143 = vpop.f32.mrb[0].mxu0
        %2144 = vdwg.mxu0
        %2149 = vrot.lane.b32.xlu0 %v1061, 64
        %v2150 = vpop.permute.xlu0 %2149
        %2151 = vrot.lane.b32.xlu0 %v1062, 64
        %v2152 = vpop.permute.xlu0 %2151
        %2153 = vrot.lane.b32.xlu0 %v1063, 64
        %v2154 = vpop.permute.xlu0 %2153
        %2155 = vrot.lane.b32.xlu0 %v1064, 64
        %v2156 = vpop.permute.xlu0 %2155
        %v2162 = vsel %vm1166, %v1448, 0
        %v2165 = vsel %vm1166, %v1449, 0
        %v2168 = vsel %vm1166, %v1450, 0
        %v2171 = vsel %vm1166, %v1451, 0
        %2173 = vmatprep.subr.bf16.mxu0 0
        %2174 = vmatpush1.bf16.msra.mxu0 %v2150
        %2175 = vmatprep.subr.bf16.mxu0 0
        %2176 = vmatpush1.bf16.msra.mxu0 %v2152
        %2177 = vmatprep.subr.bf16.mxu0 0
        %2178 = vmatpush1.bf16.msra.mxu0 %v2154
        %2179 = vmatprep.subr.bf16.mxu0 0
        %2180 = vmatpush1.bf16.msra.mxu0 %v2156
        %2181 = vmatprep.subr.bf16.mxu0 0
        %2182 = vmatpush1.bf16.msra.mxu0 0
        %2183 = vmatprep.subr.bf16.mxu0 0
        %2184 = vmatpush1.bf16.msra.mxu0 0
        %2185 = vmatprep.subr.bf16.mxu0 0
        %2186 = vmatpush1.bf16.msra.mxu0 0
        %2187 = vmatprep.subr.bf16.mxu0 0
        %2188 = vmatpush1.bf16.msra.mxu0 0
        %2189 = vmatprep.subr.bf16.mxu0 0
        %2190 = vmatpush1.bf16.msra.mxu0 0
        %2191 = vmatprep.subr.bf16.mxu0 0
        %2192 = vmatpush1.bf16.msra.mxu0 0
        %2193 = vmatprep.subr.bf16.mxu0 0
        %2194 = vmatpush1.bf16.msra.mxu0 0
        %2195 = vmatprep.subr.bf16.mxu0 0
        %2196 = vmatpush1.bf16.msra.mxu0 0
        %2197 = vmatprep.subr.bf16.mxu0 0
        %2198 = vmatpush1.bf16.msra.mxu0 0
        %2199 = vmatprep.subr.bf16.mxu0 0
        %2200 = vmatpush1.bf16.msra.mxu0 0
        %2201 = vmatprep.subr.bf16.mxu0 0
        %2202 = vmatpush1.bf16.msra.mxu0 0
        %2203 = vmatprep.subr.bf16.mxu0 0
        %2204 = vmatpush1.bf16.msra.mxu0 0
        %2205 = vmatprep.mubr.bf16.mxu0 0
        %2206 = vmatmul.mubr.bf16.gmra.mrb[0].mxu0 %v2162
        %v2207 = vpop.f32.mrb[0].mxu0
        %v2208 = vadd.f32 %v2115, %v2207
        %v2209 = vpop.f32.mrb[0].mxu0
        %v2210 = vpop.f32.mrb[0].mxu0
        %v2211 = vadd.f32 %v2118, %v2210
        %v2212 = vpop.f32.mrb[0].mxu0
        %2213 = vmatprep.mubr.bf16.mxu0 0
        %2214 = vmatmul.mubr.bf16.gmra.mrb[0].mxu0 %v2165
        %v2215 = vpop.f32.mrb[0].mxu0
        %v2216 = vadd.f32 %v2123, %v2215
        %v2217 = vpop.f32.mrb[0].mxu0
        %v2218 = vpop.f32.mrb[0].mxu0
        %v2219 = vadd.f32 %v2126, %v2218
        %v2220 = vpop.f32.mrb[0].mxu0
        %2221 = vmatprep.mubr.bf16.mxu0 0
        %2222 = vmatmul.mubr.bf16.gmra.mrb[0].mxu0 %v2168
        %v2223 = vpop.f32.mrb[0].mxu0
        %v2224 = vadd.f32 %v2131, %v2223
        %v2225 = vpop.f32.mrb[0].mxu0
        %v2226 = vpop.f32.mrb[0].mxu0
        %v2227 = vadd.f32 %v2134, %v2226
        %v2228 = vpop.f32.mrb[0].mxu0
        %2229 = vmatprep.mubr.bf16.mxu0 0
        %2230 = vmatmul.mubr.bf16.gmra.mrb[0].mxu0 %v2171
        %v2231 = vpop.f32.mrb[0].mxu0
        %v2232 = vadd.f32 %v2139, %v2231
        %v2233 = vpop.f32.mrb[0].mxu0
        %v2234 = vpop.f32.mrb[0].mxu0
        %v2235 = vadd.f32 %v2142, %v2234
        %v2236 = vpop.f32.mrb[0].mxu0
        %2237 = vdwg.mxu0
        %s2238 = scalar_lea.vmem %s5, 2
        %v2239 = vld [vmem:[%s2238] sm:$0x1]
        %s2240 = scalar_lea.vmem [#allocation5], 64
        %v2241 = vld [vmem:[%s2240] sm:$0xf]
        %v2242 = vld [vmem:[%s2240 + $0x4] sm:$0xf]
        %v2243 = vld [vmem:[%s2240 + $0x8] sm:$0xf]
        %v2244 = vld [vmem:[%s2240 + $0xc] sm:$0xf]
        %v2245 = vld [vmem:[%s2240 + $0x10] sm:$0xf]
        %v2246 = vld [vmem:[%s2240 + $0x14] sm:$0xf]
        %v2247 = vld [vmem:[%s2240 + $0x18] sm:$0xf]
        %v2248 = vld [vmem:[%s2240 + $0x1c] sm:$0xf]
        %v2249 = vunpack.c.l.bf16 %v2241
        %v2250 = vunpack.c.l.bf16 %v2242
        %v2251 = vunpack.c.l.bf16 %v2243
        %v2252 = vunpack.c.l.bf16 %v2244
        %v2253 = vunpack.c.l.bf16 %v2245
        %v2254 = vunpack.c.l.bf16 %v2246
        %v2255 = vunpack.c.l.bf16 %v2247
        %v2256 = vunpack.c.l.bf16 %v2248
        %v2258 = vlaneseq
        %v2259 = vshrl.u32 %v2258, 7
        %v2260 = vsub.s32 0, %v2259
        %v2261 = vrot.slane %v2239, %v2260
        %v2263 = vmul.f32 %v921, %v2261
        %v2264 = vmul.f32 %v924, %v2261
        %v2265 = vmul.f32 %v929, %v2261
        %v2266 = vmul.f32 %v932, %v2261
        %v2267 = vmul.f32 %v937, %v2261
        %v2268 = vmul.f32 %v940, %v2261
        %v2269 = vmul.f32 %v945, %v2261
        %v2270 = vmul.f32 %v948, %v2261
        %v2271 = vmul.f32 %v953, %v2261
        %v2272 = vmul.f32 %v956, %v2261
        %v2273 = vmul.f32 %v961, %v2261
        %v2274 = vmul.f32 %v964, %v2261
        %v2275 = vmul.f32 %v969, %v2261
        %v2276 = vmul.f32 %v972, %v2261
        %v2277 = vmul.f32 %v977, %v2261
        %v2278 = vmul.f32 %v980, %v2261
        %v2279 = vpack.c.bf16 %v2264, %v2263
        %v2280 = vpack.c.bf16 %v2266, %v2265
        %v2281 = vpack.c.bf16 %v2268, %v2267
        %v2282 = vpack.c.bf16 %v2270, %v2269
        %v2283 = vpack.c.bf16 %v2272, %v2271
        %v2284 = vpack.c.bf16 %v2274, %v2273
        %v2285 = vpack.c.bf16 %v2276, %v2275
        %v2286 = vpack.c.bf16 %v2278, %v2277
        %2287 = vrot.lane.b32.xlu0 %v2261, 64
        %v2288 = vpop.permute.xlu0 %2287
        %v2290 = vmul.f32 %v921, %v2288
        %v2291 = vmul.f32 %v924, %v2288
        %v2292 = vmul.f32 %v929, %v2288
        %v2293 = vmul.f32 %v932, %v2288
        %v2294 = vmul.f32 %v937, %v2288
        %v2295 = vmul.f32 %v940, %v2288
        %v2296 = vmul.f32 %v945, %v2288
        %v2297 = vmul.f32 %v948, %v2288
        %v2298 = vmul.f32 %v953, %v2288
        %v2299 = vmul.f32 %v956, %v2288
        %v2300 = vmul.f32 %v961, %v2288
        %v2301 = vmul.f32 %v964, %v2288
        %v2302 = vmul.f32 %v969, %v2288
        %v2303 = vmul.f32 %v972, %v2288
        %v2304 = vmul.f32 %v977, %v2288
        %v2305 = vmul.f32 %v980, %v2288
        %v2306 = vpack.c.bf16 %v2291, %v2290
        %v2307 = vpack.c.bf16 %v2293, %v2292
        %v2308 = vpack.c.bf16 %v2295, %v2294
        %v2309 = vpack.c.bf16 %v2297, %v2296
        %v2310 = vpack.c.bf16 %v2299, %v2298
        %v2311 = vpack.c.bf16 %v2301, %v2300
        %v2312 = vpack.c.bf16 %v2303, %v2302
        %v2313 = vpack.c.bf16 %v2305, %v2304
        %v2315 = vsel %vm577, %v2279, 0
        %v2318 = vsel %vm577, %v2280, 0
        %v2321 = vsel %vm577, %v2281, 0
        %v2324 = vsel %vm577, %v2282, 0
        %2326 = vmatprep.subr.bf16.mxu0 0
        %2327 = vmatpush1.bf16.xpose.msra.mxu0 %v1090
        %2328 = vmatprep.subr.bf16.mxu0 0
        %2329 = vmatpush1.bf16.xpose.msra.mxu0 %v1093
        %2330 = vmatprep.subr.bf16.mxu0 0
        %2331 = vmatpush1.bf16.xpose.msra.mxu0 %v1096
        %2332 = vmatprep.subr.bf16.mxu0 0
        %2333 = vmatpush1.bf16.xpose.msra.mxu0 %v1099
        %2334 = vmatprep.subr.bf16.mxu0 0
        %2335 = vmatpush1.bf16.xpose.msra.mxu0 0
        %2336 = vmatprep.subr.bf16.mxu0 0
        %2337 = vmatpush1.bf16.xpose.msra.mxu0 0
        %2338 = vmatprep.subr.bf16.mxu0 0
        %2339 = vmatpush1.bf16.xpose.msra.mxu0 0
        %2340 = vmatprep.subr.bf16.mxu0 0
        %2341 = vmatpush1.bf16.xpose.msra.mxu0 0
        %2342 = vmatprep.subr.bf16.mxu0 0
        %2343 = vmatpush1.bf16.xpose.msra.mxu0 0
        %2344 = vmatprep.subr.bf16.mxu0 0
        %2345 = vmatpush1.bf16.xpose.msra.mxu0 0
        %2346 = vmatprep.subr.bf16.mxu0 0
        %2347 = vmatpush1.bf16.xpose.msra.mxu0 0
        %2348 = vmatprep.subr.bf16.mxu0 0
        %2349 = vmatpush1.bf16.xpose.msra.mxu0 0
        %2350 = vmatprep.subr.bf16.mxu0 0
        %2351 = vmatpush1.bf16.xpose.msra.mxu0 0
        %2352 = vmatprep.subr.bf16.mxu0 0
        %2353 = vmatpush1.bf16.xpose.msra.mxu0 0
        %2354 = vmatprep.subr.bf16.mxu0 0
        %2355 = vmatpush1.bf16.xpose.msra.mxu0 0
        %2356 = vmatprep.subr.bf16.mxu0 0
        %2357 = vmatpush1.bf16.xpose.msra.mxu0 0
        %2358 = vmatprep.mubr.bf16.mxu0 0
        %2359 = vmatmul.mubr.bf16.gmra.mrb[0].mxu0 %v2315
        %v2360 = vpop.f32.mrb[0].mxu0
        %v2361 = vadd.f32 %v2249, %v2360
        %v2362 = vpop.f32.mrb[0].mxu0
        %v2363 = vpop.f32.mrb[0].mxu0
        %v2364 = vadd.f32 %v2250, %v2363
        %v2365 = vpop.f32.mrb[0].mxu0
        %2366 = vmatprep.mubr.bf16.mxu0 0
        %2367 = vmatmul.mubr.bf16.gmra.mrb[0].mxu0 %v2318
        %v2368 = vpop.f32.mrb[0].mxu0
        %v2369 = vadd.f32 %v2251, %v2368
        %v2370 = vpop.f32.mrb[0].mxu0
        %v2371 = vpop.f32.mrb[0].mxu0
        %v2372 = vadd.f32 %v2252, %v2371
        %v2373 = vpop.f32.mrb[0].mxu0
        %2374 = vmatprep.mubr.bf16.mxu0 0
        %2375 = vmatmul.mubr.bf16.gmra.mrb[0].mxu0 %v2321
        %v2376 = vpop.f32.mrb[0].mxu0
        %v2377 = vadd.f32 %v2253, %v2376
        %v2378 = vpop.f32.mrb[0].mxu0
        %v2379 = vpop.f32.mrb[0].mxu0
        %v2380 = vadd.f32 %v2254, %v2379
        %v2381 = vpop.f32.mrb[0].mxu0
        %2382 = vmatprep.mubr.bf16.mxu0 0
        %2383 = vmatmul.mubr.bf16.gmra.mrb[0].mxu0 %v2324
        %v2384 = vpop.f32.mrb[0].mxu0
        %v2385 = vadd.f32 %v2255, %v2384
        %v2386 = vpop.f32.mrb[0].mxu0
        %v2387 = vpop.f32.mrb[0].mxu0
        %v2388 = vadd.f32 %v2256, %v2387
        %v2389 = vpop.f32.mrb[0].mxu0
        %2390 = vdwg.mxu0
        %v2391 = vsel %vm1166, %v2361, -inf
        %2392 = vmax.xlane.f32.xlu0 %v2391
        %v2393 = vpop.xlane.xlu0 %2392
        %v2394 = vsel %vm1166, %v2364, -inf
        %2395 = vmax.xlane.f32.xlu0 %v2394
        %v2396 = vpop.xlane.xlu0 %2395
        %v2397 = vsel %vm1166, %v2369, -inf
        %2398 = vmax.xlane.f32.xlu0 %v2397
        %v2399 = vpop.xlane.xlu0 %2398
        %v2400 = vsel %vm1166, %v2372, -inf
        %2401 = vmax.xlane.f32.xlu0 %v2400
        %v2402 = vpop.xlane.xlu0 %2401
        %v2403 = vsel %vm1166, %v2377, -inf
        %2404 = vmax.xlane.f32.xlu0 %v2403
        %v2405 = vpop.xlane.xlu0 %2404
        %v2406 = vsel %vm1166, %v2380, -inf
        %2407 = vmax.xlane.f32.xlu0 %v2406
        %v2408 = vpop.xlane.xlu0 %2407
        %v2409 = vsel %vm1166, %v2385, -inf
        %2410 = vmax.xlane.f32.xlu0 %v2409
        %v2411 = vpop.xlane.xlu0 %2410
        %v2412 = vsel %vm1166, %v2388, -inf
        %2413 = vmax.xlane.f32.xlu0 %v2412
        %v2414 = vpop.xlane.xlu0 %2413
        %v2415 = vsub.f32 %v2361, %v2393
        %v2416 = vsub.f32 %v2364, %v2396
        %v2417 = vsub.f32 %v2369, %v2399
        %v2418 = vsub.f32 %v2372, %v2402
        %v2419 = vsub.f32 %v2377, %v2405
        %v2420 = vsub.f32 %v2380, %v2408
        %v2421 = vsub.f32 %v2385, %v2411
        %v2422 = vsub.f32 %v2388, %v2414
        %v2423 = vmul.f32 %v2415, 1.442695
        %v2424 = vpow.pop %v2423
        %v2425 = vmul.f32 %v2416, 1.442695
        %v2426 = vpow.pop %v2425
        %v2427 = vmul.f32 %v2417, 1.442695
        %v2428 = vpow.pop %v2427
        %v2429 = vmul.f32 %v2418, 1.442695
        %v2430 = vpow.pop %v2429
        %v2431 = vmul.f32 %v2419, 1.442695
        %v2432 = vpow.pop %v2431
        %v2433 = vmul.f32 %v2420, 1.442695
        %v2434 = vpow.pop %v2433
        %v2435 = vmul.f32 %v2421, 1.442695
        %v2436 = vpow.pop %v2435
        %v2437 = vmul.f32 %v2422, 1.442695
        %v2438 = vpow.pop %v2437
        %v2439 = vsel %vm1166, %v2424, 0.0
        %2440 = vadd.xlane.f32.xlu0 %v2439
        %v2441 = vpop.xlane.xlu0 %2440
        %v2442 = vsel %vm1166, %v2426, 0.0
        %2443 = vadd.xlane.f32.xlu0 %v2442
        %v2444 = vpop.xlane.xlu0 %2443
        %v2445 = vsel %vm1166, %v2428, 0.0
        %2446 = vadd.xlane.f32.xlu0 %v2445
        %v2447 = vpop.xlane.xlu0 %2446
        %v2448 = vsel %vm1166, %v2430, 0.0
        %2449 = vadd.xlane.f32.xlu0 %v2448
        %v2450 = vpop.xlane.xlu0 %2449
        %v2451 = vsel %vm1166, %v2432, 0.0
        %2452 = vadd.xlane.f32.xlu0 %v2451
        %v2453 = vpop.xlane.xlu0 %2452
        %v2454 = vsel %vm1166, %v2434, 0.0
        %2455 = vadd.xlane.f32.xlu0 %v2454
        %v2456 = vpop.xlane.xlu0 %2455
        %v2457 = vsel %vm1166, %v2436, 0.0
        %2458 = vadd.xlane.f32.xlu0 %v2457
        %v2459 = vpop.xlane.xlu0 %2458
        %v2460 = vsel %vm1166, %v2438, 0.0
        %2461 = vadd.xlane.f32.xlu0 %v2460
        %v2462 = vpop.xlane.xlu0 %2461
        %v2463 = vrcp.pop %v2441
        %v2464 = vrcp.pop %v2444
        %v2465 = vrcp.pop %v2447
        %v2466 = vrcp.pop %v2450
        %v2467 = vrcp.pop %v2453
        %v2468 = vrcp.pop %v2456
        %v2469 = vrcp.pop %v2459
        %v2470 = vrcp.pop %v2462
        %v2471 = vmul.f32 %v2424, %v2463
        %v2472 = vmul.f32 %v2426, %v2464
        %v2473 = vmul.f32 %v2428, %v2465
        %v2474 = vmul.f32 %v2430, %v2466
        %v2475 = vmul.f32 %v2432, %v2467
        %v2476 = vmul.f32 %v2434, %v2468
        %v2477 = vmul.f32 %v2436, %v2469
        %v2478 = vmul.f32 %v2438, %v2470
        %v2479 = vpack.c.bf16 %v2472, %v2471
        %v2480 = vpack.c.bf16 %v2474, %v2473
        %v2481 = vpack.c.bf16 %v2476, %v2475
        %v2482 = vpack.c.bf16 %v2478, %v2477
        %2487 = vrot.lane.b32.xlu0 %v2306, 64
        %v2488 = vpop.permute.xlu0 %2487
        %2489 = vrot.lane.b32.xlu0 %v2307, 64
        %v2490 = vpop.permute.xlu0 %2489
        %2491 = vrot.lane.b32.xlu0 %v2308, 64
        %v2492 = vpop.permute.xlu0 %2491
        %2493 = vrot.lane.b32.xlu0 %v2309, 64
        %v2494 = vpop.permute.xlu0 %2493
        %v2500 = vsel %vm1166, %v2479, 0
        %v2503 = vsel %vm1166, %v2480, 0
        %v2506 = vsel %vm1166, %v2481, 0
        %v2509 = vsel %vm1166, %v2482, 0
        %2511 = vmatprep.subr.bf16.mxu0 0
        %2512 = vmatpush1.bf16.msra.mxu0 %v2488
        %2513 = vmatprep.subr.bf16.mxu0 0
        %2514 = vmatpush1.bf16.msra.mxu0 %v2490
        %2515 = vmatprep.subr.bf16.mxu0 0
        %2516 = vmatpush1.bf16.msra.mxu0 %v2492
        %2517 = vmatprep.subr.bf16.mxu0 0
        %2518 = vmatpush1.bf16.msra.mxu0 %v2494
        %2519 = vmatprep.subr.bf16.mxu0 0
        %2520 = vmatpush1.bf16.msra.mxu0 0
        %2521 = vmatprep.subr.bf16.mxu0 0
        %2522 = vmatpush1.bf16.msra.mxu0 0
        %2523 = vmatprep.subr.bf16.mxu0 0
        %2524 = vmatpush1.bf16.msra.mxu0 0
        %2525 = vmatprep.subr.bf16.mxu0 0
        %2526 = vmatpush1.bf16.msra.mxu0 0
        %2527 = vmatprep.subr.bf16.mxu0 0
        %2528 = vmatpush1.bf16.msra.mxu0 0
        %2529 = vmatprep.subr.bf16.mxu0 0
        %2530 = vmatpush1.bf16.msra.mxu0 0
        %2531 = vmatprep.subr.bf16.mxu0 0
        %2532 = vmatpush1.bf16.msra.mxu0 0
        %2533 = vmatprep.subr.bf16.mxu0 0
        %2534 = vmatpush1.bf16.msra.mxu0 0
        %2535 = vmatprep.subr.bf16.mxu0 0
        %2536 = vmatpush1.bf16.msra.mxu0 0
        %2537 = vmatprep.subr.bf16.mxu0 0
        %2538 = vmatpush1.bf16.msra.mxu0 0
        %2539 = vmatprep.subr.bf16.mxu0 0
        %2540 = vmatpush1.bf16.msra.mxu0 0
        %2541 = vmatprep.subr.bf16.mxu0 0
        %2542 = vmatpush1.bf16.msra.mxu0 0
        %2543 = vmatprep.mubr.bf16.mxu0 0
        %2544 = vmatmul.mubr.bf16.gmra.mrb[0].mxu0 %v2500
        %v2545 = vpop.f32.mrb[0].mxu0
        %v2546 = vadd.f32 0.0, %v2545
        %v2547 = vpop.f32.mrb[0].mxu0
        %v2548 = vpop.f32.mrb[0].mxu0
        %v2549 = vadd.f32 0.0, %v2548
        %v2550 = vpop.f32.mrb[0].mxu0
        %2551 = vmatprep.mubr.bf16.mxu0 0
        %2552 = vmatmul.mubr.bf16.gmra.mrb[0].mxu0 %v2503
        %v2553 = vpop.f32.mrb[0].mxu0
        %v2554 = vadd.f32 0.0, %v2553
        %v2555 = vpop.f32.mrb[0].mxu0
        %v2556 = vpop.f32.mrb[0].mxu0
        %v2557 = vadd.f32 0.0, %v2556
        %v2558 = vpop.f32.mrb[0].mxu0
        %2559 = vmatprep.mubr.bf16.mxu0 0
        %2560 = vmatmul.mubr.bf16.gmra.mrb[0].mxu0 %v2506
        %v2561 = vpop.f32.mrb[0].mxu0
        %v2562 = vadd.f32 0.0, %v2561
        %v2563 = vpop.f32.mrb[0].mxu0
        %v2564 = vpop.f32.mrb[0].mxu0
        %v2565 = vadd.f32 0.0, %v2564
        %v2566 = vpop.f32.mrb[0].mxu0
        %2567 = vmatprep.mubr.bf16.mxu0 0
        %2568 = vmatmul.mubr.bf16.gmra.mrb[0].mxu0 %v2509
        %v2569 = vpop.f32.mrb[0].mxu0
        %v2570 = vadd.f32 0.0, %v2569
        %v2571 = vpop.f32.mrb[0].mxu0
        %v2572 = vpop.f32.mrb[0].mxu0
        %v2573 = vadd.f32 0.0, %v2572
        %v2574 = vpop.f32.mrb[0].mxu0
        %2575 = vdwg.mxu0
        %v2576 = vadd.f32 %v1853, %v2546
        %v2577 = vadd.f32 %v1856, %v2549
        %v2578 = vadd.f32 %v1861, %v2554
        %v2579 = vadd.f32 %v1864, %v2557
        %v2580 = vadd.f32 %v1869, %v2562
        %v2581 = vadd.f32 %v1872, %v2565
        %v2582 = vadd.f32 %v1877, %v2570
        %v2583 = vadd.f32 %v1880, %v2573
        %v2585 = vsel %vm577, %v2283, 0
        %v2588 = vsel %vm577, %v2284, 0
        %v2591 = vsel %vm577, %v2285, 0
        %v2594 = vsel %vm577, %v2286, 0
        %2596 = vmatprep.subr.bf16.mxu0 0
        %2597 = vmatpush1.bf16.xpose.msra.mxu0 %v1284
        %2598 = vmatprep.subr.bf16.mxu0 0
        %2599 = vmatpush1.bf16.xpose.msra.mxu0 %v1287
        %2600 = vmatprep.subr.bf16.mxu0 0
        %2601 = vmatpush1.bf16.xpose.msra.mxu0 %v1290
        %2602 = vmatprep.subr.bf16.mxu0 0
        %2603 = vmatpush1.bf16.xpose.msra.mxu0 %v1293
        %2604 = vmatprep.subr.bf16.mxu0 0
        %2605 = vmatpush1.bf16.xpose.msra.mxu0 0
        %2606 = vmatprep.subr.bf16.mxu0 0
        %2607 = vmatpush1.bf16.xpose.msra.mxu0 0
        %2608 = vmatprep.subr.bf16.mxu0 0
        %2609 = vmatpush1.bf16.xpose.msra.mxu0 0
        %2610 = vmatprep.subr.bf16.mxu0 0
        %2611 = vmatpush1.bf16.xpose.msra.mxu0 0
        %2612 = vmatprep.subr.bf16.mxu0 0
        %2613 = vmatpush1.bf16.xpose.msra.mxu0 0
        %2614 = vmatprep.subr.bf16.mxu0 0
        %2615 = vmatpush1.bf16.xpose.msra.mxu0 0
        %2616 = vmatprep.subr.bf16.mxu0 0
        %2617 = vmatpush1.bf16.xpose.msra.mxu0 0
        %2618 = vmatprep.subr.bf16.mxu0 0
        %2619 = vmatpush1.bf16.xpose.msra.mxu0 0
        %2620 = vmatprep.subr.bf16.mxu0 0
        %2621 = vmatpush1.bf16.xpose.msra.mxu0 0
        %2622 = vmatprep.subr.bf16.mxu0 0
        %2623 = vmatpush1.bf16.xpose.msra.mxu0 0
        %2624 = vmatprep.subr.bf16.mxu0 0
        %2625 = vmatpush1.bf16.xpose.msra.mxu0 0
        %2626 = vmatprep.subr.bf16.mxu0 0
        %2627 = vmatpush1.bf16.xpose.msra.mxu0 0
        %2628 = vmatprep.mubr.bf16.mxu0 0
        %2629 = vmatmul.mubr.bf16.gmra.mrb[0].mxu0 %v2585
        %v2630 = vpop.f32.mrb[0].mxu0
        %v2631 = vadd.f32 %v2249, %v2630
        %v2632 = vpop.f32.mrb[0].mxu0
        %v2633 = vpop.f32.mrb[0].mxu0
        %v2634 = vadd.f32 %v2250, %v2633
        %v2635 = vpop.f32.mrb[0].mxu0
        %2636 = vmatprep.mubr.bf16.mxu0 0
        %2637 = vmatmul.mubr.bf16.gmra.mrb[0].mxu0 %v2588
        %v2638 = vpop.f32.mrb[0].mxu0
        %v2639 = vadd.f32 %v2251, %v2638
        %v2640 = vpop.f32.mrb[0].mxu0
        %v2641 = vpop.f32.mrb[0].mxu0
        %v2642 = vadd.f32 %v2252, %v2641
        %v2643 = vpop.f32.mrb[0].mxu0
        %2644 = vmatprep.mubr.bf16.mxu0 0
        %2645 = vmatmul.mubr.bf16.gmra.mrb[0].mxu0 %v2591
        %v2646 = vpop.f32.mrb[0].mxu0
        %v2647 = vadd.f32 %v2253, %v2646
        %v2648 = vpop.f32.mrb[0].mxu0
        %v2649 = vpop.f32.mrb[0].mxu0
        %v2650 = vadd.f32 %v2254, %v2649
        %v2651 = vpop.f32.mrb[0].mxu0
        %2652 = vmatprep.mubr.bf16.mxu0 0
        %2653 = vmatmul.mubr.bf16.gmra.mrb[0].mxu0 %v2594
        %v2654 = vpop.f32.mrb[0].mxu0
        %v2655 = vadd.f32 %v2255, %v2654
        %v2656 = vpop.f32.mrb[0].mxu0
        %v2657 = vpop.f32.mrb[0].mxu0
        %v2658 = vadd.f32 %v2256, %v2657
        %v2659 = vpop.f32.mrb[0].mxu0
        %2660 = vdwg.mxu0
        %v2661 = vsel %vm1166, %v2631, -inf
        %2662 = vmax.xlane.f32.xlu0 %v2661
        %v2663 = vpop.xlane.xlu0 %2662
        %v2664 = vsel %vm1166, %v2634, -inf
        %2665 = vmax.xlane.f32.xlu0 %v2664
        %v2666 = vpop.xlane.xlu0 %2665
        %v2667 = vsel %vm1166, %v2639, -inf
        %2668 = vmax.xlane.f32.xlu0 %v2667
        %v2669 = vpop.xlane.xlu0 %2668
        %v2670 = vsel %vm1166, %v2642, -inf
        %2671 = vmax.xlane.f32.xlu0 %v2670
        %v2672 = vpop.xlane.xlu0 %2671
        %v2673 = vsel %vm1166, %v2647, -inf
        %2674 = vmax.xlane.f32.xlu0 %v2673
        %v2675 = vpop.xlane.xlu0 %2674
        %v2676 = vsel %vm1166, %v2650, -inf
        %2677 = vmax.xlane.f32.xlu0 %v2676
        %v2678 = vpop.xlane.xlu0 %2677
        %v2679 = vsel %vm1166, %v2655, -inf
        %2680 = vmax.xlane.f32.xlu0 %v2679
        %v2681 = vpop.xlane.xlu0 %2680
        %v2682 = vsel %vm1166, %v2658, -inf
        %2683 = vmax.xlane.f32.xlu0 %v2682
        %v2684 = vpop.xlane.xlu0 %2683
        %v2685 = vsub.f32 %v2631, %v2663
        %v2686 = vsub.f32 %v2634, %v2666
        %v2687 = vsub.f32 %v2639, %v2669
        %v2688 = vsub.f32 %v2642, %v2672
        %v2689 = vsub.f32 %v2647, %v2675
        %v2690 = vsub.f32 %v2650, %v2678
        %v2691 = vsub.f32 %v2655, %v2681
        %v2692 = vsub.f32 %v2658, %v2684
        %v2693 = vmul.f32 %v2685, 1.442695
        %v2694 = vpow.pop %v2693
        %v2695 = vmul.f32 %v2686, 1.442695
        %v2696 = vpow.pop %v2695
        %v2697 = vmul.f32 %v2687, 1.442695
        %v2698 = vpow.pop %v2697
        %v2699 = vmul.f32 %v2688, 1.442695
        %v2700 = vpow.pop %v2699
        %v2701 = vmul.f32 %v2689, 1.442695
        %v2702 = vpow.pop %v2701
        %v2703 = vmul.f32 %v2690, 1.442695
        %v2704 = vpow.pop %v2703
        %v2705 = vmul.f32 %v2691, 1.442695
        %v2706 = vpow.pop %v2705
        %v2707 = vmul.f32 %v2692, 1.442695
        %v2708 = vpow.pop %v2707
        %v2709 = vsel %vm1166, %v2694, 0.0
        %2710 = vadd.xlane.f32.xlu0 %v2709
        %v2711 = vpop.xlane.xlu0 %2710
        %v2712 = vsel %vm1166, %v2696, 0.0
        %2713 = vadd.xlane.f32.xlu0 %v2712
        %v2714 = vpop.xlane.xlu0 %2713
        %v2715 = vsel %vm1166, %v2698, 0.0
        %2716 = vadd.xlane.f32.xlu0 %v2715
        %v2717 = vpop.xlane.xlu0 %2716
        %v2718 = vsel %vm1166, %v2700, 0.0
        %2719 = vadd.xlane.f32.xlu0 %v2718
        %v2720 = vpop.xlane.xlu0 %2719
        %v2721 = vsel %vm1166, %v2702, 0.0
        %2722 = vadd.xlane.f32.xlu0 %v2721
        %v2723 = vpop.xlane.xlu0 %2722
        %v2724 = vsel %vm1166, %v2704, 0.0
        %2725 = vadd.xlane.f32.xlu0 %v2724
        %v2726 = vpop.xlane.xlu0 %2725
        %v2727 = vsel %vm1166, %v2706, 0.0
        %2728 = vadd.xlane.f32.xlu0 %v2727
        %v2729 = vpop.xlane.xlu0 %2728
        %v2730 = vsel %vm1166, %v2708, 0.0
        %2731 = vadd.xlane.f32.xlu0 %v2730
        %v2732 = vpop.xlane.xlu0 %2731
        %v2733 = vrcp.pop %v2711
        %v2734 = vrcp.pop %v2714
        %v2735 = vrcp.pop %v2717
        %v2736 = vrcp.pop %v2720
        %v2737 = vrcp.pop %v2723
        %v2738 = vrcp.pop %v2726
        %v2739 = vrcp.pop %v2729
        %v2740 = vrcp.pop %v2732
        %v2741 = vmul.f32 %v2694, %v2733
        %v2742 = vmul.f32 %v2696, %v2734
        %v2743 = vmul.f32 %v2698, %v2735
        %v2744 = vmul.f32 %v2700, %v2736
        %v2745 = vmul.f32 %v2702, %v2737
        %v2746 = vmul.f32 %v2704, %v2738
        %v2747 = vmul.f32 %v2706, %v2739
        %v2748 = vmul.f32 %v2708, %v2740
        %v2749 = vpack.c.bf16 %v2742, %v2741
        %v2750 = vpack.c.bf16 %v2744, %v2743
        %v2751 = vpack.c.bf16 %v2746, %v2745
        %v2752 = vpack.c.bf16 %v2748, %v2747
        %2757 = vrot.lane.b32.xlu0 %v2310, 64
        %v2758 = vpop.permute.xlu0 %2757
        %2759 = vrot.lane.b32.xlu0 %v2311, 64
        %v2760 = vpop.permute.xlu0 %2759
        %2761 = vrot.lane.b32.xlu0 %v2312, 64
        %v2762 = vpop.permute.xlu0 %2761
        %2763 = vrot.lane.b32.xlu0 %v2313, 64
        %v2764 = vpop.permute.xlu0 %2763
        %v2770 = vsel %vm1166, %v2749, 0
        %v2773 = vsel %vm1166, %v2750, 0
        %v2776 = vsel %vm1166, %v2751, 0
        %v2779 = vsel %vm1166, %v2752, 0
        %2781 = vmatprep.subr.bf16.mxu0 0
        %2782 = vmatpush1.bf16.msra.mxu0 %v2758
        %2783 = vmatprep.subr.bf16.mxu0 0
        %2784 = vmatpush1.bf16.msra.mxu0 %v2760
        %2785 = vmatprep.subr.bf16.mxu0 0
        %2786 = vmatpush1.bf16.msra.mxu0 %v2762
        %2787 = vmatprep.subr.bf16.mxu0 0
        %2788 = vmatpush1.bf16.msra.mxu0 %v2764
        %2789 = vmatprep.subr.bf16.mxu0 0
        %2790 = vmatpush1.bf16.msra.mxu0 0
        %2791 = vmatprep.subr.bf16.mxu0 0
        %2792 = vmatpush1.bf16.msra.mxu0 0
        %2793 = vmatprep.subr.bf16.mxu0 0
        %2794 = vmatpush1.bf16.msra.mxu0 0
        %2795 = vmatprep.subr.bf16.mxu0 0
        %2796 = vmatpush1.bf16.msra.mxu0 0
        %2797 = vmatprep.subr.bf16.mxu0 0
        %2798 = vmatpush1.bf16.msra.mxu0 0
        %2799 = vmatprep.subr.bf16.mxu0 0
        %2800 = vmatpush1.bf16.msra.mxu0 0
        %2801 = vmatprep.subr.bf16.mxu0 0
        %2802 = vmatpush1.bf16.msra.mxu0 0
        %2803 = vmatprep.subr.bf16.mxu0 0
        %2804 = vmatpush1.bf16.msra.mxu0 0
        %2805 = vmatprep.subr.bf16.mxu0 0
        %2806 = vmatpush1.bf16.msra.mxu0 0
        %2807 = vmatprep.subr.bf16.mxu0 0
        %2808 = vmatpush1.bf16.msra.mxu0 0
        %2809 = vmatprep.subr.bf16.mxu0 0
        %2810 = vmatpush1.bf16.msra.mxu0 0
        %2811 = vmatprep.subr.bf16.mxu0 0
        %2812 = vmatpush1.bf16.msra.mxu0 0
        %2813 = vmatprep.mubr.bf16.mxu0 0
        %2814 = vmatmul.mubr.bf16.gmra.mrb[0].mxu0 %v2770
        %v2815 = vpop.f32.mrb[0].mxu0
        %v2816 = vadd.f32 0.0, %v2815
        %v2817 = vpop.f32.mrb[0].mxu0
        %v2818 = vpop.f32.mrb[0].mxu0
        %v2819 = vadd.f32 0.0, %v2818
        %v2820 = vpop.f32.mrb[0].mxu0
        %2821 = vmatprep.mubr.bf16.mxu0 0
        %2822 = vmatmul.mubr.bf16.gmra.mrb[0].mxu0 %v2773
        %v2823 = vpop.f32.mrb[0].mxu0
        %v2824 = vadd.f32 0.0, %v2823
        %v2825 = vpop.f32.mrb[0].mxu0
        %v2826 = vpop.f32.mrb[0].mxu0
        %v2827 = vadd.f32 0.0, %v2826
        %v2828 = vpop.f32.mrb[0].mxu0
        %2829 = vmatprep.mubr.bf16.mxu0 0
        %2830 = vmatmul.mubr.bf16.gmra.mrb[0].mxu0 %v2776
        %v2831 = vpop.f32.mrb[0].mxu0
        %v2832 = vadd.f32 0.0, %v2831
        %v2833 = vpop.f32.mrb[0].mxu0
        %v2834 = vpop.f32.mrb[0].mxu0
        %v2835 = vadd.f32 0.0, %v2834
        %v2836 = vpop.f32.mrb[0].mxu0
        %2837 = vmatprep.mubr.bf16.mxu0 0
        %2838 = vmatmul.mubr.bf16.gmra.mrb[0].mxu0 %v2779
        %v2839 = vpop.f32.mrb[0].mxu0
        %v2840 = vadd.f32 0.0, %v2839
        %v2841 = vpop.f32.mrb[0].mxu0
        %v2842 = vpop.f32.mrb[0].mxu0
        %v2843 = vadd.f32 0.0, %v2842
        %v2844 = vpop.f32.mrb[0].mxu0
        %2845 = vdwg.mxu0
        %v2846 = vadd.f32 %v2208, %v2816
        %v2847 = vadd.f32 %v2211, %v2819
        %v2848 = vadd.f32 %v2216, %v2824
        %v2849 = vadd.f32 %v2219, %v2827
        %v2850 = vadd.f32 %v2224, %v2832
        %v2851 = vadd.f32 %v2227, %v2835
        %v2852 = vadd.f32 %v2232, %v2840
        %v2853 = vadd.f32 %v2235, %v2843
        %s2854 = scalar_lea.vmem %s5, 3
        %v2855 = vld [vmem:[%s2854] sm:$0x1]
        %s2856 = scalar_lea.vmem [#allocation5], 96
        %v2857 = vld [vmem:[%s2856] sm:$0xf]
        %v2858 = vld [vmem:[%s2856 + $0x4] sm:$0xf]
        %v2859 = vld [vmem:[%s2856 + $0x8] sm:$0xf]
        %v2860 = vld [vmem:[%s2856 + $0xc] sm:$0xf]
        %v2861 = vld [vmem:[%s2856 + $0x10] sm:$0xf]
        %v2862 = vld [vmem:[%s2856 + $0x14] sm:$0xf]
        %v2863 = vld [vmem:[%s2856 + $0x18] sm:$0xf]
        %v2864 = vld [vmem:[%s2856 + $0x1c] sm:$0xf]
        %v2865 = vunpack.c.l.bf16 %v2857
        %v2866 = vunpack.c.l.bf16 %v2858
        %v2867 = vunpack.c.l.bf16 %v2859
        %v2868 = vunpack.c.l.bf16 %v2860
        %v2869 = vunpack.c.l.bf16 %v2861
        %v2870 = vunpack.c.l.bf16 %v2862
        %v2871 = vunpack.c.l.bf16 %v2863
        %v2872 = vunpack.c.l.bf16 %v2864
        %v2874 = vlaneseq
        %v2875 = vshrl.u32 %v2874, 7
        %v2876 = vsub.s32 0, %v2875
        %v2877 = vrot.slane %v2855, %v2876
        %v2879 = vmul.f32 %v921, %v2877
        %v2880 = vmul.f32 %v924, %v2877
        %v2881 = vmul.f32 %v929, %v2877
        %v2882 = vmul.f32 %v932, %v2877
        %v2883 = vmul.f32 %v937, %v2877
        %v2884 = vmul.f32 %v940, %v2877
        %v2885 = vmul.f32 %v945, %v2877
        %v2886 = vmul.f32 %v948, %v2877
        %v2887 = vmul.f32 %v953, %v2877
        %v2888 = vmul.f32 %v956, %v2877
        %v2889 = vmul.f32 %v961, %v2877
        %v2890 = vmul.f32 %v964, %v2877
        %v2891 = vmul.f32 %v969, %v2877
        %v2892 = vmul.f32 %v972, %v2877
        %v2893 = vmul.f32 %v977, %v2877
        %v2894 = vmul.f32 %v980, %v2877
        %v2895 = vpack.c.bf16 %v2880, %v2879
        %v2896 = vpack.c.bf16 %v2882, %v2881
        %v2897 = vpack.c.bf16 %v2884, %v2883
        %v2898 = vpack.c.bf16 %v2886, %v2885
        %v2899 = vpack.c.bf16 %v2888, %v2887
        %v2900 = vpack.c.bf16 %v2890, %v2889
        %v2901 = vpack.c.bf16 %v2892, %v2891
        %v2902 = vpack.c.bf16 %v2894, %v2893
        %2903 = vrot.lane.b32.xlu0 %v2877, 64
        %v2904 = vpop.permute.xlu0 %2903
        %v2906 = vmul.f32 %v921, %v2904
        %v2907 = vmul.f32 %v924, %v2904
        %v2908 = vmul.f32 %v929, %v2904
        %v2909 = vmul.f32 %v932, %v2904
        %v2910 = vmul.f32 %v937, %v2904
        %v2911 = vmul.f32 %v940, %v2904
        %v2912 = vmul.f32 %v945, %v2904
        %v2913 = vmul.f32 %v948, %v2904
        %v2914 = vmul.f32 %v953, %v2904
        %v2915 = vmul.f32 %v956, %v2904
        %v2916 = vmul.f32 %v961, %v2904
        %v2917 = vmul.f32 %v964, %v2904
        %v2918 = vmul.f32 %v969, %v2904
        %v2919 = vmul.f32 %v972, %v2904
        %v2920 = vmul.f32 %v977, %v2904
        %v2921 = vmul.f32 %v980, %v2904
        %v2922 = vpack.c.bf16 %v2907, %v2906
        %v2923 = vpack.c.bf16 %v2909, %v2908
        %v2924 = vpack.c.bf16 %v2911, %v2910
        %v2925 = vpack.c.bf16 %v2913, %v2912
        %v2926 = vpack.c.bf16 %v2915, %v2914
        %v2927 = vpack.c.bf16 %v2917, %v2916
        %v2928 = vpack.c.bf16 %v2919, %v2918
        %v2929 = vpack.c.bf16 %v2921, %v2920
        %v2931 = vsel %vm577, %v2895, 0
        %v2934 = vsel %vm577, %v2896, 0
        %v2937 = vsel %vm577, %v2897, 0
        %v2940 = vsel %vm577, %v2898, 0
        %2942 = vmatprep.subr.bf16.mxu0 0
        %2943 = vmatpush1.bf16.xpose.msra.mxu0 %v1090
        %2944 = vmatprep.subr.bf16.mxu0 0
        %2945 = vmatpush1.bf16.xpose.msra.mxu0 %v1093
        %2946 = vmatprep.subr.bf16.mxu0 0
        %2947 = vmatpush1.bf16.xpose.msra.mxu0 %v1096
        %2948 = vmatprep.subr.bf16.mxu0 0
        %2949 = vmatpush1.bf16.xpose.msra.mxu0 %v1099
        %2950 = vmatprep.subr.bf16.mxu0 0
        %2951 = vmatpush1.bf16.xpose.msra.mxu0 0
        %2952 = vmatprep.subr.bf16.mxu0 0
        %2953 = vmatpush1.bf16.xpose.msra.mxu0 0
        %2954 = vmatprep.subr.bf16.mxu0 0
        %2955 = vmatpush1.bf16.xpose.msra.mxu0 0
        %2956 = vmatprep.subr.bf16.mxu0 0
        %2957 = vmatpush1.bf16.xpose.msra.mxu0 0
        %2958 = vmatprep.subr.bf16.mxu0 0
        %2959 = vmatpush1.bf16.xpose.msra.mxu0 0
        %2960 = vmatprep.subr.bf16.mxu0 0
        %2961 = vmatpush1.bf16.xpose.msra.mxu0 0
        %2962 = vmatprep.subr.bf16.mxu0 0
        %2963 = vmatpush1.bf16.xpose.msra.mxu0 0
        %2964 = vmatprep.subr.bf16.mxu0 0
        %2965 = vmatpush1.bf16.xpose.msra.mxu0 0
        %2966 = vmatprep.subr.bf16.mxu0 0
        %2967 = vmatpush1.bf16.xpose.msra.mxu0 0
        %2968 = vmatprep.subr.bf16.mxu0 0
        %2969 = vmatpush1.bf16.xpose.msra.mxu0 0
        %2970 = vmatprep.subr.bf16.mxu0 0
        %2971 = vmatpush1.bf16.xpose.msra.mxu0 0
        %2972 = vmatprep.subr.bf16.mxu0 0
        %2973 = vmatpush1.bf16.xpose.msra.mxu0 0
        %2974 = vmatprep.mubr.bf16.mxu0 0
        %2975 = vmatmul.mubr.bf16.gmra.mrb[0].mxu0 %v2931
        %v2976 = vpop.f32.mrb[0].mxu0
        %v2977 = vadd.f32 %v2865, %v2976
        %v2978 = vpop.f32.mrb[0].mxu0
        %v2979 = vpop.f32.mrb[0].mxu0
        %v2980 = vadd.f32 %v2866, %v2979
        %v2981 = vpop.f32.mrb[0].mxu0
        %2982 = vmatprep.mubr.bf16.mxu0 0
        %2983 = vmatmul.mubr.bf16.gmra.mrb[0].mxu0 %v2934
        %v2984 = vpop.f32.mrb[0].mxu0
        %v2985 = vadd.f32 %v2867, %v2984
        %v2986 = vpop.f32.mrb[0].mxu0
        %v2987 = vpop.f32.mrb[0].mxu0
        %v2988 = vadd.f32 %v2868, %v2987
        %v2989 = vpop.f32.mrb[0].mxu0
        %2990 = vmatprep.mubr.bf16.mxu0 0
        %2991 = vmatmul.mubr.bf16.gmra.mrb[0].mxu0 %v2937
        %v2992 = vpop.f32.mrb[0].mxu0
        %v2993 = vadd.f32 %v2869, %v2992
        %v2994 = vpop.f32.mrb[0].mxu0
        %v2995 = vpop.f32.mrb[0].mxu0
        %v2996 = vadd.f32 %v2870, %v2995
        %v2997 = vpop.f32.mrb[0].mxu0
        %2998 = vmatprep.mubr.bf16.mxu0 0
        %2999 = vmatmul.mubr.bf16.gmra.mrb[0].mxu0 %v2940
        %v3000 = vpop.f32.mrb[0].mxu0
        %v3001 = vadd.f32 %v2871, %v3000
        %v3002 = vpop.f32.mrb[0].mxu0
        %v3003 = vpop.f32.mrb[0].mxu0
        %v3004 = vadd.f32 %v2872, %v3003
        %v3005 = vpop.f32.mrb[0].mxu0
        %3006 = vdwg.mxu0
        %v3007 = vsel %vm1166, %v2977, -inf
        %3008 = vmax.xlane.f32.xlu0 %v3007
        %v3009 = vpop.xlane.xlu0 %3008
        %v3010 = vsel %vm1166, %v2980, -inf
        %3011 = vmax.xlane.f32.xlu0 %v3010
        %v3012 = vpop.xlane.xlu0 %3011
        %v3013 = vsel %vm1166, %v2985, -inf
        %3014 = vmax.xlane.f32.xlu0 %v3013
        %v3015 = vpop.xlane.xlu0 %3014
        %v3016 = vsel %vm1166, %v2988, -inf
        %3017 = vmax.xlane.f32.xlu0 %v3016
        %v3018 = vpop.xlane.xlu0 %3017
        %v3019 = vsel %vm1166, %v2993, -inf
        %3020 = vmax.xlane.f32.xlu0 %v3019
        %v3021 = vpop.xlane.xlu0 %3020
        %v3022 = vsel %vm1166, %v2996, -inf
        %3023 = vmax.xlane.f32.xlu0 %v3022
        %v3024 = vpop.xlane.xlu0 %3023
        %v3025 = vsel %vm1166, %v3001, -inf
        %3026 = vmax.xlane.f32.xlu0 %v3025
        %v3027 = vpop.xlane.xlu0 %3026
        %v3028 = vsel %vm1166, %v3004, -inf
        %3029 = vmax.xlane.f32.xlu0 %v3028
        %v3030 = vpop.xlane.xlu0 %3029
        %v3031 = vsub.f32 %v2977, %v3009
        %v3032 = vsub.f32 %v2980, %v3012
        %v3033 = vsub.f32 %v2985, %v3015
        %v3034 = vsub.f32 %v2988, %v3018
        %v3035 = vsub.f32 %v2993, %v3021
        %v3036 = vsub.f32 %v2996, %v3024
        %v3037 = vsub.f32 %v3001, %v3027
        %v3038 = vsub.f32 %v3004, %v3030
        %v3039 = vmul.f32 %v3031, 1.442695
        %v3040 = vpow.pop %v3039
        %v3041 = vmul.f32 %v3032, 1.442695
        %v3042 = vpow.pop %v3041
        %v3043 = vmul.f32 %v3033, 1.442695
        %v3044 = vpow.pop %v3043
        %v3045 = vmul.f32 %v3034, 1.442695
        %v3046 = vpow.pop %v3045
        %v3047 = vmul.f32 %v3035, 1.442695
        %v3048 = vpow.pop %v3047
        %v3049 = vmul.f32 %v3036, 1.442695
        %v3050 = vpow.pop %v3049
        %v3051 = vmul.f32 %v3037, 1.442695
        %v3052 = vpow.pop %v3051
        %v3053 = vmul.f32 %v3038, 1.442695
        %v3054 = vpow.pop %v3053
        %v3055 = vsel %vm1166, %v3040, 0.0
        %3056 = vadd.xlane.f32.xlu0 %v3055
        %v3057 = vpop.xlane.xlu0 %3056
        %v3058 = vsel %vm1166, %v3042, 0.0
        %3059 = vadd.xlane.f32.xlu0 %v3058
        %v3060 = vpop.xlane.xlu0 %3059
        %v3061 = vsel %vm1166, %v3044, 0.0
        %3062 = vadd.xlane.f32.xlu0 %v3061
        %v3063 = vpop.xlane.xlu0 %3062
        %v3064 = vsel %vm1166, %v3046, 0.0
        %3065 = vadd.xlane.f32.xlu0 %v3064
        %v3066 = vpop.xlane.xlu0 %3065
        %v3067 = vsel %vm1166, %v3048, 0.0
        %3068 = vadd.xlane.f32.xlu0 %v3067
        %v3069 = vpop.xlane.xlu0 %3068
        %v3070 = vsel %vm1166, %v3050, 0.0
        %3071 = vadd.xlane.f32.xlu0 %v3070
        %v3072 = vpop.xlane.xlu0 %3071
        %v3073 = vsel %vm1166, %v3052, 0.0
        %3074 = vadd.xlane.f32.xlu0 %v3073
        %v3075 = vpop.xlane.xlu0 %3074
        %v3076 = vsel %vm1166, %v3054, 0.0
        %3077 = vadd.xlane.f32.xlu0 %v3076
        %v3078 = vpop.xlane.xlu0 %3077
        %v3079 = vrcp.pop %v3057
        %v3080 = vrcp.pop %v3060
        %v3081 = vrcp.pop %v3063
        %v3082 = vrcp.pop %v3066
        %v3083 = vrcp.pop %v3069
        %v3084 = vrcp.pop %v3072
        %v3085 = vrcp.pop %v3075
        %v3086 = vrcp.pop %v3078
        %v3087 = vmul.f32 %v3040, %v3079
        %v3088 = vmul.f32 %v3042, %v3080
        %v3089 = vmul.f32 %v3044, %v3081
        %v3090 = vmul.f32 %v3046, %v3082
        %v3091 = vmul.f32 %v3048, %v3083
        %v3092 = vmul.f32 %v3050, %v3084
        %v3093 = vmul.f32 %v3052, %v3085
        %v3094 = vmul.f32 %v3054, %v3086
        %v3095 = vpack.c.bf16 %v3088, %v3087
        %v3096 = vpack.c.bf16 %v3090, %v3089
        %v3097 = vpack.c.bf16 %v3092, %v3091
        %v3098 = vpack.c.bf16 %v3094, %v3093
        %3103 = vrot.lane.b32.xlu0 %v2922, 64
        %v3104 = vpop.permute.xlu0 %3103
        %3105 = vrot.lane.b32.xlu0 %v2923, 64
        %v3106 = vpop.permute.xlu0 %3105
        %3107 = vrot.lane.b32.xlu0 %v2924, 64
        %v3108 = vpop.permute.xlu0 %3107
        %3109 = vrot.lane.b32.xlu0 %v2925, 64
        %v3110 = vpop.permute.xlu0 %3109
        %v3116 = vsel %vm1166, %v3095, 0
        %v3119 = vsel %vm1166, %v3096, 0
        %v3122 = vsel %vm1166, %v3097, 0
        %v3125 = vsel %vm1166, %v3098, 0
        %3127 = vmatprep.subr.bf16.mxu0 0
        %3128 = vmatpush1.bf16.msra.mxu0 %v3104
        %3129 = vmatprep.subr.bf16.mxu0 0
        %3130 = vmatpush1.bf16.msra.mxu0 %v3106
        %3131 = vmatprep.subr.bf16.mxu0 0
        %3132 = vmatpush1.bf16.msra.mxu0 %v3108
        %3133 = vmatprep.subr.bf16.mxu0 0
        %3134 = vmatpush1.bf16.msra.mxu0 %v3110
        %3135 = vmatprep.subr.bf16.mxu0 0
        %3136 = vmatpush1.bf16.msra.mxu0 0
        %3137 = vmatprep.subr.bf16.mxu0 0
        %3138 = vmatpush1.bf16.msra.mxu0 0
        %3139 = vmatprep.subr.bf16.mxu0 0
        %3140 = vmatpush1.bf16.msra.mxu0 0
        %3141 = vmatprep.subr.bf16.mxu0 0
        %3142 = vmatpush1.bf16.msra.mxu0 0
        %3143 = vmatprep.subr.bf16.mxu0 0
        %3144 = vmatpush1.bf16.msra.mxu0 0
        %3145 = vmatprep.subr.bf16.mxu0 0
        %3146 = vmatpush1.bf16.msra.mxu0 0
        %3147 = vmatprep.subr.bf16.mxu0 0
        %3148 = vmatpush1.bf16.msra.mxu0 0
        %3149 = vmatprep.subr.bf16.mxu0 0
        %3150 = vmatpush1.bf16.msra.mxu0 0
        %3151 = vmatprep.subr.bf16.mxu0 0
        %3152 = vmatpush1.bf16.msra.mxu0 0
        %3153 = vmatprep.subr.bf16.mxu0 0
        %3154 = vmatpush1.bf16.msra.mxu0 0
        %3155 = vmatprep.subr.bf16.mxu0 0
        %3156 = vmatpush1.bf16.msra.mxu0 0
        %3157 = vmatprep.subr.bf16.mxu0 0
        %3158 = vmatpush1.bf16.msra.mxu0 0
        %3159 = vmatprep.mubr.bf16.mxu0 0
        %3160 = vmatmul.mubr.bf16.gmra.mrb[0].mxu0 %v3116
        %v3161 = vpop.f32.mrb[0].mxu0
        %v3162 = vadd.f32 0.0, %v3161
        %v3163 = vpop.f32.mrb[0].mxu0
        %v3164 = vpop.f32.mrb[0].mxu0
        %v3165 = vadd.f32 0.0, %v3164
        %v3166 = vpop.f32.mrb[0].mxu0
        %3167 = vmatprep.mubr.bf16.mxu0 0
        %3168 = vmatmul.mubr.bf16.gmra.mrb[0].mxu0 %v3119
        %v3169 = vpop.f32.mrb[0].mxu0
        %v3170 = vadd.f32 0.0, %v3169
        %v3171 = vpop.f32.mrb[0].mxu0
        %v3172 = vpop.f32.mrb[0].mxu0
        %v3173 = vadd.f32 0.0, %v3172
        %v3174 = vpop.f32.mrb[0].mxu0
        %3175 = vmatprep.mubr.bf16.mxu0 0
        %3176 = vmatmul.mubr.bf16.gmra.mrb[0].mxu0 %v3122
        %v3177 = vpop.f32.mrb[0].mxu0
        %v3178 = vadd.f32 0.0, %v3177
        %v3179 = vpop.f32.mrb[0].mxu0
        %v3180 = vpop.f32.mrb[0].mxu0
        %v3181 = vadd.f32 0.0, %v3180
        %v3182 = vpop.f32.mrb[0].mxu0
        %3183 = vmatprep.mubr.bf16.mxu0 0
        %3184 = vmatmul.mubr.bf16.gmra.mrb[0].mxu0 %v3125
        %v3185 = vpop.f32.mrb[0].mxu0
        %v3186 = vadd.f32 0.0, %v3185
        %v3187 = vpop.f32.mrb[0].mxu0
        %v3188 = vpop.f32.mrb[0].mxu0
        %v3189 = vadd.f32 0.0, %v3188
        %v3190 = vpop.f32.mrb[0].mxu0
        %3191 = vdwg.mxu0
        %v3192 = vadd.f32 %v2576, %v3162
        %v3193 = vadd.f32 %v2577, %v3165
        %v3194 = vadd.f32 %v2578, %v3170
        %v3195 = vadd.f32 %v2579, %v3173
        %v3196 = vadd.f32 %v2580, %v3178
        %v3197 = vadd.f32 %v2581, %v3181
        %v3198 = vadd.f32 %v2582, %v3186
        %v3199 = vadd.f32 %v2583, %v3189
        %v3201 = vsel %vm577, %v2899, 0
        %v3204 = vsel %vm577, %v2900, 0
        %v3207 = vsel %vm577, %v2901, 0
        %v3210 = vsel %vm577, %v2902, 0
        %3212 = vmatprep.subr.bf16.mxu0 0
        %3213 = vmatpush1.bf16.xpose.msra.mxu0 %v1284
        %3214 = vmatprep.subr.bf16.mxu0 0
        %3215 = vmatpush1.bf16.xpose.msra.mxu0 %v1287
        %3216 = vmatprep.subr.bf16.mxu0 0
        %3217 = vmatpush1.bf16.xpose.msra.mxu0 %v1290
        %3218 = vmatprep.subr.bf16.mxu0 0
        %3219 = vmatpush1.bf16.xpose.msra.mxu0 %v1293
        %3220 = vmatprep.subr.bf16.mxu0 0
        %3221 = vmatpush1.bf16.xpose.msra.mxu0 0
        %3222 = vmatprep.subr.bf16.mxu0 0
        %3223 = vmatpush1.bf16.xpose.msra.mxu0 0
        %3224 = vmatprep.subr.bf16.mxu0 0
        %3225 = vmatpush1.bf16.xpose.msra.mxu0 0
        %3226 = vmatprep.subr.bf16.mxu0 0
        %3227 = vmatpush1.bf16.xpose.msra.mxu0 0
        %3228 = vmatprep.subr.bf16.mxu0 0
        %3229 = vmatpush1.bf16.xpose.msra.mxu0 0
        %3230 = vmatprep.subr.bf16.mxu0 0
        %3231 = vmatpush1.bf16.xpose.msra.mxu0 0
        %3232 = vmatprep.subr.bf16.mxu0 0
        %3233 = vmatpush1.bf16.xpose.msra.mxu0 0
        %3234 = vmatprep.subr.bf16.mxu0 0
        %3235 = vmatpush1.bf16.xpose.msra.mxu0 0
        %3236 = vmatprep.subr.bf16.mxu0 0
        %3237 = vmatpush1.bf16.xpose.msra.mxu0 0
        %3238 = vmatprep.subr.bf16.mxu0 0
        %3239 = vmatpush1.bf16.xpose.msra.mxu0 0
        %3240 = vmatprep.subr.bf16.mxu0 0
        %3241 = vmatpush1.bf16.xpose.msra.mxu0 0
        %3242 = vmatprep.subr.bf16.mxu0 0
        %3243 = vmatpush1.bf16.xpose.msra.mxu0 0
        %3244 = vmatprep.mubr.bf16.mxu0 0
        %3245 = vmatmul.mubr.bf16.gmra.mrb[0].mxu0 %v3201
        %v3246 = vpop.f32.mrb[0].mxu0
        %v3247 = vadd.f32 %v2865, %v3246
        %v3248 = vpop.f32.mrb[0].mxu0
        %v3249 = vpop.f32.mrb[0].mxu0
        %v3250 = vadd.f32 %v2866, %v3249
        %v3251 = vpop.f32.mrb[0].mxu0
        %3252 = vmatprep.mubr.bf16.mxu0 0
        %3253 = vmatmul.mubr.bf16.gmra.mrb[0].mxu0 %v3204
        %v3254 = vpop.f32.mrb[0].mxu0
        %v3255 = vadd.f32 %v2867, %v3254
        %v3256 = vpop.f32.mrb[0].mxu0
        %v3257 = vpop.f32.mrb[0].mxu0
        %v3258 = vadd.f32 %v2868, %v3257
        %v3259 = vpop.f32.mrb[0].mxu0
        %3260 = vmatprep.mubr.bf16.mxu0 0
        %3261 = vmatmul.mubr.bf16.gmra.mrb[0].mxu0 %v3207
        %v3262 = vpop.f32.mrb[0].mxu0
        %v3263 = vadd.f32 %v2869, %v3262
        %v3264 = vpop.f32.mrb[0].mxu0
        %v3265 = vpop.f32.mrb[0].mxu0
        %v3266 = vadd.f32 %v2870, %v3265
        %v3267 = vpop.f32.mrb[0].mxu0
        %3268 = vmatprep.mubr.bf16.mxu0 0
        %3269 = vmatmul.mubr.bf16.gmra.mrb[0].mxu0 %v3210
        %v3270 = vpop.f32.mrb[0].mxu0
        %v3271 = vadd.f32 %v2871, %v3270
        %v3272 = vpop.f32.mrb[0].mxu0
        %v3273 = vpop.f32.mrb[0].mxu0
        %v3274 = vadd.f32 %v2872, %v3273
        %v3275 = vpop.f32.mrb[0].mxu0
        %3276 = vdwg.mxu0
        %v3277 = vsel %vm1166, %v3247, -inf
        %3278 = vmax.xlane.f32.xlu0 %v3277
        %v3279 = vpop.xlane.xlu0 %3278
        %v3280 = vsel %vm1166, %v3250, -inf
        %3281 = vmax.xlane.f32.xlu0 %v3280
        %v3282 = vpop.xlane.xlu0 %3281
        %v3283 = vsel %vm1166, %v3255, -inf
        %3284 = vmax.xlane.f32.xlu0 %v3283
        %v3285 = vpop.xlane.xlu0 %3284
        %v3286 = vsel %vm1166, %v3258, -inf
        %3287 = vmax.xlane.f32.xlu0 %v3286
        %v3288 = vpop.xlane.xlu0 %3287
        %v3289 = vsel %vm1166, %v3263, -inf
        %3290 = vmax.xlane.f32.xlu0 %v3289
        %v3291 = vpop.xlane.xlu0 %3290
        %v3292 = vsel %vm1166, %v3266, -inf
        %3293 = vmax.xlane.f32.xlu0 %v3292
        %v3294 = vpop.xlane.xlu0 %3293
        %v3295 = vsel %vm1166, %v3271, -inf
        %3296 = vmax.xlane.f32.xlu0 %v3295
        %v3297 = vpop.xlane.xlu0 %3296
        %v3298 = vsel %vm1166, %v3274, -inf
        %3299 = vmax.xlane.f32.xlu0 %v3298
        %v3300 = vpop.xlane.xlu0 %3299
        %v3301 = vsub.f32 %v3247, %v3279
        %v3302 = vsub.f32 %v3250, %v3282
        %v3303 = vsub.f32 %v3255, %v3285
        %v3304 = vsub.f32 %v3258, %v3288
        %v3305 = vsub.f32 %v3263, %v3291
        %v3306 = vsub.f32 %v3266, %v3294
        %v3307 = vsub.f32 %v3271, %v3297
        %v3308 = vsub.f32 %v3274, %v3300
        %v3309 = vmul.f32 %v3301, 1.442695
        %v3310 = vpow.pop %v3309
        %v3311 = vmul.f32 %v3302, 1.442695
        %v3312 = vpow.pop %v3311
        %v3313 = vmul.f32 %v3303, 1.442695
        %v3314 = vpow.pop %v3313
        %v3315 = vmul.f32 %v3304, 1.442695
        %v3316 = vpow.pop %v3315
        %v3317 = vmul.f32 %v3305, 1.442695
        %v3318 = vpow.pop %v3317
        %v3319 = vmul.f32 %v3306, 1.442695
        %v3320 = vpow.pop %v3319
        %v3321 = vmul.f32 %v3307, 1.442695
        %v3322 = vpow.pop %v3321
        %v3323 = vmul.f32 %v3308, 1.442695
        %v3324 = vpow.pop %v3323
        %v3325 = vsel %vm1166, %v3310, 0.0
        %3326 = vadd.xlane.f32.xlu0 %v3325
        %v3327 = vpop.xlane.xlu0 %3326
        %v3328 = vsel %vm1166, %v3312, 0.0
        %3329 = vadd.xlane.f32.xlu0 %v3328
        %v3330 = vpop.xlane.xlu0 %3329
        %v3331 = vsel %vm1166, %v3314, 0.0
        %3332 = vadd.xlane.f32.xlu0 %v3331
        %v3333 = vpop.xlane.xlu0 %3332
        %v3334 = vsel %vm1166, %v3316, 0.0
        %3335 = vadd.xlane.f32.xlu0 %v3334
        %v3336 = vpop.xlane.xlu0 %3335
        %v3337 = vsel %vm1166, %v3318, 0.0
        %3338 = vadd.xlane.f32.xlu0 %v3337
        %v3339 = vpop.xlane.xlu0 %3338
        %v3340 = vsel %vm1166, %v3320, 0.0
        %3341 = vadd.xlane.f32.xlu0 %v3340
        %v3342 = vpop.xlane.xlu0 %3341
        %v3343 = vsel %vm1166, %v3322, 0.0
        %3344 = vadd.xlane.f32.xlu0 %v3343
        %v3345 = vpop.xlane.xlu0 %3344
        %v3346 = vsel %vm1166, %v3324, 0.0
        %3347 = vadd.xlane.f32.xlu0 %v3346
        %v3348 = vpop.xlane.xlu0 %3347
        %v3349 = vrcp.pop %v3327
        %v3350 = vrcp.pop %v3330
        %v3351 = vrcp.pop %v3333
        %v3352 = vrcp.pop %v3336
        %v3353 = vrcp.pop %v3339
        %v3354 = vrcp.pop %v3342
        %v3355 = vrcp.pop %v3345
        %v3356 = vrcp.pop %v3348
        %v3357 = vmul.f32 %v3310, %v3349
        %v3358 = vmul.f32 %v3312, %v3350
        %v3359 = vmul.f32 %v3314, %v3351
        %v3360 = vmul.f32 %v3316, %v3352
        %v3361 = vmul.f32 %v3318, %v3353
        %v3362 = vmul.f32 %v3320, %v3354
        %v3363 = vmul.f32 %v3322, %v3355
        %v3364 = vmul.f32 %v3324, %v3356
        %v3365 = vpack.c.bf16 %v3358, %v3357
        %v3366 = vpack.c.bf16 %v3360, %v3359
        %v3367 = vpack.c.bf16 %v3362, %v3361
        %v3368 = vpack.c.bf16 %v3364, %v3363
        %3373 = vrot.lane.b32.xlu0 %v2926, 64
        %v3374 = vpop.permute.xlu0 %3373
        %3375 = vrot.lane.b32.xlu0 %v2927, 64
        %v3376 = vpop.permute.xlu0 %3375
        %3377 = vrot.lane.b32.xlu0 %v2928, 64
        %v3378 = vpop.permute.xlu0 %3377
        %3379 = vrot.lane.b32.xlu0 %v2929, 64
        %v3380 = vpop.permute.xlu0 %3379
        %v3386 = vsel %vm1166, %v3365, 0
        %v3389 = vsel %vm1166, %v3366, 0
        %v3392 = vsel %vm1166, %v3367, 0
        %v3395 = vsel %vm1166, %v3368, 0
        %3397 = vmatprep.subr.bf16.mxu0 0
        %3398 = vmatpush1.bf16.msra.mxu0 %v3374
        %3399 = vmatprep.subr.bf16.mxu0 0
        %3400 = vmatpush1.bf16.msra.mxu0 %v3376
        %3401 = vmatprep.subr.bf16.mxu0 0
        %3402 = vmatpush1.bf16.msra.mxu0 %v3378
        %3403 = vmatprep.subr.bf16.mxu0 0
        %3404 = vmatpush1.bf16.msra.mxu0 %v3380
        %3405 = vmatprep.subr.bf16.mxu0 0
        %3406 = vmatpush1.bf16.msra.mxu0 0
        %3407 = vmatprep.subr.bf16.mxu0 0
        %3408 = vmatpush1.bf16.msra.mxu0 0
        %3409 = vmatprep.subr.bf16.mxu0 0
        %3410 = vmatpush1.bf16.msra.mxu0 0
        %3411 = vmatprep.subr.bf16.mxu0 0
        %3412 = vmatpush1.bf16.msra.mxu0 0
        %3413 = vmatprep.subr.bf16.mxu0 0
        %3414 = vmatpush1.bf16.msra.mxu0 0
        %3415 = vmatprep.subr.bf16.mxu0 0
        %3416 = vmatpush1.bf16.msra.mxu0 0
        %3417 = vmatprep.subr.bf16.mxu0 0
        %3418 = vmatpush1.bf16.msra.mxu0 0
        %3419 = vmatprep.subr.bf16.mxu0 0
        %3420 = vmatpush1.bf16.msra.mxu0 0
        %3421 = vmatprep.subr.bf16.mxu0 0
        %3422 = vmatpush1.bf16.msra.mxu0 0
        %3423 = vmatprep.subr.bf16.mxu0 0
        %3424 = vmatpush1.bf16.msra.mxu0 0
        %3425 = vmatprep.subr.bf16.mxu0 0
        %3426 = vmatpush1.bf16.msra.mxu0 0
        %3427 = vmatprep.subr.bf16.mxu0 0
        %3428 = vmatpush1.bf16.msra.mxu0 0
        %3429 = vmatprep.mubr.bf16.mxu0 0
        %3430 = vmatmul.mubr.bf16.gmra.mrb[0].mxu0 %v3386
        %v3431 = vpop.f32.mrb[0].mxu0
        %v3432 = vadd.f32 0.0, %v3431
        %v3433 = vpop.f32.mrb[0].mxu0
        %v3434 = vpop.f32.mrb[0].mxu0
        %v3435 = vadd.f32 0.0, %v3434
        %v3436 = vpop.f32.mrb[0].mxu0
        %3437 = vmatprep.mubr.bf16.mxu0 0
        %3438 = vmatmul.mubr.bf16.gmra.mrb[0].mxu0 %v3389
        %v3439 = vpop.f32.mrb[0].mxu0
        %v3440 = vadd.f32 0.0, %v3439
        %v3441 = vpop.f32.mrb[0].mxu0
        %v3442 = vpop.f32.mrb[0].mxu0
        %v3443 = vadd.f32 0.0, %v3442
        %v3444 = vpop.f32.mrb[0].mxu0
        %3445 = vmatprep.mubr.bf16.mxu0 0
        %3446 = vmatmul.mubr.bf16.gmra.mrb[0].mxu0 %v3392
        %v3447 = vpop.f32.mrb[0].mxu0
        %v3448 = vadd.f32 0.0, %v3447
        %v3449 = vpop.f32.mrb[0].mxu0
        %v3450 = vpop.f32.mrb[0].mxu0
        %v3451 = vadd.f32 0.0, %v3450
        %v3452 = vpop.f32.mrb[0].mxu0
        %3453 = vmatprep.mubr.bf16.mxu0 0
        %3454 = vmatmul.mubr.bf16.gmra.mrb[0].mxu0 %v3395
        %v3455 = vpop.f32.mrb[0].mxu0
        %v3456 = vadd.f32 0.0, %v3455
        %v3457 = vpop.f32.mrb[0].mxu0
        %v3458 = vpop.f32.mrb[0].mxu0
        %v3459 = vadd.f32 0.0, %v3458
        %v3460 = vpop.f32.mrb[0].mxu0
        %3461 = vdwg.mxu0
        %v3462 = vadd.f32 %v2846, %v3432
        %v3463 = vadd.f32 %v2847, %v3435
        %v3464 = vadd.f32 %v2848, %v3440
        %v3465 = vadd.f32 %v2849, %v3443
        %v3466 = vadd.f32 %v2850, %v3448
        %v3467 = vadd.f32 %v2851, %v3451
        %v3468 = vadd.f32 %v2852, %v3456
        %v3469 = vadd.f32 %v2853, %v3459
        %v3470 = vpack.c.bf16 %v3193, %v3192
        %v3471 = vpack.c.bf16 %v3195, %v3194
        %v3472 = vpack.c.bf16 %v3197, %v3196
        %v3473 = vpack.c.bf16 %v3199, %v3198
        %v3474 = vpack.c.bf16 %v3463, %v3462
        %v3475 = vpack.c.bf16 %v3465, %v3464
        %v3476 = vpack.c.bf16 %v3467, %v3466
        %v3477 = vpack.c.bf16 %v3469, %v3468
        %v3478 = vld [vmem:[%s7] sm:$0xf]
        %v3479 = vld [vmem:[%s7 + $0x4] sm:$0xf]
        %v3480 = vld [vmem:[%s7 + $0x8] sm:$0xf]
        %v3481 = vld [vmem:[%s7 + $0xc] sm:$0xf]
        %v3482 = vld [vmem:[%s8] sm:$0x1]
        %v3484 = vlaneseq
        %v3485 = vshrl.u32 %v3484, 7
        %v3486 = vsub.s32 0, %v3485
        %v3487 = vrot.slane %v3482, %v3486
        %v3493 = vunpack.c.l.b16 %v3478
        %v3494 = vunpack.c.l.b16 %v3479
        %v3495 = vunpack.c.l.b16 %v3480
        %v3496 = vunpack.c.l.b16 %v3481
        %v3497 = vpack.c.b16 %v3494, %v3493
        %v3498 = vpack.c.b16 %v3496, %v3495
        %v3502 = vsel %vm577, %v3470, 0
        %v3505 = vsel %vm577, %v3471, 0
        %v3508 = vsel %vm577, %v3472, 0
        %v3511 = vsel %vm577, %v3473, 0
        %v3514 = vsel %vm577, %v3474, 0
        %v3517 = vsel %vm577, %v3475, 0
        %v3520 = vsel %vm577, %v3476, 0
        %v3523 = vsel %vm577, %v3477, 0
        %3525 = vmatprep.subr.bf16.mxu0 0
        %3526 = vmatpush1.bf16.msra.mxu0 %v3497
        %3527 = vmatprep.subr.bf16.mxu0 0
        %3528 = vmatpush1.bf16.msra.mxu0 %v3498
        %3529 = vmatprep.subr.bf16.mxu0 0
        %3530 = vmatpush1.bf16.msra.mxu0 0
        %3531 = vmatprep.subr.bf16.mxu0 0
        %3532 = vmatpush1.bf16.msra.mxu0 0
        %3533 = vmatprep.subr.bf16.mxu0 0
        %3534 = vmatpush1.bf16.msra.mxu0 0
        %3535 = vmatprep.subr.bf16.mxu0 0
        %3536 = vmatpush1.bf16.msra.mxu0 0
        %3537 = vmatprep.subr.bf16.mxu0 0
        %3538 = vmatpush1.bf16.msra.mxu0 0
        %3539 = vmatprep.subr.bf16.mxu0 0
        %3540 = vmatpush1.bf16.msra.mxu0 0
        %3541 = vmatprep.subr.bf16.mxu0 0
        %3542 = vmatpush1.bf16.msra.mxu0 0
        %3543 = vmatprep.subr.bf16.mxu0 0
        %3544 = vmatpush1.bf16.msra.mxu0 0
        %3545 = vmatprep.subr.bf16.mxu0 0
        %3546 = vmatpush1.bf16.msra.mxu0 0
        %3547 = vmatprep.subr.bf16.mxu0 0
        %3548 = vmatpush1.bf16.msra.mxu0 0
        %3549 = vmatprep.subr.bf16.mxu0 0
        %3550 = vmatpush1.bf16.msra.mxu0 0
        %3551 = vmatprep.subr.bf16.mxu0 0
        %3552 = vmatpush1.bf16.msra.mxu0 0
        %3553 = vmatprep.subr.bf16.mxu0 0
        %3554 = vmatpush1.bf16.msra.mxu0 0
        %3555 = vmatprep.subr.bf16.mxu0 0
        %3556 = vmatpush1.bf16.msra.mxu0 0
        %3557 = vmatprep.mubr.bf16.mxu0 0
        %3558 = vmatmul.mubr.bf16.gmra.mrb[0].mxu0 %v3502
        %v3559 = vpop.f32.mrb[0].mxu0
        %v3560 = vadd.f32 %v3487, %v3559
        %v3561 = vpop.f32.mrb[0].mxu0
        %v3562 = vpop.f32.mrb[0].mxu0
        %v3563 = vadd.f32 %v3487, %v3562
        %v3564 = vpop.f32.mrb[0].mxu0
        %3565 = vmatprep.mubr.bf16.mxu0 0
        %3566 = vmatmul.mubr.bf16.gmra.mrb[0].mxu0 %v3505
        %v3567 = vpop.f32.mrb[0].mxu0
        %v3568 = vadd.f32 %v3487, %v3567
        %v3569 = vpop.f32.mrb[0].mxu0
        %v3570 = vpop.f32.mrb[0].mxu0
        %v3571 = vadd.f32 %v3487, %v3570
        %v3572 = vpop.f32.mrb[0].mxu0
        %3573 = vmatprep.mubr.bf16.mxu0 0
        %3574 = vmatmul.mubr.bf16.gmra.mrb[0].mxu0 %v3508
        %v3575 = vpop.f32.mrb[0].mxu0
        %v3576 = vadd.f32 %v3487, %v3575
        %v3577 = vpop.f32.mrb[0].mxu0
        %v3578 = vpop.f32.mrb[0].mxu0
        %v3579 = vadd.f32 %v3487, %v3578
        %v3580 = vpop.f32.mrb[0].mxu0
        %3581 = vmatprep.mubr.bf16.mxu0 0
        %3582 = vmatmul.mubr.bf16.gmra.mrb[0].mxu0 %v3511
        %v3583 = vpop.f32.mrb[0].mxu0
        %v3584 = vadd.f32 %v3487, %v3583
        %v3585 = vpop.f32.mrb[0].mxu0
        %v3586 = vpop.f32.mrb[0].mxu0
        %v3587 = vadd.f32 %v3487, %v3586
        %v3588 = vpop.f32.mrb[0].mxu0
        %3589 = vmatprep.mubr.bf16.mxu0 0
        %3590 = vmatmul.mubr.bf16.gmra.mrb[0].mxu0 %v3514
        %v3591 = vpop.f32.mrb[0].mxu0
        %v3592 = vadd.f32 %v3487, %v3591
        %v3593 = vpop.f32.mrb[0].mxu0
        %v3594 = vpop.f32.mrb[0].mxu0
        %v3595 = vadd.f32 %v3487, %v3594
        %v3596 = vpop.f32.mrb[0].mxu0
        %3597 = vmatprep.mubr.bf16.mxu0 0
        %3598 = vmatmul.mubr.bf16.gmra.mrb[0].mxu0 %v3517
        %v3599 = vpop.f32.mrb[0].mxu0
        %v3600 = vadd.f32 %v3487, %v3599
        %v3601 = vpop.f32.mrb[0].mxu0
        %v3602 = vpop.f32.mrb[0].mxu0
        %v3603 = vadd.f32 %v3487, %v3602
        %v3604 = vpop.f32.mrb[0].mxu0
        %3605 = vmatprep.mubr.bf16.mxu0 0
        %3606 = vmatmul.mubr.bf16.gmra.mrb[0].mxu0 %v3520
        %v3607 = vpop.f32.mrb[0].mxu0
        %v3608 = vadd.f32 %v3487, %v3607
        %v3609 = vpop.f32.mrb[0].mxu0
        %v3610 = vpop.f32.mrb[0].mxu0
        %v3611 = vadd.f32 %v3487, %v3610
        %v3612 = vpop.f32.mrb[0].mxu0
        %3613 = vmatprep.mubr.bf16.mxu0 0
        %3614 = vmatmul.mubr.bf16.gmra.mrb[0].mxu0 %v3523
        %v3615 = vpop.f32.mrb[0].mxu0
        %v3616 = vadd.f32 %v3487, %v3615
        %v3617 = vpop.f32.mrb[0].mxu0
        %v3618 = vpop.f32.mrb[0].mxu0
        %v3619 = vadd.f32 %v3487, %v3618
        %v3620 = vpop.f32.mrb[0].mxu0
        %3621 = vdwg.mxu0
        %v3622 = vadd.f32 %v531, %v3560
        %v3623 = vadd.f32 %v532, %v3563
        %v3624 = vadd.f32 %v533, %v3568
        %v3625 = vadd.f32 %v534, %v3571
        %v3626 = vadd.f32 %v540, %v3576
        %v3627 = vadd.f32 %v542, %v3579
        %v3628 = vadd.f32 %v544, %v3584
        %v3629 = vadd.f32 %v546, %v3587
        %v3630 = vadd.f32 %v552, %v3592
        %v3631 = vadd.f32 %v554, %v3595
        %v3632 = vadd.f32 %v556, %v3600
        %v3633 = vadd.f32 %v558, %v3603
        %v3634 = vadd.f32 %v564, %v3608
        %v3635 = vadd.f32 %v566, %v3611
        %v3636 = vadd.f32 %v568, %v3616
        %v3637 = vadd.f32 %v570, %v3619
        %v3638 = vld [vmem:[%s9] sm:$0x1]
        %v3639 = vld [vmem:[%s10] sm:$0x1]
        %v3640 = vsel %vm577, %v3622, 0.0
        %3641 = vadd.xlane.f32.xlu0 %v3640
        %v3642 = vpop.xlane.xlu0 %3641
        %v3643 = vsel %vm577, %v3623, 0.0
        %3644 = vadd.xlane.f32.xlu0 %v3643
        %v3645 = vpop.xlane.xlu0 %3644
        %v3646 = vsel %vm577, %v3624, 0.0
        %3647 = vadd.xlane.f32.xlu0 %v3646
        %v3648 = vpop.xlane.xlu0 %3647
        %v3649 = vsel %vm577, %v3625, 0.0
        %3650 = vadd.xlane.f32.xlu0 %v3649
        %v3651 = vpop.xlane.xlu0 %3650
        %v3652 = vsel %vm577, %v3626, 0.0
        %3653 = vadd.xlane.f32.xlu0 %v3652
        %v3654 = vpop.xlane.xlu0 %3653
        %v3655 = vsel %vm577, %v3627, 0.0
        %3656 = vadd.xlane.f32.xlu0 %v3655
        %v3657 = vpop.xlane.xlu0 %3656
        %v3658 = vsel %vm577, %v3628, 0.0
        %3659 = vadd.xlane.f32.xlu0 %v3658
        %v3660 = vpop.xlane.xlu0 %3659
        %v3661 = vsel %vm577, %v3629, 0.0
        %3662 = vadd.xlane.f32.xlu0 %v3661
        %v3663 = vpop.xlane.xlu0 %3662
        %v3664 = vsel %vm577, %v3630, 0.0
        %3665 = vadd.xlane.f32.xlu0 %v3664
        %v3666 = vpop.xlane.xlu0 %3665
        %v3667 = vsel %vm577, %v3631, 0.0
        %3668 = vadd.xlane.f32.xlu0 %v3667
        %v3669 = vpop.xlane.xlu0 %3668
        %v3670 = vsel %vm577, %v3632, 0.0
        %3671 = vadd.xlane.f32.xlu0 %v3670
        %v3672 = vpop.xlane.xlu0 %3671
        %v3673 = vsel %vm577, %v3633, 0.0
        %3674 = vadd.xlane.f32.xlu0 %v3673
        %v3675 = vpop.xlane.xlu0 %3674
        %v3676 = vsel %vm577, %v3634, 0.0
        %3677 = vadd.xlane.f32.xlu0 %v3676
        %v3678 = vpop.xlane.xlu0 %3677
        %v3679 = vsel %vm577, %v3635, 0.0
        %3680 = vadd.xlane.f32.xlu0 %v3679
        %v3681 = vpop.xlane.xlu0 %3680
        %v3682 = vsel %vm577, %v3636, 0.0
        %3683 = vadd.xlane.f32.xlu0 %v3682
        %v3684 = vpop.xlane.xlu0 %3683
        %v3685 = vsel %vm577, %v3637, 0.0
        %3686 = vadd.xlane.f32.xlu0 %v3685
        %v3687 = vpop.xlane.xlu0 %3686
        %v3688 = vmul.f32 %v3642, %v626
        %v3689 = vmul.f32 %v3645, %v626
        %v3690 = vmul.f32 %v3648, %v626
        %v3691 = vmul.f32 %v3651, %v626
        %v3692 = vmul.f32 %v3654, %v626
        %v3693 = vmul.f32 %v3657, %v626
        %v3694 = vmul.f32 %v3660, %v626
        %v3695 = vmul.f32 %v3663, %v626
        %v3696 = vmul.f32 %v3666, %v626
        %v3697 = vmul.f32 %v3669, %v626
        %v3698 = vmul.f32 %v3672, %v626
        %v3699 = vmul.f32 %v3675, %v626
        %v3700 = vmul.f32 %v3678, %v626
        %v3701 = vmul.f32 %v3681, %v626
        %v3702 = vmul.f32 %v3684, %v626
        %v3703 = vmul.f32 %v3687, %v626
        %v3704 = vsub.f32 %v3622, %v3688
        %v3705 = vsub.f32 %v3623, %v3689
        %v3706 = vsub.f32 %v3624, %v3690
        %v3707 = vsub.f32 %v3625, %v3691
        %v3708 = vsub.f32 %v3626, %v3692
        %v3709 = vsub.f32 %v3627, %v3693
        %v3710 = vsub.f32 %v3628, %v3694
        %v3711 = vsub.f32 %v3629, %v3695
        %v3712 = vsub.f32 %v3630, %v3696
        %v3713 = vsub.f32 %v3631, %v3697
        %v3714 = vsub.f32 %v3632, %v3698
        %v3715 = vsub.f32 %v3633, %v3699
        %v3716 = vsub.f32 %v3634, %v3700
        %v3717 = vsub.f32 %v3635, %v3701
        %v3718 = vsub.f32 %v3636, %v3702
        %v3719 = vsub.f32 %v3637, %v3703
        %v3720 = vmul.f32 %v3704, %v3704
        %v3721 = vmul.f32 %v3705, %v3705
        %v3722 = vmul.f32 %v3706, %v3706
        %v3723 = vmul.f32 %v3707, %v3707
        %v3724 = vmul.f32 %v3708, %v3708
        %v3725 = vmul.f32 %v3709, %v3709
        %v3726 = vmul.f32 %v3710, %v3710
        %v3727 = vmul.f32 %v3711, %v3711
        %v3728 = vmul.f32 %v3712, %v3712
        %v3729 = vmul.f32 %v3713, %v3713
        %v3730 = vmul.f32 %v3714, %v3714
        %v3731 = vmul.f32 %v3715, %v3715
        %v3732 = vmul.f32 %v3716, %v3716
        %v3733 = vmul.f32 %v3717, %v3717
        %v3734 = vmul.f32 %v3718, %v3718
        %v3735 = vmul.f32 %v3719, %v3719
        %v3736 = vsel %vm577, %v3720, 0.0
        %3737 = vadd.xlane.f32.xlu0 %v3736
        %v3738 = vpop.xlane.xlu0 %3737
        %v3739 = vsel %vm577, %v3721, 0.0
        %3740 = vadd.xlane.f32.xlu0 %v3739
        %v3741 = vpop.xlane.xlu0 %3740
        %v3742 = vsel %vm577, %v3722, 0.0
        %3743 = vadd.xlane.f32.xlu0 %v3742
        %v3744 = vpop.xlane.xlu0 %3743
        %v3745 = vsel %vm577, %v3723, 0.0
        %3746 = vadd.xlane.f32.xlu0 %v3745
        %v3747 = vpop.xlane.xlu0 %3746
        %v3748 = vsel %vm577, %v3724, 0.0
        %3749 = vadd.xlane.f32.xlu0 %v3748
        %v3750 = vpop.xlane.xlu0 %3749
        %v3751 = vsel %vm577, %v3725, 0.0
        %3752 = vadd.xlane.f32.xlu0 %v3751
        %v3753 = vpop.xlane.xlu0 %3752
        %v3754 = vsel %vm577, %v3726, 0.0
        %3755 = vadd.xlane.f32.xlu0 %v3754
        %v3756 = vpop.xlane.xlu0 %3755
        %v3757 = vsel %vm577, %v3727, 0.0
        %3758 = vadd.xlane.f32.xlu0 %v3757
        %v3759 = vpop.xlane.xlu0 %3758
        %v3760 = vsel %vm577, %v3728, 0.0
        %3761 = vadd.xlane.f32.xlu0 %v3760
        %v3762 = vpop.xlane.xlu0 %3761
        %v3763 = vsel %vm577, %v3729, 0.0
        %3764 = vadd.xlane.f32.xlu0 %v3763
        %v3765 = vpop.xlane.xlu0 %3764
        %v3766 = vsel %vm577, %v3730, 0.0
        %3767 = vadd.xlane.f32.xlu0 %v3766
        %v3768 = vpop.xlane.xlu0 %3767
        %v3769 = vsel %vm577, %v3731, 0.0
        %3770 = vadd.xlane.f32.xlu0 %v3769
        %v3771 = vpop.xlane.xlu0 %3770
        %v3772 = vsel %vm577, %v3732, 0.0
        %3773 = vadd.xlane.f32.xlu0 %v3772
        %v3774 = vpop.xlane.xlu0 %3773
        %v3775 = vsel %vm577, %v3733, 0.0
        %3776 = vadd.xlane.f32.xlu0 %v3775
        %v3777 = vpop.xlane.xlu0 %3776
        %v3778 = vsel %vm577, %v3734, 0.0
        %3779 = vadd.xlane.f32.xlu0 %v3778
        %v3780 = vpop.xlane.xlu0 %3779
        %v3781 = vsel %vm577, %v3735, 0.0
        %3782 = vadd.xlane.f32.xlu0 %v3781
        %v3783 = vpop.xlane.xlu0 %3782
        %v3784 = vmul.f32 %v3738, %v626
        %v3785 = vmul.f32 %v3741, %v626
        %v3786 = vmul.f32 %v3744, %v626
        %v3787 = vmul.f32 %v3747, %v626
        %v3788 = vmul.f32 %v3750, %v626
        %v3789 = vmul.f32 %v3753, %v626
        %v3790 = vmul.f32 %v3756, %v626
        %v3791 = vmul.f32 %v3759, %v626
        %v3792 = vmul.f32 %v3762, %v626
        %v3793 = vmul.f32 %v3765, %v626
        %v3794 = vmul.f32 %v3768, %v626
        %v3795 = vmul.f32 %v3771, %v626
        %v3796 = vmul.f32 %v3774, %v626
        %v3797 = vmul.f32 %v3777, %v626
        %v3798 = vmul.f32 %v3780, %v626
        %v3799 = vmul.f32 %v3783, %v626
        %v3800 = vadd.f32 %v3784, 1e-05
        %v3801 = vadd.f32 %v3785, 1e-05
        %v3802 = vadd.f32 %v3786, 1e-05
        %v3803 = vadd.f32 %v3787, 1e-05
        %v3804 = vadd.f32 %v3788, 1e-05
        %v3805 = vadd.f32 %v3789, 1e-05
        %v3806 = vadd.f32 %v3790, 1e-05
        %v3807 = vadd.f32 %v3791, 1e-05
        %v3808 = vadd.f32 %v3792, 1e-05
        %v3809 = vadd.f32 %v3793, 1e-05
        %v3810 = vadd.f32 %v3794, 1e-05
        %v3811 = vadd.f32 %v3795, 1e-05
        %v3812 = vadd.f32 %v3796, 1e-05
        %v3813 = vadd.f32 %v3797, 1e-05
        %v3814 = vadd.f32 %v3798, 1e-05
        %v3815 = vadd.f32 %v3799, 1e-05
        %v3816 = vrsqrt.pop %v3800
        %v3817 = vrsqrt.pop %v3801
        %v3818 = vrsqrt.pop %v3802
        %v3819 = vrsqrt.pop %v3803
        %v3820 = vrsqrt.pop %v3804
        %v3821 = vrsqrt.pop %v3805
        %v3822 = vrsqrt.pop %v3806
        %v3823 = vrsqrt.pop %v3807
        %v3824 = vrsqrt.pop %v3808
        %v3825 = vrsqrt.pop %v3809
        %v3826 = vrsqrt.pop %v3810
        %v3827 = vrsqrt.pop %v3811
        %v3828 = vrsqrt.pop %v3812
        %v3829 = vrsqrt.pop %v3813
        %v3830 = vrsqrt.pop %v3814
        %v3831 = vrsqrt.pop %v3815
        %v3832 = vmul.f32 %v3704, %v3816
        %v3833 = vmul.f32 %v3705, %v3817
        %v3834 = vmul.f32 %v3706, %v3818
        %v3835 = vmul.f32 %v3707, %v3819
        %v3836 = vmul.f32 %v3708, %v3820
        %v3837 = vmul.f32 %v3709, %v3821
        %v3838 = vmul.f32 %v3710, %v3822
        %v3839 = vmul.f32 %v3711, %v3823
        %v3840 = vmul.f32 %v3712, %v3824
        %v3841 = vmul.f32 %v3713, %v3825
        %v3842 = vmul.f32 %v3714, %v3826
        %v3843 = vmul.f32 %v3715, %v3827
        %v3844 = vmul.f32 %v3716, %v3828
        %v3845 = vmul.f32 %v3717, %v3829
        %v3846 = vmul.f32 %v3718, %v3830
        %v3847 = vmul.f32 %v3719, %v3831
        %v3849 = vlaneseq
        %v3850 = vshrl.u32 %v3849, 7
        %v3851 = vsub.s32 0, %v3850
        %v3852 = vrot.slane %v3638, %v3851
        %v3854 = vmul.f32 %v3832, %v3852
        %v3855 = vmul.f32 %v3833, %v3852
        %v3856 = vmul.f32 %v3834, %v3852
        %v3857 = vmul.f32 %v3835, %v3852
        %v3858 = vmul.f32 %v3836, %v3852
        %v3859 = vmul.f32 %v3837, %v3852
        %v3860 = vmul.f32 %v3838, %v3852
        %v3861 = vmul.f32 %v3839, %v3852
        %v3862 = vmul.f32 %v3840, %v3852
        %v3863 = vmul.f32 %v3841, %v3852
        %v3864 = vmul.f32 %v3842, %v3852
        %v3865 = vmul.f32 %v3843, %v3852
        %v3866 = vmul.f32 %v3844, %v3852
        %v3867 = vmul.f32 %v3845, %v3852
        %v3868 = vmul.f32 %v3846, %v3852
        %v3869 = vmul.f32 %v3847, %v3852
        %v3871 = vlaneseq
        %v3872 = vshrl.u32 %v3871, 7
        %v3873 = vsub.s32 0, %v3872
        %v3874 = vrot.slane %v3639, %v3873
        %v3876 = vadd.f32 %v3854, %v3874
        %v3877 = vadd.f32 %v3855, %v3874
        %v3878 = vadd.f32 %v3856, %v3874
        %v3879 = vadd.f32 %v3857, %v3874
        %v3880 = vadd.f32 %v3858, %v3874
        %v3881 = vadd.f32 %v3859, %v3874
        %v3882 = vadd.f32 %v3860, %v3874
        %v3883 = vadd.f32 %v3861, %v3874
        %v3884 = vadd.f32 %v3862, %v3874
        %v3885 = vadd.f32 %v3863, %v3874
        %v3886 = vadd.f32 %v3864, %v3874
        %v3887 = vadd.f32 %v3865, %v3874
        %v3888 = vadd.f32 %v3866, %v3874
        %v3889 = vadd.f32 %v3867, %v3874
        %v3890 = vadd.f32 %v3868, %v3874
        %v3891 = vadd.f32 %v3869, %v3874
        %v3892 = vpack.c.bf16 %v3877, %v3876
        %v3893 = vpack.c.bf16 %v3879, %v3878
        %v3894 = vpack.c.bf16 %v3881, %v3880
        %v3895 = vpack.c.bf16 %v3883, %v3882
        %v3896 = vpack.c.bf16 %v3885, %v3884
        %v3897 = vpack.c.bf16 %v3887, %v3886
        %v3898 = vpack.c.bf16 %v3889, %v3888
        %v3899 = vpack.c.bf16 %v3891, %v3890
        %v3900 = vld [vmem:[%s11] sm:$0xf]
        %v3901 = vld [vmem:[%s11 + $0x4] sm:$0xf]
        %v3902 = vld [vmem:[%s11 + $0x8] sm:$0xf]
        %v3903 = vld [vmem:[%s11 + $0xc] sm:$0xf]
        %v3904 = vld [vmem:[%s12] sm:$0x1]
        %v3906 = vlaneseq
        %v3907 = vshrl.u32 %v3906, 7
        %v3908 = vsub.s32 0, %v3907
        %v3909 = vrot.slane %v3904, %v3908
        %v3915 = vunpack.c.l.b16 %v3900
        %v3916 = vunpack.c.l.b16 %v3901
        %v3917 = vunpack.c.l.b16 %v3902
        %v3918 = vunpack.c.l.b16 %v3903
        %v3919 = vpack.c.b16 %v3916, %v3915
        %v3920 = vpack.c.b16 %v3918, %v3917
        %v3924 = vsel %vm577, %v3892, 0
        %v3927 = vsel %vm577, %v3893, 0
        %v3930 = vsel %vm577, %v3894, 0
        %v3933 = vsel %vm577, %v3895, 0
        %v3936 = vsel %vm577, %v3896, 0
        %v3939 = vsel %vm577, %v3897, 0
        %v3942 = vsel %vm577, %v3898, 0
        %v3945 = vsel %vm577, %v3899, 0
        %3947 = vmatprep.subr.bf16.mxu0 0
        %3948 = vmatpush1.bf16.msra.mxu0 %v3919
        %3949 = vmatprep.subr.bf16.mxu0 0
        %3950 = vmatpush1.bf16.msra.mxu0 %v3920
        %3951 = vmatprep.subr.bf16.mxu0 0
        %3952 = vmatpush1.bf16.msra.mxu0 0
        %3953 = vmatprep.subr.bf16.mxu0 0
        %3954 = vmatpush1.bf16.msra.mxu0 0
        %3955 = vmatprep.subr.bf16.mxu0 0
        %3956 = vmatpush1.bf16.msra.mxu0 0
        %3957 = vmatprep.subr.bf16.mxu0 0
        %3958 = vmatpush1.bf16.msra.mxu0 0
        %3959 = vmatprep.subr.bf16.mxu0 0
        %3960 = vmatpush1.bf16.msra.mxu0 0
        %3961 = vmatprep.subr.bf16.mxu0 0
        %3962 = vmatpush1.bf16.msra.mxu0 0
        %3963 = vmatprep.subr.bf16.mxu0 0
        %3964 = vmatpush1.bf16.msra.mxu0 0
        %3965 = vmatprep.subr.bf16.mxu0 0
        %3966 = vmatpush1.bf16.msra.mxu0 0
        %3967 = vmatprep.subr.bf16.mxu0 0
        %3968 = vmatpush1.bf16.msra.mxu0 0
        %3969 = vmatprep.subr.bf16.mxu0 0
        %3970 = vmatpush1.bf16.msra.mxu0 0
        %3971 = vmatprep.subr.bf16.mxu0 0
        %3972 = vmatpush1.bf16.msra.mxu0 0
        %3973 = vmatprep.subr.bf16.mxu0 0
        %3974 = vmatpush1.bf16.msra.mxu0 0
        %3975 = vmatprep.subr.bf16.mxu0 0
        %3976 = vmatpush1.bf16.msra.mxu0 0
        %3977 = vmatprep.subr.bf16.mxu0 0
        %3978 = vmatpush1.bf16.msra.mxu0 0
        %3979 = vmatprep.mubr.bf16.mxu0 0
        %3980 = vmatmul.mubr.bf16.gmra.mrb[0].mxu0 %v3924
        %v3981 = vpop.f32.mrb[0].mxu0
        %v3982 = vadd.f32 %v3909, %v3981
        %v3983 = vpop.f32.mrb[0].mxu0
        %v3984 = vpop.f32.mrb[0].mxu0
        %v3985 = vadd.f32 %v3909, %v3984
        %v3986 = vpop.f32.mrb[0].mxu0
        %3987 = vmatprep.mubr.bf16.mxu0 0
        %3988 = vmatmul.mubr.bf16.gmra.mrb[0].mxu0 %v3927
        %v3989 = vpop.f32.mrb[0].mxu0
        %v3990 = vadd.f32 %v3909, %v3989
        %v3991 = vpop.f32.mrb[0].mxu0
        %v3992 = vpop.f32.mrb[0].mxu0
        %v3993 = vadd.f32 %v3909, %v3992
        %v3994 = vpop.f32.mrb[0].mxu0
        %3995 = vmatprep.mubr.bf16.mxu0 0
        %3996 = vmatmul.mubr.bf16.gmra.mrb[0].mxu0 %v3930
        %v3997 = vpop.f32.mrb[0].mxu0
        %v3998 = vadd.f32 %v3909, %v3997
        %v3999 = vpop.f32.mrb[0].mxu0
        %v4000 = vpop.f32.mrb[0].mxu0
        %v4001 = vadd.f32 %v3909, %v4000
        %v4002 = vpop.f32.mrb[0].mxu0
        %4003 = vmatprep.mubr.bf16.mxu0 0
        %4004 = vmatmul.mubr.bf16.gmra.mrb[0].mxu0 %v3933
        %v4005 = vpop.f32.mrb[0].mxu0
        %v4006 = vadd.f32 %v3909, %v4005
        %v4007 = vpop.f32.mrb[0].mxu0
        %v4008 = vpop.f32.mrb[0].mxu0
        %v4009 = vadd.f32 %v3909, %v4008
        %v4010 = vpop.f32.mrb[0].mxu0
        %4011 = vmatprep.mubr.bf16.mxu0 0
        %4012 = vmatmul.mubr.bf16.gmra.mrb[0].mxu0 %v3936
        %v4013 = vpop.f32.mrb[0].mxu0
        %v4014 = vadd.f32 %v3909, %v4013
        %v4015 = vpop.f32.mrb[0].mxu0
        %v4016 = vpop.f32.mrb[0].mxu0
        %v4017 = vadd.f32 %v3909, %v4016
        %v4018 = vpop.f32.mrb[0].mxu0
        %4019 = vmatprep.mubr.bf16.mxu0 0
        %4020 = vmatmul.mubr.bf16.gmra.mrb[0].mxu0 %v3939
        %v4021 = vpop.f32.mrb[0].mxu0
        %v4022 = vadd.f32 %v3909, %v4021
        %v4023 = vpop.f32.mrb[0].mxu0
        %v4024 = vpop.f32.mrb[0].mxu0
        %v4025 = vadd.f32 %v3909, %v4024
        %v4026 = vpop.f32.mrb[0].mxu0
        %4027 = vmatprep.mubr.bf16.mxu0 0
        %4028 = vmatmul.mubr.bf16.gmra.mrb[0].mxu0 %v3942
        %v4029 = vpop.f32.mrb[0].mxu0
        %v4030 = vadd.f32 %v3909, %v4029
        %v4031 = vpop.f32.mrb[0].mxu0
        %v4032 = vpop.f32.mrb[0].mxu0
        %v4033 = vadd.f32 %v3909, %v4032
        %v4034 = vpop.f32.mrb[0].mxu0
        %4035 = vmatprep.mubr.bf16.mxu0 0
        %4036 = vmatmul.mubr.bf16.gmra.mrb[0].mxu0 %v3945
        %v4037 = vpop.f32.mrb[0].mxu0
        %v4038 = vadd.f32 %v3909, %v4037
        %v4039 = vpop.f32.mrb[0].mxu0
        %v4040 = vpop.f32.mrb[0].mxu0
        %v4041 = vadd.f32 %v3909, %v4040
        %v4042 = vpop.f32.mrb[0].mxu0
        %4043 = vdwg.mxu0
        %v4044 = vmul.f32 %v3982, 0.5
        %v4045 = vmul.f32 %v3985, 0.5
        %v4046 = vmul.f32 %v3990, 0.5
        %v4047 = vmul.f32 %v3993, 0.5
        %v4048 = vmul.f32 %v3998, 0.5
        %v4049 = vmul.f32 %v4001, 0.5
        %v4050 = vmul.f32 %v4006, 0.5
        %v4051 = vmul.f32 %v4009, 0.5
        %v4052 = vmul.f32 %v4014, 0.5
        %v4053 = vmul.f32 %v4017, 0.5
        %v4054 = vmul.f32 %v4022, 0.5
        %v4055 = vmul.f32 %v4025, 0.5
        %v4056 = vmul.f32 %v4030, 0.5
        %v4057 = vmul.f32 %v4033, 0.5
        %v4058 = vmul.f32 %v4038, 0.5
        %v4059 = vmul.f32 %v4041, 0.5
        %v4060 = vmul.f32 %v3982, 0.70710677
        %v4061 = vmul.f32 %v3985, 0.70710677
        %v4062 = vmul.f32 %v3990, 0.70710677
        %v4063 = vmul.f32 %v3993, 0.70710677
        %v4064 = vmul.f32 %v3998, 0.70710677
        %v4065 = vmul.f32 %v4001, 0.70710677
        %v4066 = vmul.f32 %v4006, 0.70710677
        %v4067 = vmul.f32 %v4009, 0.70710677
        %v4068 = vmul.f32 %v4014, 0.70710677
        %v4069 = vmul.f32 %v4017, 0.70710677
        %v4070 = vmul.f32 %v4022, 0.70710677
        %v4071 = vmul.f32 %v4025, 0.70710677
        %v4072 = vmul.f32 %v4030, 0.70710677
        %v4073 = vmul.f32 %v4033, 0.70710677
        %v4074 = vmul.f32 %v4038, 0.70710677
        %v4075 = vmul.f32 %v4041, 0.70710677
        %vm4076 = vcmp.ge.f32.partialorder %v4060, 0.0
        %vm4077 = vcmp.ge.f32.partialorder %v4061, 0.0
        %vm4078 = vcmp.ge.f32.partialorder %v4062, 0.0
        %vm4079 = vcmp.ge.f32.partialorder %v4063, 0.0
        %vm4080 = vcmp.ge.f32.partialorder %v4064, 0.0
        %vm4081 = vcmp.ge.f32.partialorder %v4065, 0.0
        %vm4082 = vcmp.ge.f32.partialorder %v4066, 0.0
        %vm4083 = vcmp.ge.f32.partialorder %v4067, 0.0
        %vm4084 = vcmp.ge.f32.partialorder %v4068, 0.0
        %vm4085 = vcmp.ge.f32.partialorder %v4069, 0.0
        %vm4086 = vcmp.ge.f32.partialorder %v4070, 0.0
        %vm4087 = vcmp.ge.f32.partialorder %v4071, 0.0
        %vm4088 = vcmp.ge.f32.partialorder %v4072, 0.0
        %vm4089 = vcmp.ge.f32.partialorder %v4073, 0.0
        %vm4090 = vcmp.ge.f32.partialorder %v4074, 0.0
        %vm4091 = vcmp.ge.f32.partialorder %v4075, 0.0
        %v4092 = vsel %vm4076, 1.0, -1.0
        %v4093 = vsel %vm4077, 1.0, -1.0
        %v4094 = vsel %vm4078, 1.0, -1.0
        %v4095 = vsel %vm4079, 1.0, -1.0
        %v4096 = vsel %vm4080, 1.0, -1.0
        %v4097 = vsel %vm4081, 1.0, -1.0
        %v4098 = vsel %vm4082, 1.0, -1.0
        %v4099 = vsel %vm4083, 1.0, -1.0
        %v4100 = vsel %vm4084, 1.0, -1.0
        %v4101 = vsel %vm4085, 1.0, -1.0
        %v4102 = vsel %vm4086, 1.0, -1.0
        %v4103 = vsel %vm4087, 1.0, -1.0
        %v4104 = vsel %vm4088, 1.0, -1.0
        %v4105 = vsel %vm4089, 1.0, -1.0
        %v4106 = vsel %vm4090, 1.0, -1.0
        %v4107 = vsel %vm4091, 1.0, -1.0
        %v4108 = vand.u32 2147483647, %v4060
        %v4109 = vand.u32 2147483647, %v4061
        %v4110 = vand.u32 2147483647, %v4062
        %v4111 = vand.u32 2147483647, %v4063
        %v4112 = vand.u32 2147483647, %v4064
        %v4113 = vand.u32 2147483647, %v4065
        %v4114 = vand.u32 2147483647, %v4066
        %v4115 = vand.u32 2147483647, %v4067
        %v4116 = vand.u32 2147483647, %v4068
        %v4117 = vand.u32 2147483647, %v4069
        %v4118 = vand.u32 2147483647, %v4070
        %v4119 = vand.u32 2147483647, %v4071
        %v4120 = vand.u32 2147483647, %v4072
        %v4121 = vand.u32 2147483647, %v4073
        %v4122 = vand.u32 2147483647, %v4074
        %v4123 = vand.u32 2147483647, %v4075
        %v4124 = vmul.f32 %v4108, 0.3275911
        %v4125 = vmul.f32 %v4109, 0.3275911
        %v4126 = vmul.f32 %v4110, 0.3275911
        %v4127 = vmul.f32 %v4111, 0.3275911
        %v4128 = vmul.f32 %v4112, 0.3275911
        %v4129 = vmul.f32 %v4113, 0.3275911
        %v4130 = vmul.f32 %v4114, 0.3275911
        %v4131 = vmul.f32 %v4115, 0.3275911
        %v4132 = vmul.f32 %v4116, 0.3275911
        %v4133 = vmul.f32 %v4117, 0.3275911
        %v4134 = vmul.f32 %v4118, 0.3275911
        %v4135 = vmul.f32 %v4119, 0.3275911
        %v4136 = vmul.f32 %v4120, 0.3275911
        %v4137 = vmul.f32 %v4121, 0.3275911
        %v4138 = vmul.f32 %v4122, 0.3275911
        %v4139 = vmul.f32 %v4123, 0.3275911
        %v4140 = vadd.f32 %v4124, 1.0
        %v4141 = vadd.f32 %v4125, 1.0
        %v4142 = vadd.f32 %v4126, 1.0
        %v4143 = vadd.f32 %v4127, 1.0
        %v4144 = vadd.f32 %v4128, 1.0
        %v4145 = vadd.f32 %v4129, 1.0
        %v4146 = vadd.f32 %v4130, 1.0
        %v4147 = vadd.f32 %v4131, 1.0
        %v4148 = vadd.f32 %v4132, 1.0
        %v4149 = vadd.f32 %v4133, 1.0
        %v4150 = vadd.f32 %v4134, 1.0
        %v4151 = vadd.f32 %v4135, 1.0
        %v4152 = vadd.f32 %v4136, 1.0
        %v4153 = vadd.f32 %v4137, 1.0
        %v4154 = vadd.f32 %v4138, 1.0
        %v4155 = vadd.f32 %v4139, 1.0
        %v4156 = vrcp.pop %v4140
        %v4157 = vmul.f32 1.0, %v4156
        %v4158 = vrcp.pop %v4141
        %v4159 = vmul.f32 1.0, %v4158
        %v4160 = vrcp.pop %v4142
        %v4161 = vmul.f32 1.0, %v4160
        %v4162 = vrcp.pop %v4143
        %v4163 = vmul.f32 1.0, %v4162
        %v4164 = vrcp.pop %v4144
        %v4165 = vmul.f32 1.0, %v4164
        %v4166 = vrcp.pop %v4145
        %v4167 = vmul.f32 1.0, %v4166
        %v4168 = vrcp.pop %v4146
        %v4169 = vmul.f32 1.0, %v4168
        %v4170 = vrcp.pop %v4147
        %v4171 = vmul.f32 1.0, %v4170
        %v4172 = vrcp.pop %v4148
        %v4173 = vmul.f32 1.0, %v4172
        %v4174 = vrcp.pop %v4149
        %v4175 = vmul.f32 1.0, %v4174
        %v4176 = vrcp.pop %v4150
        %v4177 = vmul.f32 1.0, %v4176
        %v4178 = vrcp.pop %v4151
        %v4179 = vmul.f32 1.0, %v4178
        %v4180 = vrcp.pop %v4152
        %v4181 = vmul.f32 1.0, %v4180
        %v4182 = vrcp.pop %v4153
        %v4183 = vmul.f32 1.0, %v4182
        %v4184 = vrcp.pop %v4154
        %v4185 = vmul.f32 1.0, %v4184
        %v4186 = vrcp.pop %v4155
        %v4187 = vmul.f32 1.0, %v4186
        %v4188 = vmul.f32 %v4157, 1.0614054
        %v4189 = vmul.f32 %v4159, 1.0614054
        %v4190 = vmul.f32 %v4161, 1.0614054
        %v4191 = vmul.f32 %v4163, 1.0614054
        %v4192 = vmul.f32 %v4165, 1.0614054
        %v4193 = vmul.f32 %v4167, 1.0614054
        %v4194 = vmul.f32 %v4169, 1.0614054
        %v4195 = vmul.f32 %v4171, 1.0614054
        %v4196 = vmul.f32 %v4173, 1.0614054
        %v4197 = vmul.f32 %v4175, 1.0614054
        %v4198 = vmul.f32 %v4177, 1.0614054
        %v4199 = vmul.f32 %v4179, 1.0614054
        %v4200 = vmul.f32 %v4181, 1.0614054
        %v4201 = vmul.f32 %v4183, 1.0614054
        %v4202 = vmul.f32 %v4185, 1.0614054
        %v4203 = vmul.f32 %v4187, 1.0614054
        %v4204 = vadd.f32 %v4188, -1.4531521
        %v4205 = vadd.f32 %v4189, -1.4531521
        %v4206 = vadd.f32 %v4190, -1.4531521
        %v4207 = vadd.f32 %v4191, -1.4531521
        %v4208 = vadd.f32 %v4192, -1.4531521
        %v4209 = vadd.f32 %v4193, -1.4531521
        %v4210 = vadd.f32 %v4194, -1.4531521
        %v4211 = vadd.f32 %v4195, -1.4531521
        %v4212 = vadd.f32 %v4196, -1.4531521
        %v4213 = vadd.f32 %v4197, -1.4531521
        %v4214 = vadd.f32 %v4198, -1.4531521
        %v4215 = vadd.f32 %v4199, -1.4531521
        %v4216 = vadd.f32 %v4200, -1.4531521
        %v4217 = vadd.f32 %v4201, -1.4531521
        %v4218 = vadd.f32 %v4202, -1.4531521
        %v4219 = vadd.f32 %v4203, -1.4531521
        %v4220 = vmul.f32 %v4204, %v4157
        %v4221 = vmul.f32 %v4205, %v4159
        %v4222 = vmul.f32 %v4206, %v4161
        %v4223 = vmul.f32 %v4207, %v4163
        %v4224 = vmul.f32 %v4208, %v4165
        %v4225 = vmul.f32 %v4209, %v4167
        %v4226 = vmul.f32 %v4210, %v4169
        %v4227 = vmul.f32 %v4211, %v4171
        %v4228 = vmul.f32 %v4212, %v4173
        %v4229 = vmul.f32 %v4213, %v4175
        %v4230 = vmul.f32 %v4214, %v4177
        %v4231 = vmul.f32 %v4215, %v4179
        %v4232 = vmul.f32 %v4216, %v4181
        %v4233 = vmul.f32 %v4217, %v4183
        %v4234 = vmul.f32 %v4218, %v4185
        %v4235 = vmul.f32 %v4219, %v4187
        %v4236 = vadd.f32 %v4220, 1.4214138
        %v4237 = vadd.f32 %v4221, 1.4214138
        %v4238 = vadd.f32 %v4222, 1.4214138
        %v4239 = vadd.f32 %v4223, 1.4214138
        %v4240 = vadd.f32 %v4224, 1.4214138
        %v4241 = vadd.f32 %v4225, 1.4214138
        %v4242 = vadd.f32 %v4226, 1.4214138
        %v4243 = vadd.f32 %v4227, 1.4214138
        %v4244 = vadd.f32 %v4228, 1.4214138
        %v4245 = vadd.f32 %v4229, 1.4214138
        %v4246 = vadd.f32 %v4230, 1.4214138
        %v4247 = vadd.f32 %v4231, 1.4214138
        %v4248 = vadd.f32 %v4232, 1.4214138
        %v4249 = vadd.f32 %v4233, 1.4214138
        %v4250 = vadd.f32 %v4234, 1.4214138
        %v4251 = vadd.f32 %v4235, 1.4214138
        %v4252 = vmul.f32 %v4236, %v4157
        %v4253 = vmul.f32 %v4237, %v4159
        %v4254 = vmul.f32 %v4238, %v4161
        %v4255 = vmul.f32 %v4239, %v4163
        %v4256 = vmul.f32 %v4240, %v4165
        %v4257 = vmul.f32 %v4241, %v4167
        %v4258 = vmul.f32 %v4242, %v4169
        %v4259 = vmul.f32 %v4243, %v4171
        %v4260 = vmul.f32 %v4244, %v4173
        %v4261 = vmul.f32 %v4245, %v4175
        %v4262 = vmul.f32 %v4246, %v4177
        %v4263 = vmul.f32 %v4247, %v4179
        %v4264 = vmul.f32 %v4248, %v4181
        %v4265 = vmul.f32 %v4249, %v4183
        %v4266 = vmul.f32 %v4250, %v4185
        %v4267 = vmul.f32 %v4251, %v4187
        %v4268 = vadd.f32 %v4252, -0.28449672
        %v4269 = vadd.f32 %v4253, -0.28449672
        %v4270 = vadd.f32 %v4254, -0.28449672
        %v4271 = vadd.f32 %v4255, -0.28449672
        %v4272 = vadd.f32 %v4256, -0.28449672
        %v4273 = vadd.f32 %v4257, -0.28449672
        %v4274 = vadd.f32 %v4258, -0.28449672
        %v4275 = vadd.f32 %v4259, -0.28449672
        %v4276 = vadd.f32 %v4260, -0.28449672
        %v4277 = vadd.f32 %v4261, -0.28449672
        %v4278 = vadd.f32 %v4262, -0.28449672
        %v4279 = vadd.f32 %v4263, -0.28449672
        %v4280 = vadd.f32 %v4264, -0.28449672
        %v4281 = vadd.f32 %v4265, -0.28449672
        %v4282 = vadd.f32 %v4266, -0.28449672
        %v4283 = vadd.f32 %v4267, -0.28449672
        %v4284 = vmul.f32 %v4268, %v4157
        %v4285 = vmul.f32 %v4269, %v4159
        %v4286 = vmul.f32 %v4270, %v4161
        %v4287 = vmul.f32 %v4271, %v4163
        %v4288 = vmul.f32 %v4272, %v4165
        %v4289 = vmul.f32 %v4273, %v4167
        %v4290 = vmul.f32 %v4274, %v4169
        %v4291 = vmul.f32 %v4275, %v4171
        %v4292 = vmul.f32 %v4276, %v4173
        %v4293 = vmul.f32 %v4277, %v4175
        %v4294 = vmul.f32 %v4278, %v4177
        %v4295 = vmul.f32 %v4279, %v4179
        %v4296 = vmul.f32 %v4280, %v4181
        %v4297 = vmul.f32 %v4281, %v4183
        %v4298 = vmul.f32 %v4282, %v4185
        %v4299 = vmul.f32 %v4283, %v4187
        %v4300 = vadd.f32 %v4284, 0.2548296
        %v4301 = vadd.f32 %v4285, 0.2548296
        %v4302 = vadd.f32 %v4286, 0.2548296
        %v4303 = vadd.f32 %v4287, 0.2548296
        %v4304 = vadd.f32 %v4288, 0.2548296
        %v4305 = vadd.f32 %v4289, 0.2548296
        %v4306 = vadd.f32 %v4290, 0.2548296
        %v4307 = vadd.f32 %v4291, 0.2548296
        %v4308 = vadd.f32 %v4292, 0.2548296
        %v4309 = vadd.f32 %v4293, 0.2548296
        %v4310 = vadd.f32 %v4294, 0.2548296
        %v4311 = vadd.f32 %v4295, 0.2548296
        %v4312 = vadd.f32 %v4296, 0.2548296
        %v4313 = vadd.f32 %v4297, 0.2548296
        %v4314 = vadd.f32 %v4298, 0.2548296
        %v4315 = vadd.f32 %v4299, 0.2548296
        %v4316 = vmul.f32 %v4300, %v4157
        %v4317 = vmul.f32 %v4301, %v4159
        %v4318 = vmul.f32 %v4302, %v4161
        %v4319 = vmul.f32 %v4303, %v4163
        %v4320 = vmul.f32 %v4304, %v4165
        %v4321 = vmul.f32 %v4305, %v4167
        %v4322 = vmul.f32 %v4306, %v4169
        %v4323 = vmul.f32 %v4307, %v4171
        %v4324 = vmul.f32 %v4308, %v4173
        %v4325 = vmul.f32 %v4309, %v4175
        %v4326 = vmul.f32 %v4310, %v4177
        %v4327 = vmul.f32 %v4311, %v4179
        %v4328 = vmul.f32 %v4312, %v4181
        %v4329 = vmul.f32 %v4313, %v4183
        %v4330 = vmul.f32 %v4314, %v4185
        %v4331 = vmul.f32 %v4315, %v4187
        %v4332 = vsub.f32 0.0, %v4108
        %v4333 = vsub.f32 0.0, %v4109
        %v4334 = vsub.f32 0.0, %v4110
        %v4335 = vsub.f32 0.0, %v4111
        %v4336 = vsub.f32 0.0, %v4112
        %v4337 = vsub.f32 0.0, %v4113
        %v4338 = vsub.f32 0.0, %v4114
        %v4339 = vsub.f32 0.0, %v4115
        %v4340 = vsub.f32 0.0, %v4116
        %v4341 = vsub.f32 0.0, %v4117
        %v4342 = vsub.f32 0.0, %v4118
        %v4343 = vsub.f32 0.0, %v4119
        %v4344 = vsub.f32 0.0, %v4120
        %v4345 = vsub.f32 0.0, %v4121
        %v4346 = vsub.f32 0.0, %v4122
        %v4347 = vsub.f32 0.0, %v4123
        %v4348 = vmul.f32 %v4332, %v4108
        %v4349 = vmul.f32 %v4333, %v4109
        %v4350 = vmul.f32 %v4334, %v4110
        %v4351 = vmul.f32 %v4335, %v4111
        %v4352 = vmul.f32 %v4336, %v4112
        %v4353 = vmul.f32 %v4337, %v4113
        %v4354 = vmul.f32 %v4338, %v4114
        %v4355 = vmul.f32 %v4339, %v4115
        %v4356 = vmul.f32 %v4340, %v4116
        %v4357 = vmul.f32 %v4341, %v4117
        %v4358 = vmul.f32 %v4342, %v4118
        %v4359 = vmul.f32 %v4343, %v4119
        %v4360 = vmul.f32 %v4344, %v4120
        %v4361 = vmul.f32 %v4345, %v4121
        %v4362 = vmul.f32 %v4346, %v4122
        %v4363 = vmul.f32 %v4347, %v4123
        %v4364 = vmul.f32 %v4348, 1.442695
        %v4365 = vpow.pop %v4364
        %v4366 = vmul.f32 %v4349, 1.442695
        %v4367 = vpow.pop %v4366
        %v4368 = vmul.f32 %v4350, 1.442695
        %v4369 = vpow.pop %v4368
        %v4370 = vmul.f32 %v4351, 1.442695
        %v4371 = vpow.pop %v4370
        %v4372 = vmul.f32 %v4352, 1.442695
        %v4373 = vpow.pop %v4372
        %v4374 = vmul.f32 %v4353, 1.442695
        %v4375 = vpow.pop %v4374
        %v4376 = vmul.f32 %v4354, 1.442695
        %v4377 = vpow.pop %v4376
        %v4378 = vmul.f32 %v4355, 1.442695
        %v4379 = vpow.pop %v4378
        %v4380 = vmul.f32 %v4356, 1.442695
        %v4381 = vpow.pop %v4380
        %v4382 = vmul.f32 %v4357, 1.442695
        %v4383 = vpow.pop %v4382
        %v4384 = vmul.f32 %v4358, 1.442695
        %v4385 = vpow.pop %v4384
        %v4386 = vmul.f32 %v4359, 1.442695
        %v4387 = vpow.pop %v4386
        %v4388 = vmul.f32 %v4360, 1.442695
        %v4389 = vpow.pop %v4388
        %v4390 = vmul.f32 %v4361, 1.442695
        %v4391 = vpow.pop %v4390
        %v4392 = vmul.f32 %v4362, 1.442695
        %v4393 = vpow.pop %v4392
        %v4394 = vmul.f32 %v4363, 1.442695
        %v4395 = vpow.pop %v4394
        %v4396 = vmul.f32 %v4316, %v4365
        %v4397 = vmul.f32 %v4317, %v4367
        %v4398 = vmul.f32 %v4318, %v4369
        %v4399 = vmul.f32 %v4319, %v4371
        %v4400 = vmul.f32 %v4320, %v4373
        %v4401 = vmul.f32 %v4321, %v4375
        %v4402 = vmul.f32 %v4322, %v4377
        %v4403 = vmul.f32 %v4323, %v4379
        %v4404 = vmul.f32 %v4324, %v4381
        %v4405 = vmul.f32 %v4325, %v4383
        %v4406 = vmul.f32 %v4326, %v4385
        %v4407 = vmul.f32 %v4327, %v4387
        %v4408 = vmul.f32 %v4328, %v4389
        %v4409 = vmul.f32 %v4329, %v4391
        %v4410 = vmul.f32 %v4330, %v4393
        %v4411 = vmul.f32 %v4331, %v4395
        %v4412 = vsub.f32 1.0, %v4396
        %v4413 = vsub.f32 1.0, %v4397
        %v4414 = vsub.f32 1.0, %v4398
        %v4415 = vsub.f32 1.0, %v4399
        %v4416 = vsub.f32 1.0, %v4400
        %v4417 = vsub.f32 1.0, %v4401
        %v4418 = vsub.f32 1.0, %v4402
        %v4419 = vsub.f32 1.0, %v4403
        %v4420 = vsub.f32 1.0, %v4404
        %v4421 = vsub.f32 1.0, %v4405
        %v4422 = vsub.f32 1.0, %v4406
        %v4423 = vsub.f32 1.0, %v4407
        %v4424 = vsub.f32 1.0, %v4408
        %v4425 = vsub.f32 1.0, %v4409
        %v4426 = vsub.f32 1.0, %v4410
        %v4427 = vsub.f32 1.0, %v4411
        %v4428 = vmul.f32 %v4092, %v4412
        %v4429 = vmul.f32 %v4093, %v4413
        %v4430 = vmul.f32 %v4094, %v4414
        %v4431 = vmul.f32 %v4095, %v4415
        %v4432 = vmul.f32 %v4096, %v4416
        %v4433 = vmul.f32 %v4097, %v4417
        %v4434 = vmul.f32 %v4098, %v4418
        %v4435 = vmul.f32 %v4099, %v4419
        %v4436 = vmul.f32 %v4100, %v4420
        %v4437 = vmul.f32 %v4101, %v4421
        %v4438 = vmul.f32 %v4102, %v4422
        %v4439 = vmul.f32 %v4103, %v4423
        %v4440 = vmul.f32 %v4104, %v4424
        %v4441 = vmul.f32 %v4105, %v4425
        %v4442 = vmul.f32 %v4106, %v4426
        %v4443 = vmul.f32 %v4107, %v4427
        %v4444 = vadd.f32 %v4428, 1.0
        %v4445 = vadd.f32 %v4429, 1.0
        %v4446 = vadd.f32 %v4430, 1.0
        %v4447 = vadd.f32 %v4431, 1.0
        %v4448 = vadd.f32 %v4432, 1.0
        %v4449 = vadd.f32 %v4433, 1.0
        %v4450 = vadd.f32 %v4434, 1.0
        %v4451 = vadd.f32 %v4435, 1.0
        %v4452 = vadd.f32 %v4436, 1.0
        %v4453 = vadd.f32 %v4437, 1.0
        %v4454 = vadd.f32 %v4438, 1.0
        %v4455 = vadd.f32 %v4439, 1.0
        %v4456 = vadd.f32 %v4440, 1.0
        %v4457 = vadd.f32 %v4441, 1.0
        %v4458 = vadd.f32 %v4442, 1.0
        %v4459 = vadd.f32 %v4443, 1.0
        %v4460 = vmul.f32 %v4044, %v4444
        %v4461 = vmul.f32 %v4045, %v4445
        %v4462 = vmul.f32 %v4046, %v4446
        %v4463 = vmul.f32 %v4047, %v4447
        %v4464 = vmul.f32 %v4048, %v4448
        %v4465 = vmul.f32 %v4049, %v4449
        %v4466 = vmul.f32 %v4050, %v4450
        %v4467 = vmul.f32 %v4051, %v4451
        %v4468 = vmul.f32 %v4052, %v4452
        %v4469 = vmul.f32 %v4053, %v4453
        %v4470 = vmul.f32 %v4054, %v4454
        %v4471 = vmul.f32 %v4055, %v4455
        %v4472 = vmul.f32 %v4056, %v4456
        %v4473 = vmul.f32 %v4057, %v4457
        %v4474 = vmul.f32 %v4058, %v4458
        %v4475 = vmul.f32 %v4059, %v4459
        %v4476 = vpack.c.bf16 %v4461, %v4460
        %v4477 = vpack.c.bf16 %v4463, %v4462
        %v4478 = vpack.c.bf16 %v4465, %v4464
        %v4479 = vpack.c.bf16 %v4467, %v4466
        %v4480 = vpack.c.bf16 %v4469, %v4468
        %v4481 = vpack.c.bf16 %v4471, %v4470
        %v4482 = vpack.c.bf16 %v4473, %v4472
        %v4483 = vpack.c.bf16 %v4475, %v4474
        %v4484 = vld [vmem:[%s13] sm:$0xf]
        %v4485 = vld [vmem:[%s13 + $0x4] sm:$0xf]
        %v4486 = vld [vmem:[%s13 + $0x8] sm:$0xf]
        %v4487 = vld [vmem:[%s13 + $0xc] sm:$0xf]
        %v4488 = vld [vmem:[%s13 + $0x10] sm:$0xf]
        %v4489 = vld [vmem:[%s13 + $0x14] sm:$0xf]
        %v4490 = vld [vmem:[%s13 + $0x18] sm:$0xf]
        %v4491 = vld [vmem:[%s13 + $0x1c] sm:$0xf]
        %v4492 = vld [vmem:[%s14] sm:$0x1]
        %v4494 = vlaneseq
        %v4495 = vshrl.u32 %v4494, 7
        %v4496 = vsub.s32 0, %v4495
        %v4497 = vrot.slane %v4492, %v4496
        %v4507 = vunpack.c.l.b16 %v4484
        %v4508 = vunpack.c.l.b16 %v4485
        %v4509 = vunpack.c.l.b16 %v4486
        %v4510 = vunpack.c.l.b16 %v4487
        %v4511 = vunpack.c.l.b16 %v4488
        %v4512 = vunpack.c.l.b16 %v4489
        %v4513 = vunpack.c.l.b16 %v4490
        %v4514 = vunpack.c.l.b16 %v4491
        %v4515 = vpack.c.b16 %v4508, %v4507
        %v4516 = vpack.c.b16 %v4510, %v4509
        %v4517 = vpack.c.b16 %v4512, %v4511
        %v4518 = vpack.c.b16 %v4514, %v4513
        %v4524 = vsel %vm1166, %v4476, 0
        %v4527 = vsel %vm1166, %v4477, 0
        %v4530 = vsel %vm1166, %v4478, 0
        %v4533 = vsel %vm1166, %v4479, 0
        %v4536 = vsel %vm1166, %v4480, 0
        %v4539 = vsel %vm1166, %v4481, 0
        %v4542 = vsel %vm1166, %v4482, 0
        %v4545 = vsel %vm1166, %v4483, 0
        %4547 = vmatprep.subr.bf16.mxu0 0
        %4548 = vmatpush1.bf16.msra.mxu0 %v4515
        %4549 = vmatprep.subr.bf16.mxu0 0
        %4550 = vmatpush1.bf16.msra.mxu0 %v4516
        %4551 = vmatprep.subr.bf16.mxu0 0
        %4552 = vmatpush1.bf16.msra.mxu0 %v4517
        %4553 = vmatprep.subr.bf16.mxu0 0
        %4554 = vmatpush1.bf16.msra.mxu0 %v4518
        %4555 = vmatprep.subr.bf16.mxu0 0
        %4556 = vmatpush1.bf16.msra.mxu0 0
        %4557 = vmatprep.subr.bf16.mxu0 0
        %4558 = vmatpush1.bf16.msra.mxu0 0
        %4559 = vmatprep.subr.bf16.mxu0 0
        %4560 = vmatpush1.bf16.msra.mxu0 0
        %4561 = vmatprep.subr.bf16.mxu0 0
        %4562 = vmatpush1.bf16.msra.mxu0 0
        %4563 = vmatprep.subr.bf16.mxu0 0
        %4564 = vmatpush1.bf16.msra.mxu0 0
        %4565 = vmatprep.subr.bf16.mxu0 0
        %4566 = vmatpush1.bf16.msra.mxu0 0
        %4567 = vmatprep.subr.bf16.mxu0 0
        %4568 = vmatpush1.bf16.msra.mxu0 0
        %4569 = vmatprep.subr.bf16.mxu0 0
        %4570 = vmatpush1.bf16.msra.mxu0 0
        %4571 = vmatprep.subr.bf16.mxu0 0
        %4572 = vmatpush1.bf16.msra.mxu0 0
        %4573 = vmatprep.subr.bf16.mxu0 0
        %4574 = vmatpush1.bf16.msra.mxu0 0
        %4575 = vmatprep.subr.bf16.mxu0 0
        %4576 = vmatpush1.bf16.msra.mxu0 0
        %4577 = vmatprep.subr.bf16.mxu0 0
        %4578 = vmatpush1.bf16.msra.mxu0 0
        %4579 = vmatprep.mubr.bf16.mxu0 0
        %4580 = vmatmul.mubr.bf16.gmra.mrb[0].mxu0 %v4524
        %v4581 = vpop.f32.mrb[0].mxu0
        %v4582 = vadd.f32 %v4497, %v4581
        %v4583 = vpop.f32.mrb[0].mxu0
        %v4584 = vpop.f32.mrb[0].mxu0
        %v4585 = vadd.f32 %v4497, %v4584
        %v4586 = vpop.f32.mrb[0].mxu0
        %4587 = vmatprep.mubr.bf16.mxu0 0
        %4588 = vmatmul.mubr.bf16.gmra.mrb[0].mxu0 %v4527
        %v4589 = vpop.f32.mrb[0].mxu0
        %v4590 = vadd.f32 %v4497, %v4589
        %v4591 = vpop.f32.mrb[0].mxu0
        %v4592 = vpop.f32.mrb[0].mxu0
        %v4593 = vadd.f32 %v4497, %v4592
        %v4594 = vpop.f32.mrb[0].mxu0
        %4595 = vmatprep.mubr.bf16.mxu0 0
        %4596 = vmatmul.mubr.bf16.gmra.mrb[0].mxu0 %v4530
        %v4597 = vpop.f32.mrb[0].mxu0
        %v4598 = vadd.f32 %v4497, %v4597
        %v4599 = vpop.f32.mrb[0].mxu0
        %v4600 = vpop.f32.mrb[0].mxu0
        %v4601 = vadd.f32 %v4497, %v4600
        %v4602 = vpop.f32.mrb[0].mxu0
        %4603 = vmatprep.mubr.bf16.mxu0 0
        %4604 = vmatmul.mubr.bf16.gmra.mrb[0].mxu0 %v4533
        %v4605 = vpop.f32.mrb[0].mxu0
        %v4606 = vadd.f32 %v4497, %v4605
        %v4607 = vpop.f32.mrb[0].mxu0
        %v4608 = vpop.f32.mrb[0].mxu0
        %v4609 = vadd.f32 %v4497, %v4608
        %v4610 = vpop.f32.mrb[0].mxu0
        %4611 = vmatprep.mubr.bf16.mxu0 0
        %4612 = vmatmul.mubr.bf16.gmra.mrb[0].mxu0 %v4536
        %v4613 = vpop.f32.mrb[0].mxu0
        %v4614 = vadd.f32 %v4497, %v4613
        %v4615 = vpop.f32.mrb[0].mxu0
        %v4616 = vpop.f32.mrb[0].mxu0
        %v4617 = vadd.f32 %v4497, %v4616
        %v4618 = vpop.f32.mrb[0].mxu0
        %4619 = vmatprep.mubr.bf16.mxu0 0
        %4620 = vmatmul.mubr.bf16.gmra.mrb[0].mxu0 %v4539
        %v4621 = vpop.f32.mrb[0].mxu0
        %v4622 = vadd.f32 %v4497, %v4621
        %v4623 = vpop.f32.mrb[0].mxu0
        %v4624 = vpop.f32.mrb[0].mxu0
        %v4625 = vadd.f32 %v4497, %v4624
        %v4626 = vpop.f32.mrb[0].mxu0
        %4627 = vmatprep.mubr.bf16.mxu0 0
        %4628 = vmatmul.mubr.bf16.gmra.mrb[0].mxu0 %v4542
        %v4629 = vpop.f32.mrb[0].mxu0
        %v4630 = vadd.f32 %v4497, %v4629
        %v4631 = vpop.f32.mrb[0].mxu0
        %v4632 = vpop.f32.mrb[0].mxu0
        %v4633 = vadd.f32 %v4497, %v4632
        %v4634 = vpop.f32.mrb[0].mxu0
        %4635 = vmatprep.mubr.bf16.mxu0 0
        %4636 = vmatmul.mubr.bf16.gmra.mrb[0].mxu0 %v4545
        %v4637 = vpop.f32.mrb[0].mxu0
        %v4638 = vadd.f32 %v4497, %v4637
        %v4639 = vpop.f32.mrb[0].mxu0
        %v4640 = vpop.f32.mrb[0].mxu0
        %v4641 = vadd.f32 %v4497, %v4640
        %v4642 = vpop.f32.mrb[0].mxu0
        %4643 = vdwg.mxu0
        %v4644 = vadd.f32 %v3622, %v4582
        %v4645 = vadd.f32 %v3623, %v4585
        %v4646 = vadd.f32 %v3624, %v4590
        %v4647 = vadd.f32 %v3625, %v4593
        %v4648 = vadd.f32 %v3626, %v4598
        %v4649 = vadd.f32 %v3627, %v4601
        %v4650 = vadd.f32 %v3628, %v4606
        %v4651 = vadd.f32 %v3629, %v4609
        %v4652 = vadd.f32 %v3630, %v4614
        %v4653 = vadd.f32 %v3631, %v4617
        %v4654 = vadd.f32 %v3632, %v4622
        %v4655 = vadd.f32 %v3633, %v4625
        %v4656 = vadd.f32 %v3634, %v4630
        %v4657 = vadd.f32 %v3635, %v4633
        %v4658 = vadd.f32 %v3636, %v4638
        %v4659 = vadd.f32 %v3637, %v4641
        %4664 = vrot.lane.b32.xlu0 %v4648, 32
        %v4665 = vpop.permute.xlu0 %4664
        %4666 = vrot.lane.b32.xlu0 %v4649, 32
        %v4667 = vpop.permute.xlu0 %4666
        %4668 = vrot.lane.b32.xlu0 %v4650, 32
        %v4669 = vpop.permute.xlu0 %4668
        %4670 = vrot.lane.b32.xlu0 %v4651, 32
        %v4671 = vpop.permute.xlu0 %4670
        %4680 = vrot.lane.b32.xlu0 %v4652, 64
        %v4681 = vpop.permute.xlu0 %4680
        %4682 = vrot.lane.b32.xlu0 %v4653, 64
        %v4683 = vpop.permute.xlu0 %4682
        %4684 = vrot.lane.b32.xlu0 %v4654, 64
        %v4685 = vpop.permute.xlu0 %4684
        %4686 = vrot.lane.b32.xlu0 %v4655, 64
        %v4687 = vpop.permute.xlu0 %4686
        %4696 = vrot.lane.b32.xlu0 %v4656, 96
        %v4697 = vpop.permute.xlu0 %4696
        %4698 = vrot.lane.b32.xlu0 %v4657, 96
        %v4699 = vpop.permute.xlu0 %4698
        %4700 = vrot.lane.b32.xlu0 %v4658, 96
        %v4701 = vpop.permute.xlu0 %4700
        %4702 = vrot.lane.b32.xlu0 %v4659, 96
        %v4703 = vpop.permute.xlu0 %4702
        %v4708 = vsel %vm577, %v4644, %v4665
        %v4709 = vsel %vm577, %v4645, %v4667
        %v4710 = vsel %vm577, %v4646, %v4669
        %v4711 = vsel %vm577, %v4647, %v4671
        %v4712 = vsel %vm1166, %v4708, %v4681
        %v4713 = vsel %vm1166, %v4709, %v4683
        %v4714 = vsel %vm1166, %v4710, %v4685
        %v4715 = vsel %vm1166, %v4711, %v4687
        %vm4716 = vcmask 785408
        %v4717 = vsel %vm4716, %v4712, %v4697
        %v4718 = vsel %vm4716, %v4713, %v4699
        %v4719 = vsel %vm4716, %v4714, %v4701
        %v4720 = vsel %vm4716, %v4715, %v4703
        %4721 = vst [vmem:[%s527] sm:$0xff] %v4717
        %4722 = vst [vmem:[%s527 + $0x8] sm:$0xff] %v4718
        %4723 = vst [vmem:[%s527 + $0x10] sm:$0xff] %v4719
        %4724 = vst [vmem:[%s527 + $0x18] sm:$0xff] %v4720
        %s4725 = sand.u32 %s361, 1
        %s4726 = scalar_lea.sflag [#allocation4], %s4725
        %s4727 = sand.u32 %s361, 1
        %s4728 = smul.addr %s4727, 32
        %s4729 = scalar_lea.vmem [#allocation7], %s4728
        // Predicated region
        $region89: #{tpu_custom_call.1} parent=79 // pred_check
          %p4730 = pneg %p371
        $region90: #{tpu_custom_call.1} parent=79 // pred_check_branch
          %4732 = sbr.rel (%p4730) target = $region92
        $region91: #{tpu_custom_call.1} parent=79 // pred_region
          %s4733 = smul.u32 4, %s33
          %s4735 = ssub.s32 512, 512
          %4736 = vsyncadd %s4726, %s4735
          %s4737 = smul.addr %s4733, 128
          %s4738 = scalar_lea.hbm %s15, %s4737
          %s4739 = sshll.u32 %s4729, 4
          %s4740 = int_to_ptr.vmem [resolvable:$true] %s4739
          %4745 = dma.vmem_to_hbm [thread:$0]  %s4740, 512, %s4738, %s4726, 128, 128, 8
        $region92: #{tpu_custom_call.1} parent=79 // pred_fallthru
          _
      $region80: #{tpu_custom_call.1} parent=5 // pred_fallthru
        _
      %p4746 = scmp.le.s32.totalorder 2, %s28
      // Predicated region
      $region93: #{tpu_custom_call.1} parent=5 // pred_check
        %p4747 = pneg %p4746
      $region94: #{tpu_custom_call.1} parent=5 // pred_check_branch
        %4749 = sbr.rel (%p4747) target = $region96
      $region95: #{tpu_custom_call.1} parent=5 // pred_region
        %s4750 = ssub.s32 %s28, 2
        // Predicated region
        $region97: #{tpu_custom_call.1} parent=95 // pred_check
          %p4751 = pneg %p377
        $region98: #{tpu_custom_call.1} parent=95 // pred_check_branch
          %4753 = sbr.rel (%p4751) target = $region100
        $region99: #{tpu_custom_call.1} parent=95 // pred_region
          %s4754 = sand.u32 %s362, 1
          %s4755 = scalar_lea.sflag [#allocation4], %s4754
          %s4756 = sand.u32 %s362, 1
          %s4757 = smul.addr %s4756, 32
          %s4758 = scalar_lea.vmem [#allocation7], %s4757
          %4759 = dma.done %s4755, 512
        $region100: #{tpu_custom_call.1} parent=95 // pred_fallthru
          _
      $region96: #{tpu_custom_call.1} parent=5 // pred_fallthru
        _
    $region6: #{tpu_custom_call.1} parent=1 // loop_footer
      %s32 = sadd.s32 1, %s28
    $region7: #{tpu_custom_call.1} parent=1 // loop_footer_branch
      %27 = sbr.rel target = $region3
    $region8: #{tpu_custom_call.1} parent=1 // loop_exit
      _
    %4760 = vsyncpa [#allocation3], 1
    %s4761 = scalar_lea.sflag [#allocation3], 1
    %4762 = vsyncpa %s4761, 1
    %4763 = vsyncpa [#allocation6], 1
    %4764 = vsyncpa [#allocation4], 1
    %s4765 = scalar_lea.sflag [#allocation4], 1
    %4766 = vsyncpa %s4765, 1

</llo_original>
